<compile_context>
chip_gen: v5e
topology: v5e:2x2
jax: 0.10.0
libtpu: 0.0.40
codegen_flags: <defaults>
</compile_context>

<pallas_src>
import functools

import jax
import jax.numpy as jnp
from jax import lax
from jax.experimental import pallas as pl
from jax.experimental.pallas import tpu as pltpu


def _round_up(x, m):
    return ((x + m - 1) // m) * m


def _fused_decoder_kernel(x_ref, w0_ref, wr_ref, b_ref, m_ref, out_ref, act_ref,
                          *, img_w, depth):
    """All depth stages of the decoder chain for one batch block.

    Lane-dense layout: channels on sublanes, NB flattened images on lanes.
      x_ref   : (Cin_p, NHW)          f32   channel-padded input activations
      w0_ref  : (9, Cp, Cin_p)        bf16  stage-0 per-tap weights [t, co, ci]
      wr_ref  : ((depth-1)*9, Cp, Cp) bf16  per-tap weights, stages 1..depth-1
      b_ref   : (depth, Cp, 1)        f32   per-stage bias
      m_ref   : (9, 1, NHW)           f32   per-tap boundary masks (0/1)
      out_ref : (Cp, NHW)                   final activation (channel-padded)
      act_ref : (Cp, NHW)             f32   VMEM scratch between stages
    """
    nhw = x_ref.shape[-1]
    cp = out_ref.shape[0]
    taps = [(dy, dx) for dy in range(-1, 2) for dx in range(-1, 2)]

    def conv_relu(act, w_for_tap, bias):
        # act: (Ci, NHW) f32.  One 3x3 SAME conv + bias + ReLU as 9 per-tap
        # MXU matmuls (bf16 operands, f32 accumulation).  No im2col scratch.
        acc = jnp.zeros((cp, nhw), jnp.float32)
        for t, (dy, dx) in enumerate(taps):
            if dy == 0 and dx == 0:
                patch = act                              # centre tap, no shift
            else:
                shift = dy * img_w + dx                  # flat spatial shift
                rolled = pltpu.roll(act, shift=(-shift) % nhw, axis=1)
                patch = rolled * m_ref[t]                # zero out-of-image taps
            acc = acc + jnp.dot(w_for_tap(t), patch.astype(jnp.bfloat16),
                                preferred_element_type=jnp.float32)
        return jnp.maximum(acc + bias, 0.0)

    # Stage 0: first_decoder (K = 9 * padded C_in only).
    x0 = x_ref[...].astype(jnp.float32)
    act_ref[...] = conv_relu(x0, lambda t: w0_ref[t], b_ref[0])

    # Stages 1..depth-1: sequential_decoder clones; activation stays in VMEM.
    @pl.loop(0, depth - 1)
    def _(s):
        act = act_ref[...]
        act_ref[...] = conv_relu(act, lambda t: wr_ref[s * 9 + t], b_ref[s + 1])

    out_ref[...] = act_ref[...].astype(out_ref.dtype)


def _pack_tap_weights(w_hwio, ci_pad, co_pad):
    """(3,3,Ci,Co) HWIO -> (9, co_pad, ci_pad) bf16 per-tap matrices."""
    ci, co = w_hwio.shape[2], w_hwio.shape[3]
    wp = jnp.pad(w_hwio, ((0, 0), (0, 0), (0, ci_pad - ci), (0, co_pad - co)))
    return wp.reshape(9, ci_pad, co_pad).transpose(0, 2, 1).astype(jnp.bfloat16)


def _prepare_params(params, c_out, cin_p, cp):
    w0 = _pack_tap_weights(params[0][0], cin_p, cp)
    if len(params) > 1:
        wr = jnp.concatenate(
            [_pack_tap_weights(w, cp, cp) for (w, _) in params[1:]], axis=0)
    else:  # depth == 1: dummy block, never read (pl.loop bound is 0)
        wr = jnp.zeros((9, cp, cp), jnp.bfloat16)
    b = jnp.stack([jnp.pad(b_, (0, cp - c_out)).reshape(cp, 1)
                   for (_, b_) in params]).astype(jnp.float32)
    return w0, wr, b


def _make_tap_masks(h, w, nb):
    """(9, 1, nb*h*w) f32 validity masks for the 9 taps of a SAME 3x3 conv."""
    pos = jnp.arange(h * w)
    hh, ww = pos // w, pos % w
    rows = []
    for dy in range(-1, 2):
        for dx in range(-1, 2):
            rows.append((hh + dy >= 0) & (hh + dy < h) &
                        (ww + dx >= 0) & (ww + dx < w))
    m = jnp.stack(rows).astype(jnp.float32)            # (9, h*w)
    return jnp.tile(m, (1, nb)).reshape(9, 1, nb * h * w)


def _pick_batch_block(n, max_nb=8):
    """Largest divisor of n (<= max_nb) that still leaves >= 2 grid steps, so
    per-step overhead is amortized without idling a v7x TensorCore."""
    best = 1
    for nb in range(1, max_nb + 1):
        if n % nb == 0 and (n // nb >= 2 or n == 1):
            best = nb
    return best


def decoder_layer_forward(x_nchw, params, *, single_buffer_params=True):
    """Decoder_layer.forward: first_decoder then (depth-1) sequential decoders,
    fused into a single Pallas call (activations never leave VMEM)."""
    N, C_in, H, W = x_nchw.shape
    C_out = params[0][0].shape[-1]
    depth = len(params)
    HW = H * W

    Cp = _round_up(C_out, 8)        # output / inter-stage channel padding
    Cin_p = _round_up(C_in, 8)      # stage-0 input channel padding

    w0, wr, b_all = _prepare_params(params, C_out, Cin_p, Cp)

    NB = _pick_batch_block(N)
    G = N // NB
    NHW = NB * HW

    # NCHW -> (G, Cin_p, NB*HW): channels on sublanes, NB flattened images
    # concatenated on the lane axis.  The boundary masks also neutralize the
    # roll wrap-around across image boundaries, so batching along lanes is safe.
    x = x_nchw.reshape(N, C_in, HW)
    if Cin_p != C_in:
        x = jnp.pad(x, ((0, 0), (0, Cin_p - C_in), (0, 0)))
    x = x.reshape(G, NB, Cin_p, HW).transpose(0, 2, 1, 3).reshape(G, Cin_p, NHW)

    masks = _make_tap_masks(H, W, NB)

    # Grid-invariant operands (weights / bias / masks): single-buffered.
    pipe = {"pipeline_mode": pl.Buffered(1)} if single_buffer_params else {}

    def const_spec(shape):
        return pl.BlockSpec(shape, lambda g: (0,) * len(shape), **pipe)

    out = pl.pallas_call(
        functools.partial(_fused_decoder_kernel, img_w=W, depth=depth),
        out_shape=jax.ShapeDtypeStruct((G, Cp, NHW), x_nchw.dtype),
        grid=(G,),
        in_specs=[
            pl.BlockSpec((pl.Squeezed(), Cin_p, NHW), lambda g: (g, 0, 0)),
            const_spec(w0.shape),
            const_spec(wr.shape),
            const_spec(b_all.shape),
            const_spec(masks.shape),
        ],
        out_specs=pl.BlockSpec((pl.Squeezed(), Cp, NHW), lambda g: (g, 0, 0)),
        scratch_shapes=[pltpu.VMEM((Cp, NHW), jnp.float32)],
        compiler_params=pltpu.CompilerParams(
            dimension_semantics=("parallel",),
            vmem_limit_bytes=32 * 1024 * 1024),
        # TODO(synk): at production plane sizes add a second "parallel" grid
        # axis over H row-blocks with a 1-row halo (pl.Element index_map on H
        # or manual halo DMA) and re-derive lane block / vmem_limit per chip
        # generation (v7x has 64 MiB physical VMEM).
    )(x, w0, wr, b_all, masks)

    # (G, Cp, NB*HW) -> (N, C_out, H, W)
    out = out.reshape(G, Cp, NB, HW).transpose(0, 2, 1, 3).reshape(N, Cp, HW)
    return out[:, :C_out, :].reshape(N, C_out, H, W)


def init_decoder_params(key, c_in, c_out, depth):
    """Stage 0 is first_decoder, stages 1..depth-1 are sequential_decoder clones."""
    params = []
    for i in range(depth):
        key, kw, kb = jax.random.split(key, 3)
        ci = c_in if i == 0 else c_out
        w = jax.random.normal(kw, (3, 3, ci, c_out), jnp.float32) * 0.1
        b = jax.random.normal(kb, (c_out,), jnp.float32) * 0.1
        params.append((w, b))
    return params


def decoder_layer_reference(x_nchw, params):
    """Pure-JAX reference (lax.conv, f32) to validate the Pallas kernel."""
    x = jnp.transpose(x_nchw, (0, 2, 3, 1))
    for w, b in params:
        x = lax.conv_general_dilated(
            x, w, window_strides=(1, 1), padding="SAME",
            dimension_numbers=("NHWC", "HWIO", "NHWC"))
        x = jnp.maximum(x + b, 0.0)
    return jnp.transpose(x, (0, 3, 1, 2))


if __name__ == "__main__":
    key = jax.random.PRNGKey(0)
    k_x, k_p = jax.random.split(key)

    N, C_in, H, W = 2, 4, 16, 16
    C_out, depth = 8, 2

    x = jax.random.normal(k_x, (N, C_in, H, W), jnp.float32)   # NCHW, like PyTorch
    params = init_decoder_params(k_p, C_in, C_out, depth)

    try:
        fwd = jax.jit(functools.partial(decoder_layer_forward,
                                        single_buffer_params=True))
        out = jax.block_until_ready(fwd(x, params))
    except Exception:
        # Installed JAX rejects BlockSpec(pipeline_mode=...); use default
        # double-buffering for the grid-invariant operands instead.
        fwd = jax.jit(functools.partial(decoder_layer_forward,
                                        single_buffer_params=False))
        out = jax.block_until_ready(fwd(x, params))

    ref = decoder_layer_reference(x, params)
    assert out.shape == (N, C_out, H, W)
    # bf16 MXU operands with f32 accumulation -> slightly looser tolerance.
    assert jnp.allclose(out, ref, atol=5e-2, rtol=5e-2)

    print("KERNEL_OK")
</pallas_src>

<mosaic_0001>
module attributes {stable_mosaic.version = 11 : i64} {
  func.func @_fused_decoder_kernel(%arg0: i32, %arg1: memref<1x8x256xf32, #tpu.memory_space<vmem>>, %arg2: memref<9x8x8xbf16, #tpu.memory_space<vmem>>, %arg3: memref<9x8x8xbf16, #tpu.memory_space<vmem>>, %arg4: memref<2x8x1xf32, #tpu.memory_space<vmem>>, %arg5: memref<9x1x256xf32, #tpu.memory_space<vmem>>, %arg6: memref<1x8x256xf32, #tpu.memory_space<vmem>>, %arg7: memref<8x256xf32, #tpu.memory_space<vmem>>) attributes {dimension_semantics = [#tpu.dimension_semantics<parallel>], iteration_bounds = array<i64: 2>, scalar_prefetch = 0 : i64, scratch_operands = 1 : i64, tpu.core_type = #tpu.core_type<tc>, window_params = [{transform_indices = @transform_0, window_bounds = array<i64: 1, 8, 256>}, {pipeline_mode = #tpu.pipeline_mode<synchronous>, transform_indices = @transform_1, window_bounds = array<i64: 9, 8, 8>}, {pipeline_mode = #tpu.pipeline_mode<synchronous>, transform_indices = @transform_2, window_bounds = array<i64: 9, 8, 8>}, {pipeline_mode = #tpu.pipeline_mode<synchronous>, transform_indices = @transform_3, window_bounds = array<i64: 2, 8, 1>}, {pipeline_mode = #tpu.pipeline_mode<synchronous>, transform_indices = @transform_4, window_bounds = array<i64: 9, 1, 256>}, {transform_indices = @transform_5, window_bounds = array<i64: 1, 8, 256>}]} {
    %c0 = arith.constant 0 : index
    %c0_0 = arith.constant 0 : index
    %c0_1 = arith.constant 0 : index
    %0 = vector.load %arg1[%c0, %c0_0, %c0_1] : memref<1x8x256xf32, #tpu.memory_space<vmem>>, vector<1x8x256xf32>
    %1 = vector.shape_cast %0 : vector<1x8x256xf32> to vector<8x256xf32>
    %c0_2 = arith.constant 0 : index
    %c0_3 = arith.constant 0 : index
    %c0_4 = arith.constant 0 : index
    %2 = vector.load %arg4[%c0_2, %c0_3, %c0_4] : memref<2x8x1xf32, #tpu.memory_space<vmem>>, vector<1x8x1xf32>
    %3 = vector.shape_cast %2 : vector<1x8x1xf32> to vector<8x1xf32>
    %cst = arith.constant 0.000000e+00 : f32
    %4 = vector.broadcast %cst : f32 to vector<8x256xf32>
    %c17_i32 = arith.constant 17 : i32
    %5 = tpu.dynamic_rotate %1 by %c17_i32 dim 1 : vector<8x256xf32>, i32 -> vector<8x256xf32>
    %c0_5 = arith.constant 0 : index
    %c0_6 = arith.constant 0 : index
    %c0_7 = arith.constant 0 : index
    %6 = vector.load %arg5[%c0_5, %c0_6, %c0_7] : memref<9x1x256xf32, #tpu.memory_space<vmem>>, vector<1x1x256xf32>
    %7 = vector.shape_cast %6 : vector<1x1x256xf32> to vector<1x256xf32>
    %8 = vector.broadcast %7 : vector<1x256xf32> to vector<8x256xf32>
    %9 = arith.mulf %5, %8 : vector<8x256xf32>
    %c0_8 = arith.constant 0 : index
    %c0_9 = arith.constant 0 : index
    %c0_10 = arith.constant 0 : index
    %10 = vector.load %arg2[%c0_8, %c0_9, %c0_10] : memref<9x8x8xbf16, #tpu.memory_space<vmem>>, vector<1x8x8xbf16>
    %11 = vector.shape_cast %10 : vector<1x8x8xbf16> to vector<8x8xbf16>
    %12 = arith.truncf %9 : vector<8x256xf32> to vector<8x256xbf16>
    %cst_11 = arith.constant dense<0.000000e+00> : vector<8x256xf32>
    %13 = tpu.matmul %11, %12, %cst_11 {dimension_numbers = #tpu.dot_dimension_numbers<[1], [0], [0], [1], [0, 0, 1, 1], [], []>} : vector<8x8xbf16>, vector<8x256xbf16>, vector<8x256xf32> -> vector<8x256xf32>
    %14 = arith.addf %4, %13 : vector<8x256xf32>
    %c16_i32 = arith.constant 16 : i32
    %15 = tpu.dynamic_rotate %1 by %c16_i32 dim 1 : vector<8x256xf32>, i32 -> vector<8x256xf32>
    %c1 = arith.constant 1 : index
    %c0_12 = arith.constant 0 : index
    %c0_13 = arith.constant 0 : index
    %16 = vector.load %arg5[%c1, %c0_12, %c0_13] : memref<9x1x256xf32, #tpu.memory_space<vmem>>, vector<1x1x256xf32>
    %17 = vector.shape_cast %16 : vector<1x1x256xf32> to vector<1x256xf32>
    %18 = vector.broadcast %17 : vector<1x256xf32> to vector<8x256xf32>
    %19 = arith.mulf %15, %18 : vector<8x256xf32>
    %c1_14 = arith.constant 1 : index
    %c0_15 = arith.constant 0 : index
    %c0_16 = arith.constant 0 : index
    %20 = vector.load %arg2[%c1_14, %c0_15, %c0_16] : memref<9x8x8xbf16, #tpu.memory_space<vmem>>, vector<1x8x8xbf16>
    %21 = vector.shape_cast %20 : vector<1x8x8xbf16> to vector<8x8xbf16>
    %22 = arith.truncf %19 : vector<8x256xf32> to vector<8x256xbf16>
    %cst_17 = arith.constant dense<0.000000e+00> : vector<8x256xf32>
    %23 = tpu.matmul %21, %22, %cst_17 {dimension_numbers = #tpu.dot_dimension_numbers<[1], [0], [0], [1], [0, 0, 1, 1], [], []>} : vector<8x8xbf16>, vector<8x256xbf16>, vector<8x256xf32> -> vector<8x256xf32>
    %24 = arith.addf %14, %23 : vector<8x256xf32>
    %c15_i32 = arith.constant 15 : i32
    %25 = tpu.dynamic_rotate %1 by %c15_i32 dim 1 : vector<8x256xf32>, i32 -> vector<8x256xf32>
    %c2 = arith.constant 2 : index
    %c0_18 = arith.constant 0 : index
    %c0_19 = arith.constant 0 : index
    %26 = vector.load %arg5[%c2, %c0_18, %c0_19] : memref<9x1x256xf32, #tpu.memory_space<vmem>>, vector<1x1x256xf32>
    %27 = vector.shape_cast %26 : vector<1x1x256xf32> to vector<1x256xf32>
    %28 = vector.broadcast %27 : vector<1x256xf32> to vector<8x256xf32>
    %29 = arith.mulf %25, %28 : vector<8x256xf32>
    %c2_20 = arith.constant 2 : index
    %c0_21 = arith.constant 0 : index
    %c0_22 = arith.constant 0 : index
    %30 = vector.load %arg2[%c2_20, %c0_21, %c0_22] : memref<9x8x8xbf16, #tpu.memory_space<vmem>>, vector<1x8x8xbf16>
    %31 = vector.shape_cast %30 : vector<1x8x8xbf16> to vector<8x8xbf16>
    %32 = arith.truncf %29 : vector<8x256xf32> to vector<8x256xbf16>
    %cst_23 = arith.constant dense<0.000000e+00> : vector<8x256xf32>
    %33 = tpu.matmul %31, %32, %cst_23 {dimension_numbers = #tpu.dot_dimension_numbers<[1], [0], [0], [1], [0, 0, 1, 1], [], []>} : vector<8x8xbf16>, vector<8x256xbf16>, vector<8x256xf32> -> vector<8x256xf32>
    %34 = arith.addf %24, %33 : vector<8x256xf32>
    %c1_i32 = arith.constant 1 : i32
    %35 = tpu.dynamic_rotate %1 by %c1_i32 dim 1 : vector<8x256xf32>, i32 -> vector<8x256xf32>
    %c3 = arith.constant 3 : index
    %c0_24 = arith.constant 0 : index
    %c0_25 = arith.constant 0 : index
    %36 = vector.load %arg5[%c3, %c0_24, %c0_25] : memref<9x1x256xf32, #tpu.memory_space<vmem>>, vector<1x1x256xf32>
    %37 = vector.shape_cast %36 : vector<1x1x256xf32> to vector<1x256xf32>
    %38 = vector.broadcast %37 : vector<1x256xf32> to vector<8x256xf32>
    %39 = arith.mulf %35, %38 : vector<8x256xf32>
    %c3_26 = arith.constant 3 : index
    %c0_27 = arith.constant 0 : index
    %c0_28 = arith.constant 0 : index
    %40 = vector.load %arg2[%c3_26, %c0_27, %c0_28] : memref<9x8x8xbf16, #tpu.memory_space<vmem>>, vector<1x8x8xbf16>
    %41 = vector.shape_cast %40 : vector<1x8x8xbf16> to vector<8x8xbf16>
    %42 = arith.truncf %39 : vector<8x256xf32> to vector<8x256xbf16>
    %cst_29 = arith.constant dense<0.000000e+00> : vector<8x256xf32>
    %43 = tpu.matmul %41, %42, %cst_29 {dimension_numbers = #tpu.dot_dimension_numbers<[1], [0], [0], [1], [0, 0, 1, 1], [], []>} : vector<8x8xbf16>, vector<8x256xbf16>, vector<8x256xf32> -> vector<8x256xf32>
    %44 = arith.addf %34, %43 : vector<8x256xf32>
    %c4 = arith.constant 4 : index
    %c0_30 = arith.constant 0 : index
    %c0_31 = arith.constant 0 : index
    %45 = vector.load %arg2[%c4, %c0_30, %c0_31] : memref<9x8x8xbf16, #tpu.memory_space<vmem>>, vector<1x8x8xbf16>
    %46 = vector.shape_cast %45 : vector<1x8x8xbf16> to vector<8x8xbf16>
    %47 = arith.truncf %1 : vector<8x256xf32> to vector<8x256xbf16>
    %cst_32 = arith.constant dense<0.000000e+00> : vector<8x256xf32>
    %48 = tpu.matmul %46, %47, %cst_32 {dimension_numbers = #tpu.dot_dimension_numbers<[1], [0], [0], [1], [0, 0, 1, 1], [], []>} : vector<8x8xbf16>, vector<8x256xbf16>, vector<8x256xf32> -> vector<8x256xf32>
    %49 = arith.addf %44, %48 : vector<8x256xf32>
    %c255_i32 = arith.constant 255 : i32
    %50 = tpu.dynamic_rotate %1 by %c255_i32 dim 1 : vector<8x256xf32>, i32 -> vector<8x256xf32>
    %c5 = arith.constant 5 : index
    %c0_33 = arith.constant 0 : index
    %c0_34 = arith.constant 0 : index
    %51 = vector.load %arg5[%c5, %c0_33, %c0_34] : memref<9x1x256xf32, #tpu.memory_space<vmem>>, vector<1x1x256xf32>
    %52 = vector.shape_cast %51 : vector<1x1x256xf32> to vector<1x256xf32>
    %53 = vector.broadcast %52 : vector<1x256xf32> to vector<8x256xf32>
    %54 = arith.mulf %50, %53 : vector<8x256xf32>
    %c5_35 = arith.constant 5 : index
    %c0_36 = arith.constant 0 : index
    %c0_37 = arith.constant 0 : index
    %55 = vector.load %arg2[%c5_35, %c0_36, %c0_37] : memref<9x8x8xbf16, #tpu.memory_space<vmem>>, vector<1x8x8xbf16>
    %56 = vector.shape_cast %55 : vector<1x8x8xbf16> to vector<8x8xbf16>
    %57 = arith.truncf %54 : vector<8x256xf32> to vector<8x256xbf16>
    %cst_38 = arith.constant dense<0.000000e+00> : vector<8x256xf32>
    %58 = tpu.matmul %56, %57, %cst_38 {dimension_numbers = #tpu.dot_dimension_numbers<[1], [0], [0], [1], [0, 0, 1, 1], [], []>} : vector<8x8xbf16>, vector<8x256xbf16>, vector<8x256xf32> -> vector<8x256xf32>
    %59 = arith.addf %49, %58 : vector<8x256xf32>
    %c241_i32 = arith.constant 241 : i32
    %60 = tpu.dynamic_rotate %1 by %c241_i32 dim 1 : vector<8x256xf32>, i32 -> vector<8x256xf32>
    %c6 = arith.constant 6 : index
    %c0_39 = arith.constant 0 : index
    %c0_40 = arith.constant 0 : index
    %61 = vector.load %arg5[%c6, %c0_39, %c0_40] : memref<9x1x256xf32, #tpu.memory_space<vmem>>, vector<1x1x256xf32>
    %62 = vector.shape_cast %61 : vector<1x1x256xf32> to vector<1x256xf32>
    %63 = vector.broadcast %62 : vector<1x256xf32> to vector<8x256xf32>
    %64 = arith.mulf %60, %63 : vector<8x256xf32>
    %c6_41 = arith.constant 6 : index
    %c0_42 = arith.constant 0 : index
    %c0_43 = arith.constant 0 : index
    %65 = vector.load %arg2[%c6_41, %c0_42, %c0_43] : memref<9x8x8xbf16, #tpu.memory_space<vmem>>, vector<1x8x8xbf16>
    %66 = vector.shape_cast %65 : vector<1x8x8xbf16> to vector<8x8xbf16>
    %67 = arith.truncf %64 : vector<8x256xf32> to vector<8x256xbf16>
    %cst_44 = arith.constant dense<0.000000e+00> : vector<8x256xf32>
    %68 = tpu.matmul %66, %67, %cst_44 {dimension_numbers = #tpu.dot_dimension_numbers<[1], [0], [0], [1], [0, 0, 1, 1], [], []>} : vector<8x8xbf16>, vector<8x256xbf16>, vector<8x256xf32> -> vector<8x256xf32>
    %69 = arith.addf %59, %68 : vector<8x256xf32>
    %c240_i32 = arith.constant 240 : i32
    %70 = tpu.dynamic_rotate %1 by %c240_i32 dim 1 : vector<8x256xf32>, i32 -> vector<8x256xf32>
    %c7 = arith.constant 7 : index
    %c0_45 = arith.constant 0 : index
    %c0_46 = arith.constant 0 : index
    %71 = vector.load %arg5[%c7, %c0_45, %c0_46] : memref<9x1x256xf32, #tpu.memory_space<vmem>>, vector<1x1x256xf32>
    %72 = vector.shape_cast %71 : vector<1x1x256xf32> to vector<1x256xf32>
    %73 = vector.broadcast %72 : vector<1x256xf32> to vector<8x256xf32>
    %74 = arith.mulf %70, %73 : vector<8x256xf32>
    %c7_47 = arith.constant 7 : index
    %c0_48 = arith.constant 0 : index
    %c0_49 = arith.constant 0 : index
    %75 = vector.load %arg2[%c7_47, %c0_48, %c0_49] : memref<9x8x8xbf16, #tpu.memory_space<vmem>>, vector<1x8x8xbf16>
    %76 = vector.shape_cast %75 : vector<1x8x8xbf16> to vector<8x8xbf16>
    %77 = arith.truncf %74 : vector<8x256xf32> to vector<8x256xbf16>
    %cst_50 = arith.constant dense<0.000000e+00> : vector<8x256xf32>
    %78 = tpu.matmul %76, %77, %cst_50 {dimension_numbers = #tpu.dot_dimension_numbers<[1], [0], [0], [1], [0, 0, 1, 1], [], []>} : vector<8x8xbf16>, vector<8x256xbf16>, vector<8x256xf32> -> vector<8x256xf32>
    %79 = arith.addf %69, %78 : vector<8x256xf32>
    %c239_i32 = arith.constant 239 : i32
    %80 = tpu.dynamic_rotate %1 by %c239_i32 dim 1 : vector<8x256xf32>, i32 -> vector<8x256xf32>
    %c8 = arith.constant 8 : index
    %c0_51 = arith.constant 0 : index
    %c0_52 = arith.constant 0 : index
    %81 = vector.load %arg5[%c8, %c0_51, %c0_52] : memref<9x1x256xf32, #tpu.memory_space<vmem>>, vector<1x1x256xf32>
    %82 = vector.shape_cast %81 : vector<1x1x256xf32> to vector<1x256xf32>
    %83 = vector.broadcast %82 : vector<1x256xf32> to vector<8x256xf32>
    %84 = arith.mulf %80, %83 : vector<8x256xf32>
    %c8_53 = arith.constant 8 : index
    %c0_54 = arith.constant 0 : index
    %c0_55 = arith.constant 0 : index
    %85 = vector.load %arg2[%c8_53, %c0_54, %c0_55] : memref<9x8x8xbf16, #tpu.memory_space<vmem>>, vector<1x8x8xbf16>
    %86 = vector.shape_cast %85 : vector<1x8x8xbf16> to vector<8x8xbf16>
    %87 = arith.truncf %84 : vector<8x256xf32> to vector<8x256xbf16>
    %cst_56 = arith.constant dense<0.000000e+00> : vector<8x256xf32>
    %88 = tpu.matmul %86, %87, %cst_56 {dimension_numbers = #tpu.dot_dimension_numbers<[1], [0], [0], [1], [0, 0, 1, 1], [], []>} : vector<8x8xbf16>, vector<8x256xbf16>, vector<8x256xf32> -> vector<8x256xf32>
    %89 = arith.addf %79, %88 : vector<8x256xf32>
    %90 = vector.broadcast %3 : vector<8x1xf32> to vector<8x256xf32>
    %91 = arith.addf %89, %90 : vector<8x256xf32>
    %cst_57 = arith.constant 0.000000e+00 : f32
    %92 = vector.broadcast %cst_57 : f32 to vector<8x256xf32>
    %93 = arith.maximumf %91, %92 : vector<8x256xf32>
    %c0_58 = arith.constant 0 : index
    %c0_59 = arith.constant 0 : index
    %94 = vector.load %arg7[%c0_58, %c0_59] : memref<8x256xf32, #tpu.memory_space<vmem>>, vector<8x256xf32>
    tpu.vector_store %arg7[%c0_58, %c0_59], %93 {strides = array<i32>} : memref<8x256xf32, #tpu.memory_space<vmem>>, vector<8x256xf32>,
    %c0_i32 = arith.constant 0 : i32
    %c1_i32_60 = arith.constant 1 : i32
    %95 = arith.muli %c0_i32, %c1_i32_60 : i32
    %c0_i32_61 = arith.constant 0 : i32
    %96 = arith.addi %c0_i32_61, %95 : i32
    %c0_62 = arith.constant 0 : index
    %c0_63 = arith.constant 0 : index
    %97 = vector.load %arg7[%c0_62, %c0_63] : memref<8x256xf32, #tpu.memory_space<vmem>>, vector<8x256xf32>
    %c1_i32_64 = arith.constant 1 : i32
    %98 = arith.addi %96, %c1_i32_64 : i32
    %99 = arith.index_cast %98 : i32 to index
    %c0_65 = arith.constant 0 : index
    %c0_66 = arith.constant 0 : index
    %100 = vector.load %arg4[%99, %c0_65, %c0_66] : memref<2x8x1xf32, #tpu.memory_space<vmem>>, vector<1x8x1xf32>
    %101 = vector.shape_cast %100 : vector<1x8x1xf32> to vector<8x1xf32>
    %cst_67 = arith.constant 0.000000e+00 : f32
    %102 = vector.broadcast %cst_67 : f32 to vector<8x256xf32>
    %c17_i32_68 = arith.constant 17 : i32
    %103 = tpu.dynamic_rotate %97 by %c17_i32_68 dim 1 : vector<8x256xf32>, i32 -> vector<8x256xf32>
    %c0_69 = arith.constant 0 : index
    %c0_70 = arith.constant 0 : index
    %c0_71 = arith.constant 0 : index
    %104 = vector.load %arg5[%c0_69, %c0_70, %c0_71] : memref<9x1x256xf32, #tpu.memory_space<vmem>>, vector<1x1x256xf32>
    %105 = vector.shape_cast %104 : vector<1x1x256xf32> to vector<1x256xf32>
    %106 = vector.broadcast %105 : vector<1x256xf32> to vector<8x256xf32>
    %107 = arith.mulf %103, %106 : vector<8x256xf32>
    %c9_i32 = arith.constant 9 : i32
    %108 = arith.muli %96, %c9_i32 : i32
    %c0_i32_72 = arith.constant 0 : i32
    %109 = arith.addi %108, %c0_i32_72 : i32
    %110 = arith.index_cast %109 : i32 to index
    %c0_73 = arith.constant 0 : index
    %c0_74 = arith.constant 0 : index
    %111 = vector.load %arg3[%110, %c0_73, %c0_74] : memref<9x8x8xbf16, #tpu.memory_space<vmem>>, vector<1x8x8xbf16>
    %112 = vector.shape_cast %111 : vector<1x8x8xbf16> to vector<8x8xbf16>
    %113 = arith.truncf %107 : vector<8x256xf32> to vector<8x256xbf16>
    %cst_75 = arith.constant dense<0.000000e+00> : vector<8x256xf32>
    %114 = tpu.matmul %112, %113, %cst_75 {dimension_numbers = #tpu.dot_dimension_numbers<[1], [0], [0], [1], [0, 0, 1, 1], [], []>} : vector<8x8xbf16>, vector<8x256xbf16>, vector<8x256xf32> -> vector<8x256xf32>
    %115 = arith.addf %102, %114 : vector<8x256xf32>
    %c16_i32_76 = arith.constant 16 : i32
    %116 = tpu.dynamic_rotate %97 by %c16_i32_76 dim 1 : vector<8x256xf32>, i32 -> vector<8x256xf32>
    %c1_77 = arith.constant 1 : index
    %c0_78 = arith.constant 0 : index
    %c0_79 = arith.constant 0 : index
    %117 = vector.load %arg5[%c1_77, %c0_78, %c0_79] : memref<9x1x256xf32, #tpu.memory_space<vmem>>, vector<1x1x256xf32>
    %118 = vector.shape_cast %117 : vector<1x1x256xf32> to vector<1x256xf32>
    %119 = vector.broadcast %118 : vector<1x256xf32> to vector<8x256xf32>
    %120 = arith.mulf %116, %119 : vector<8x256xf32>
    %c9_i32_80 = arith.constant 9 : i32
    %121 = arith.muli %96, %c9_i32_80 : i32
    %c1_i32_81 = arith.constant 1 : i32
    %122 = arith.addi %121, %c1_i32_81 : i32
    %123 = arith.index_cast %122 : i32 to index
    %c0_82 = arith.constant 0 : index
    %c0_83 = arith.constant 0 : index
    %124 = vector.load %arg3[%123, %c0_82, %c0_83] : memref<9x8x8xbf16, #tpu.memory_space<vmem>>, vector<1x8x8xbf16>
    %125 = vector.shape_cast %124 : vector<1x8x8xbf16> to vector<8x8xbf16>
    %126 = arith.truncf %120 : vector<8x256xf32> to vector<8x256xbf16>
    %cst_84 = arith.constant dense<0.000000e+00> : vector<8x256xf32>
    %127 = tpu.matmul %125, %126, %cst_84 {dimension_numbers = #tpu.dot_dimension_numbers<[1], [0], [0], [1], [0, 0, 1, 1], [], []>} : vector<8x8xbf16>, vector<8x256xbf16>, vector<8x256xf32> -> vector<8x256xf32>
    %128 = arith.addf %115, %127 : vector<8x256xf32>
    %c15_i32_85 = arith.constant 15 : i32
    %129 = tpu.dynamic_rotate %97 by %c15_i32_85 dim 1 : vector<8x256xf32>, i32 -> vector<8x256xf32>
    %c2_86 = arith.constant 2 : index
    %c0_87 = arith.constant 0 : index
    %c0_88 = arith.constant 0 : index
    %130 = vector.load %arg5[%c2_86, %c0_87, %c0_88] : memref<9x1x256xf32, #tpu.memory_space<vmem>>, vector<1x1x256xf32>
    %131 = vector.shape_cast %130 : vector<1x1x256xf32> to vector<1x256xf32>
    %132 = vector.broadcast %131 : vector<1x256xf32> to vector<8x256xf32>
    %133 = arith.mulf %129, %132 : vector<8x256xf32>
    %c9_i32_89 = arith.constant 9 : i32
    %134 = arith.muli %96, %c9_i32_89 : i32
    %c2_i32 = arith.constant 2 : i32
    %135 = arith.addi %134, %c2_i32 : i32
    %136 = arith.index_cast %135 : i32 to index
    %c0_90 = arith.constant 0 : index
    %c0_91 = arith.constant 0 : index
    %137 = vector.load %arg3[%136, %c0_90, %c0_91] : memref<9x8x8xbf16, #tpu.memory_space<vmem>>, vector<1x8x8xbf16>
    %138 = vector.shape_cast %137 : vector<1x8x8xbf16> to vector<8x8xbf16>
    %139 = arith.truncf %133 : vector<8x256xf32> to vector<8x256xbf16>
    %cst_92 = arith.constant dense<0.000000e+00> : vector<8x256xf32>
    %140 = tpu.matmul %138, %139, %cst_92 {dimension_numbers = #tpu.dot_dimension_numbers<[1], [0], [0], [1], [0, 0, 1, 1], [], []>} : vector<8x8xbf16>, vector<8x256xbf16>, vector<8x256xf32> -> vector<8x256xf32>
    %141 = arith.addf %128, %140 : vector<8x256xf32>
    %c1_i32_93 = arith.constant 1 : i32
    %142 = tpu.dynamic_rotate %97 by %c1_i32_93 dim 1 : vector<8x256xf32>, i32 -> vector<8x256xf32>
    %c3_94 = arith.constant 3 : index
    %c0_95 = arith.constant 0 : index
    %c0_96 = arith.constant 0 : index
    %143 = vector.load %arg5[%c3_94, %c0_95, %c0_96] : memref<9x1x256xf32, #tpu.memory_space<vmem>>, vector<1x1x256xf32>
    %144 = vector.shape_cast %143 : vector<1x1x256xf32> to vector<1x256xf32>
    %145 = vector.broadcast %144 : vector<1x256xf32> to vector<8x256xf32>
    %146 = arith.mulf %142, %145 : vector<8x256xf32>
    %c9_i32_97 = arith.constant 9 : i32
    %147 = arith.muli %96, %c9_i32_97 : i32
    %c3_i32 = arith.constant 3 : i32
    %148 = arith.addi %147, %c3_i32 : i32
    %149 = arith.index_cast %148 : i32 to index
    %c0_98 = arith.constant 0 : index
    %c0_99 = arith.constant 0 : index
    %150 = vector.load %arg3[%149, %c0_98, %c0_99] : memref<9x8x8xbf16, #tpu.memory_space<vmem>>, vector<1x8x8xbf16>
    %151 = vector.shape_cast %150 : vector<1x8x8xbf16> to vector<8x8xbf16>
    %152 = arith.truncf %146 : vector<8x256xf32> to vector<8x256xbf16>
    %cst_100 = arith.constant dense<0.000000e+00> : vector<8x256xf32>
    %153 = tpu.matmul %151, %152, %cst_100 {dimension_numbers = #tpu.dot_dimension_numbers<[1], [0], [0], [1], [0, 0, 1, 1], [], []>} : vector<8x8xbf16>, vector<8x256xbf16>, vector<8x256xf32> -> vector<8x256xf32>
    %154 = arith.addf %141, %153 : vector<8x256xf32>
    %c9_i32_101 = arith.constant 9 : i32
    %155 = arith.muli %96, %c9_i32_101 : i32
    %c4_i32 = arith.constant 4 : i32
    %156 = arith.addi %155, %c4_i32 : i32
    %157 = arith.index_cast %156 : i32 to index
    %c0_102 = arith.constant 0 : index
    %c0_103 = arith.constant 0 : index
    %158 = vector.load %arg3[%157, %c0_102, %c0_103] : memref<9x8x8xbf16, #tpu.memory_space<vmem>>, vector<1x8x8xbf16>
    %159 = vector.shape_cast %158 : vector<1x8x8xbf16> to vector<8x8xbf16>
    %160 = arith.truncf %97 : vector<8x256xf32> to vector<8x256xbf16>
    %cst_104 = arith.constant dense<0.000000e+00> : vector<8x256xf32>
    %161 = tpu.matmul %159, %160, %cst_104 {dimension_numbers = #tpu.dot_dimension_numbers<[1], [0], [0], [1], [0, 0, 1, 1], [], []>} : vector<8x8xbf16>, vector<8x256xbf16>, vector<8x256xf32> -> vector<8x256xf32>
    %162 = arith.addf %154, %161 : vector<8x256xf32>
    %c255_i32_105 = arith.constant 255 : i32
    %163 = tpu.dynamic_rotate %97 by %c255_i32_105 dim 1 : vector<8x256xf32>, i32 -> vector<8x256xf32>
    %c5_106 = arith.constant 5 : index
    %c0_107 = arith.constant 0 : index
    %c0_108 = arith.constant 0 : index
    %164 = vector.load %arg5[%c5_106, %c0_107, %c0_108] : memref<9x1x256xf32, #tpu.memory_space<vmem>>, vector<1x1x256xf32>
    %165 = vector.shape_cast %164 : vector<1x1x256xf32> to vector<1x256xf32>
    %166 = vector.broadcast %165 : vector<1x256xf32> to vector<8x256xf32>
    %167 = arith.mulf %163, %166 : vector<8x256xf32>
    %c9_i32_109 = arith.constant 9 : i32
    %168 = arith.muli %96, %c9_i32_109 : i32
    %c5_i32 = arith.constant 5 : i32
    %169 = arith.addi %168, %c5_i32 : i32
    %170 = arith.index_cast %169 : i32 to index
    %c0_110 = arith.constant 0 : index
    %c0_111 = arith.constant 0 : index
    %171 = vector.load %arg3[%170, %c0_110, %c0_111] : memref<9x8x8xbf16, #tpu.memory_space<vmem>>, vector<1x8x8xbf16>
    %172 = vector.shape_cast %171 : vector<1x8x8xbf16> to vector<8x8xbf16>
    %173 = arith.truncf %167 : vector<8x256xf32> to vector<8x256xbf16>
    %cst_112 = arith.constant dense<0.000000e+00> : vector<8x256xf32>
    %174 = tpu.matmul %172, %173, %cst_112 {dimension_numbers = #tpu.dot_dimension_numbers<[1], [0], [0], [1], [0, 0, 1, 1], [], []>} : vector<8x8xbf16>, vector<8x256xbf16>, vector<8x256xf32> -> vector<8x256xf32>
    %175 = arith.addf %162, %174 : vector<8x256xf32>
    %c241_i32_113 = arith.constant 241 : i32
    %176 = tpu.dynamic_rotate %97 by %c241_i32_113 dim 1 : vector<8x256xf32>, i32 -> vector<8x256xf32>
    %c6_114 = arith.constant 6 : index
    %c0_115 = arith.constant 0 : index
    %c0_116 = arith.constant 0 : index
    %177 = vector.load %arg5[%c6_114, %c0_115, %c0_116] : memref<9x1x256xf32, #tpu.memory_space<vmem>>, vector<1x1x256xf32>
    %178 = vector.shape_cast %177 : vector<1x1x256xf32> to vector<1x256xf32>
    %179 = vector.broadcast %178 : vector<1x256xf32> to vector<8x256xf32>
    %180 = arith.mulf %176, %179 : vector<8x256xf32>
    %c9_i32_117 = arith.constant 9 : i32
    %181 = arith.muli %96, %c9_i32_117 : i32
    %c6_i32 = arith.constant 6 : i32
    %182 = arith.addi %181, %c6_i32 : i32
    %183 = arith.index_cast %182 : i32 to index
    %c0_118 = arith.constant 0 : index
    %c0_119 = arith.constant 0 : index
    %184 = vector.load %arg3[%183, %c0_118, %c0_119] : memref<9x8x8xbf16, #tpu.memory_space<vmem>>, vector<1x8x8xbf16>
    %185 = vector.shape_cast %184 : vector<1x8x8xbf16> to vector<8x8xbf16>
    %186 = arith.truncf %180 : vector<8x256xf32> to vector<8x256xbf16>
    %cst_120 = arith.constant dense<0.000000e+00> : vector<8x256xf32>
    %187 = tpu.matmul %185, %186, %cst_120 {dimension_numbers = #tpu.dot_dimension_numbers<[1], [0], [0], [1], [0, 0, 1, 1], [], []>} : vector<8x8xbf16>, vector<8x256xbf16>, vector<8x256xf32> -> vector<8x256xf32>
    %188 = arith.addf %175, %187 : vector<8x256xf32>
    %c240_i32_121 = arith.constant 240 : i32
    %189 = tpu.dynamic_rotate %97 by %c240_i32_121 dim 1 : vector<8x256xf32>, i32 -> vector<8x256xf32>
    %c7_122 = arith.constant 7 : index
    %c0_123 = arith.constant 0 : index
    %c0_124 = arith.constant 0 : index
    %190 = vector.load %arg5[%c7_122, %c0_123, %c0_124] : memref<9x1x256xf32, #tpu.memory_space<vmem>>, vector<1x1x256xf32>
    %191 = vector.shape_cast %190 : vector<1x1x256xf32> to vector<1x256xf32>
    %192 = vector.broadcast %191 : vector<1x256xf32> to vector<8x256xf32>
    %193 = arith.mulf %189, %192 : vector<8x256xf32>
    %c9_i32_125 = arith.constant 9 : i32
    %194 = arith.muli %96, %c9_i32_125 : i32
    %c7_i32 = arith.constant 7 : i32
    %195 = arith.addi %194, %c7_i32 : i32
    %196 = arith.index_cast %195 : i32 to index
    %c0_126 = arith.constant 0 : index
    %c0_127 = arith.constant 0 : index
    %197 = vector.load %arg3[%196, %c0_126, %c0_127] : memref<9x8x8xbf16, #tpu.memory_space<vmem>>, vector<1x8x8xbf16>
    %198 = vector.shape_cast %197 : vector<1x8x8xbf16> to vector<8x8xbf16>
    %199 = arith.truncf %193 : vector<8x256xf32> to vector<8x256xbf16>
    %cst_128 = arith.constant dense<0.000000e+00> : vector<8x256xf32>
    %200 = tpu.matmul %198, %199, %cst_128 {dimension_numbers = #tpu.dot_dimension_numbers<[1], [0], [0], [1], [0, 0, 1, 1], [], []>} : vector<8x8xbf16>, vector<8x256xbf16>, vector<8x256xf32> -> vector<8x256xf32>
    %201 = arith.addf %188, %200 : vector<8x256xf32>
    %c239_i32_129 = arith.constant 239 : i32
    %202 = tpu.dynamic_rotate %97 by %c239_i32_129 dim 1 : vector<8x256xf32>, i32 -> vector<8x256xf32>
    %c8_130 = arith.constant 8 : index
    %c0_131 = arith.constant 0 : index
    %c0_132 = arith.constant 0 : index
    %203 = vector.load %arg5[%c8_130, %c0_131, %c0_132] : memref<9x1x256xf32, #tpu.memory_space<vmem>>, vector<1x1x256xf32>
    %204 = vector.shape_cast %203 : vector<1x1x256xf32> to vector<1x256xf32>
    %205 = vector.broadcast %204 : vector<1x256xf32> to vector<8x256xf32>
    %206 = arith.mulf %202, %205 : vector<8x256xf32>
    %c9_i32_133 = arith.constant 9 : i32
    %207 = arith.muli %96, %c9_i32_133 : i32
    %c8_i32 = arith.constant 8 : i32
    %208 = arith.addi %207, %c8_i32 : i32
    %209 = arith.index_cast %208 : i32 to index
    %c0_134 = arith.constant 0 : index
    %c0_135 = arith.constant 0 : index
    %210 = vector.load %arg3[%209, %c0_134, %c0_135] : memref<9x8x8xbf16, #tpu.memory_space<vmem>>, vector<1x8x8xbf16>
    %211 = vector.shape_cast %210 : vector<1x8x8xbf16> to vector<8x8xbf16>
    %212 = arith.truncf %206 : vector<8x256xf32> to vector<8x256xbf16>
    %cst_136 = arith.constant dense<0.000000e+00> : vector<8x256xf32>
    %213 = tpu.matmul %211, %212, %cst_136 {dimension_numbers = #tpu.dot_dimension_numbers<[1], [0], [0], [1], [0, 0, 1, 1], [], []>} : vector<8x8xbf16>, vector<8x256xbf16>, vector<8x256xf32> -> vector<8x256xf32>
    %214 = arith.addf %201, %213 : vector<8x256xf32>
    %215 = vector.broadcast %101 : vector<8x1xf32> to vector<8x256xf32>
    %216 = arith.addf %214, %215 : vector<8x256xf32>
    %cst_137 = arith.constant 0.000000e+00 : f32
    %217 = vector.broadcast %cst_137 : f32 to vector<8x256xf32>
    %218 = arith.maximumf %216, %217 : vector<8x256xf32>
    %c0_138 = arith.constant 0 : index
    %c0_139 = arith.constant 0 : index
    %219 = vector.load %arg7[%c0_138, %c0_139] : memref<8x256xf32, #tpu.memory_space<vmem>>, vector<8x256xf32>
    tpu.vector_store %arg7[%c0_138, %c0_139], %218 {strides = array<i32>} : memref<8x256xf32, #tpu.memory_space<vmem>>, vector<8x256xf32>,
    %c1_i32_140 = arith.constant 1 : i32
    %c0_141 = arith.constant 0 : index
    %c0_142 = arith.constant 0 : index
    %220 = vector.load %arg7[%c0_141, %c0_142] : memref<8x256xf32, #tpu.memory_space<vmem>>, vector<8x256xf32>
    %c0_143 = arith.constant 0 : index
    %c0_144 = arith.constant 0 : index
    %c0_145 = arith.constant 0 : index
    %221 = vector.load %arg6[%c0_143, %c0_144, %c0_145] : memref<1x8x256xf32, #tpu.memory_space<vmem>>, vector<1x8x256xf32>
    %222 = vector.shape_cast %221 : vector<1x8x256xf32> to vector<8x256xf32>
    %223 = vector.shape_cast %220 : vector<8x256xf32> to vector<1x8x256xf32>
    tpu.vector_store %arg6[%c0_143, %c0_144, %c0_145], %223 {strides = array<i32>} : memref<1x8x256xf32, #tpu.memory_space<vmem>>, vector<1x8x256xf32>,
    return
  }
  func.func @transform_0(%arg0: i32) -> (i32, i32, i32) {
    %c0_i32 = arith.constant 0 : i32
    %c0_i32_0 = arith.constant 0 : i32
    %c0_i32_1 = arith.constant 0 : i32
    return %arg0, %c0_i32, %c0_i32_0 : i32, i32, i32
  }
  func.func @transform_1(%arg0: i32) -> (i32, i32, i32) {
    %c0_i32 = arith.constant 0 : i32
    %c0_i32_0 = arith.constant 0 : i32
    %c0_i32_1 = arith.constant 0 : i32
    %c0_i32_2 = arith.constant 0 : i32
    return %c0_i32, %c0_i32_0, %c0_i32_1 : i32, i32, i32
  }
  func.func @transform_2(%arg0: i32) -> (i32, i32, i32) {
    %c0_i32 = arith.constant 0 : i32
    %c0_i32_0 = arith.constant 0 : i32
    %c0_i32_1 = arith.constant 0 : i32
    %c0_i32_2 = arith.constant 0 : i32
    return %c0_i32, %c0_i32_0, %c0_i32_1 : i32, i32, i32
  }
  func.func @transform_3(%arg0: i32) -> (i32, i32, i32) {
    %c0_i32 = arith.constant 0 : i32
    %c0_i32_0 = arith.constant 0 : i32
    %c0_i32_1 = arith.constant 0 : i32
    %c0_i32_2 = arith.constant 0 : i32
    return %c0_i32, %c0_i32_0, %c0_i32_1 : i32, i32, i32
  }
  func.func @transform_4(%arg0: i32) -> (i32, i32, i32) {
    %c0_i32 = arith.constant 0 : i32
    %c0_i32_0 = arith.constant 0 : i32
    %c0_i32_1 = arith.constant 0 : i32
    %c0_i32_2 = arith.constant 0 : i32
    return %c0_i32, %c0_i32_0, %c0_i32_1 : i32, i32, i32
  }
  func.func @transform_5(%arg0: i32) -> (i32, i32, i32) {
    %c0_i32 = arith.constant 0 : i32
    %c0_i32_0 = arith.constant 0 : i32
    %c0_i32_1 = arith.constant 0 : i32
    return %arg0, %c0_i32, %c0_i32_0 : i32, i32, i32
  }
}

module attributes {stable_mosaic.version = 11 : i64} {
  func.func @_fused_decoder_kernel(%arg0: i32, %arg1: memref<1x8x256xf32, #tpu.memory_space<vmem>>, %arg2: memref<9x8x8xbf16, #tpu.memory_space<vmem>>, %arg3: memref<9x8x8xbf16, #tpu.memory_space<vmem>>, %arg4: memref<2x8x1xf32, #tpu.memory_space<vmem>>, %arg5: memref<9x1x256xf32, #tpu.memory_space<vmem>>, %arg6: memref<1x8x256xf32, #tpu.memory_space<vmem>>, %arg7: memref<8x256xf32, #tpu.memory_space<vmem>>) attributes {dimension_semantics = [#tpu.dimension_semantics<parallel>], iteration_bounds = array<i64: 2>, scalar_prefetch = 0 : i64, scratch_operands = 1 : i64, tpu.core_type = #tpu.core_type<tc>, window_params = [{transform_indices = @transform_0, window_bounds = array<i64: 1, 8, 256>}, {pipeline_mode = #tpu.pipeline_mode<synchronous>, transform_indices = @transform_1, window_bounds = array<i64: 9, 8, 8>}, {pipeline_mode = #tpu.pipeline_mode<synchronous>, transform_indices = @transform_2, window_bounds = array<i64: 9, 8, 8>}, {pipeline_mode = #tpu.pipeline_mode<synchronous>, transform_indices = @transform_3, window_bounds = array<i64: 2, 8, 1>}, {pipeline_mode = #tpu.pipeline_mode<synchronous>, transform_indices = @transform_4, window_bounds = array<i64: 9, 1, 256>}, {transform_indices = @transform_5, window_bounds = array<i64: 1, 8, 256>}]} {
    %c0 = arith.constant 0 : index
    %c0_0 = arith.constant 0 : index
    %c0_1 = arith.constant 0 : index
    %0 = vector.load %arg1[%c0, %c0_0, %c0_1] : memref<1x8x256xf32, #tpu.memory_space<vmem>>, vector<1x8x256xf32>
    %1 = vector.shape_cast %0 : vector<1x8x256xf32> to vector<8x256xf32>
    %c0_2 = arith.constant 0 : index
    %c0_3 = arith.constant 0 : index
    %c0_4 = arith.constant 0 : index
    %2 = vector.load %arg4[%c0_2, %c0_3, %c0_4] : memref<2x8x1xf32, #tpu.memory_space<vmem>>, vector<1x8x1xf32>
    %3 = vector.shape_cast %2 : vector<1x8x1xf32> to vector<8x1xf32>
    %cst = arith.constant 0.000000e+00 : f32
    %4 = vector.broadcast %cst : f32 to vector<8x256xf32>
    %c17_i32 = arith.constant 17 : i32
    %5 = tpu.dynamic_rotate %1 by %c17_i32 dim 1 : vector<8x256xf32>, i32 -> vector<8x256xf32>
    %c0_5 = arith.constant 0 : index
    %c0_6 = arith.constant 0 : index
    %c0_7 = arith.constant 0 : index
    %6 = vector.load %arg5[%c0_5, %c0_6, %c0_7] : memref<9x1x256xf32, #tpu.memory_space<vmem>>, vector<1x1x256xf32>
    %7 = vector.shape_cast %6 : vector<1x1x256xf32> to vector<1x256xf32>
    %8 = vector.broadcast %7 : vector<1x256xf32> to vector<8x256xf32>
    %9 = arith.mulf %5, %8 : vector<8x256xf32>
    %c0_8 = arith.constant 0 : index
    %c0_9 = arith.constant 0 : index
    %c0_10 = arith.constant 0 : index
    %10 = vector.load %arg2[%c0_8, %c0_9, %c0_10] : memref<9x8x8xbf16, #tpu.memory_space<vmem>>, vector<1x8x8xbf16>
    %11 = vector.shape_cast %10 : vector<1x8x8xbf16> to vector<8x8xbf16>
    %12 = arith.truncf %9 : vector<8x256xf32> to vector<8x256xbf16>
    %cst_11 = arith.constant dense<0.000000e+00> : vector<8x256xf32>
    %13 = tpu.matmul %11, %12, %cst_11 {dimension_numbers = #tpu.dot_dimension_numbers<[1], [0], [0], [1], [0, 0, 1, 1], [], []>} : vector<8x8xbf16>, vector<8x256xbf16>, vector<8x256xf32> -> vector<8x256xf32>
    %14 = arith.addf %4, %13 : vector<8x256xf32>
    %c16_i32 = arith.constant 16 : i32
    %15 = tpu.dynamic_rotate %1 by %c16_i32 dim 1 : vector<8x256xf32>, i32 -> vector<8x256xf32>
    %c1 = arith.constant 1 : index
    %c0_12 = arith.constant 0 : index
    %c0_13 = arith.constant 0 : index
    %16 = vector.load %arg5[%c1, %c0_12, %c0_13] : memref<9x1x256xf32, #tpu.memory_space<vmem>>, vector<1x1x256xf32>
    %17 = vector.shape_cast %16 : vector<1x1x256xf32> to vector<1x256xf32>
    %18 = vector.broadcast %17 : vector<1x256xf32> to vector<8x256xf32>
    %19 = arith.mulf %15, %18 : vector<8x256xf32>
    %c1_14 = arith.constant 1 : index
    %c0_15 = arith.constant 0 : index
    %c0_16 = arith.constant 0 : index
    %20 = vector.load %arg2[%c1_14, %c0_15, %c0_16] : memref<9x8x8xbf16, #tpu.memory_space<vmem>>, vector<1x8x8xbf16>
    %21 = vector.shape_cast %20 : vector<1x8x8xbf16> to vector<8x8xbf16>
    %22 = arith.truncf %19 : vector<8x256xf32> to vector<8x256xbf16>
    %cst_17 = arith.constant dense<0.000000e+00> : vector<8x256xf32>
    %23 = tpu.matmul %21, %22, %cst_17 {dimension_numbers = #tpu.dot_dimension_numbers<[1], [0], [0], [1], [0, 0, 1, 1], [], []>} : vector<8x8xbf16>, vector<8x256xbf16>, vector<8x256xf32> -> vector<8x256xf32>
    %24 = arith.addf %14, %23 : vector<8x256xf32>
    %c15_i32 = arith.constant 15 : i32
    %25 = tpu.dynamic_rotate %1 by %c15_i32 dim 1 : vector<8x256xf32>, i32 -> vector<8x256xf32>
    %c2 = arith.constant 2 : index
    %c0_18 = arith.constant 0 : index
    %c0_19 = arith.constant 0 : index
    %26 = vector.load %arg5[%c2, %c0_18, %c0_19] : memref<9x1x256xf32, #tpu.memory_space<vmem>>, vector<1x1x256xf32>
    %27 = vector.shape_cast %26 : vector<1x1x256xf32> to vector<1x256xf32>
    %28 = vector.broadcast %27 : vector<1x256xf32> to vector<8x256xf32>
    %29 = arith.mulf %25, %28 : vector<8x256xf32>
    %c2_20 = arith.constant 2 : index
    %c0_21 = arith.constant 0 : index
    %c0_22 = arith.constant 0 : index
    %30 = vector.load %arg2[%c2_20, %c0_21, %c0_22] : memref<9x8x8xbf16, #tpu.memory_space<vmem>>, vector<1x8x8xbf16>
    %31 = vector.shape_cast %30 : vector<1x8x8xbf16> to vector<8x8xbf16>
    %32 = arith.truncf %29 : vector<8x256xf32> to vector<8x256xbf16>
    %cst_23 = arith.constant dense<0.000000e+00> : vector<8x256xf32>
    %33 = tpu.matmul %31, %32, %cst_23 {dimension_numbers = #tpu.dot_dimension_numbers<[1], [0], [0], [1], [0, 0, 1, 1], [], []>} : vector<8x8xbf16>, vector<8x256xbf16>, vector<8x256xf32> -> vector<8x256xf32>
    %34 = arith.addf %24, %33 : vector<8x256xf32>
    %c1_i32 = arith.constant 1 : i32
    %35 = tpu.dynamic_rotate %1 by %c1_i32 dim 1 : vector<8x256xf32>, i32 -> vector<8x256xf32>
    %c3 = arith.constant 3 : index
    %c0_24 = arith.constant 0 : index
    %c0_25 = arith.constant 0 : index
    %36 = vector.load %arg5[%c3, %c0_24, %c0_25] : memref<9x1x256xf32, #tpu.memory_space<vmem>>, vector<1x1x256xf32>
    %37 = vector.shape_cast %36 : vector<1x1x256xf32> to vector<1x256xf32>
    %38 = vector.broadcast %37 : vector<1x256xf32> to vector<8x256xf32>
    %39 = arith.mulf %35, %38 : vector<8x256xf32>
    %c3_26 = arith.constant 3 : index
    %c0_27 = arith.constant 0 : index
    %c0_28 = arith.constant 0 : index
    %40 = vector.load %arg2[%c3_26, %c0_27, %c0_28] : memref<9x8x8xbf16, #tpu.memory_space<vmem>>, vector<1x8x8xbf16>
    %41 = vector.shape_cast %40 : vector<1x8x8xbf16> to vector<8x8xbf16>
    %42 = arith.truncf %39 : vector<8x256xf32> to vector<8x256xbf16>
    %cst_29 = arith.constant dense<0.000000e+00> : vector<8x256xf32>
    %43 = tpu.matmul %41, %42, %cst_29 {dimension_numbers = #tpu.dot_dimension_numbers<[1], [0], [0], [1], [0, 0, 1, 1], [], []>} : vector<8x8xbf16>, vector<8x256xbf16>, vector<8x256xf32> -> vector<8x256xf32>
    %44 = arith.addf %34, %43 : vector<8x256xf32>
    %c4 = arith.constant 4 : index
    %c0_30 = arith.constant 0 : index
    %c0_31 = arith.constant 0 : index
    %45 = vector.load %arg2[%c4, %c0_30, %c0_31] : memref<9x8x8xbf16, #tpu.memory_space<vmem>>, vector<1x8x8xbf16>
    %46 = vector.shape_cast %45 : vector<1x8x8xbf16> to vector<8x8xbf16>
    %47 = arith.truncf %1 : vector<8x256xf32> to vector<8x256xbf16>
    %cst_32 = arith.constant dense<0.000000e+00> : vector<8x256xf32>
    %48 = tpu.matmul %46, %47, %cst_32 {dimension_numbers = #tpu.dot_dimension_numbers<[1], [0], [0], [1], [0, 0, 1, 1], [], []>} : vector<8x8xbf16>, vector<8x256xbf16>, vector<8x256xf32> -> vector<8x256xf32>
    %49 = arith.addf %44, %48 : vector<8x256xf32>
    %c255_i32 = arith.constant 255 : i32
    %50 = tpu.dynamic_rotate %1 by %c255_i32 dim 1 : vector<8x256xf32>, i32 -> vector<8x256xf32>
    %c5 = arith.constant 5 : index
    %c0_33 = arith.constant 0 : index
    %c0_34 = arith.constant 0 : index
    %51 = vector.load %arg5[%c5, %c0_33, %c0_34] : memref<9x1x256xf32, #tpu.memory_space<vmem>>, vector<1x1x256xf32>
    %52 = vector.shape_cast %51 : vector<1x1x256xf32> to vector<1x256xf32>
    %53 = vector.broadcast %52 : vector<1x256xf32> to vector<8x256xf32>
    %54 = arith.mulf %50, %53 : vector<8x256xf32>
    %c5_35 = arith.constant 5 : index
    %c0_36 = arith.constant 0 : index
    %c0_37 = arith.constant 0 : index
    %55 = vector.load %arg2[%c5_35, %c0_36, %c0_37] : memref<9x8x8xbf16, #tpu.memory_space<vmem>>, vector<1x8x8xbf16>
    %56 = vector.shape_cast %55 : vector<1x8x8xbf16> to vector<8x8xbf16>
    %57 = arith.truncf %54 : vector<8x256xf32> to vector<8x256xbf16>
    %cst_38 = arith.constant dense<0.000000e+00> : vector<8x256xf32>
    %58 = tpu.matmul %56, %57, %cst_38 {dimension_numbers = #tpu.dot_dimension_numbers<[1], [0], [0], [1], [0, 0, 1, 1], [], []>} : vector<8x8xbf16>, vector<8x256xbf16>, vector<8x256xf32> -> vector<8x256xf32>
    %59 = arith.addf %49, %58 : vector<8x256xf32>
    %c241_i32 = arith.constant 241 : i32
    %60 = tpu.dynamic_rotate %1 by %c241_i32 dim 1 : vector<8x256xf32>, i32 -> vector<8x256xf32>
    %c6 = arith.constant 6 : index
    %c0_39 = arith.constant 0 : index
    %c0_40 = arith.constant 0 : index
    %61 = vector.load %arg5[%c6, %c0_39, %c0_40] : memref<9x1x256xf32, #tpu.memory_space<vmem>>, vector<1x1x256xf32>
    %62 = vector.shape_cast %61 : vector<1x1x256xf32> to vector<1x256xf32>
    %63 = vector.broadcast %62 : vector<1x256xf32> to vector<8x256xf32>
    %64 = arith.mulf %60, %63 : vector<8x256xf32>
    %c6_41 = arith.constant 6 : index
    %c0_42 = arith.constant 0 : index
    %c0_43 = arith.constant 0 : index
    %65 = vector.load %arg2[%c6_41, %c0_42, %c0_43] : memref<9x8x8xbf16, #tpu.memory_space<vmem>>, vector<1x8x8xbf16>
    %66 = vector.shape_cast %65 : vector<1x8x8xbf16> to vector<8x8xbf16>
    %67 = arith.truncf %64 : vector<8x256xf32> to vector<8x256xbf16>
    %cst_44 = arith.constant dense<0.000000e+00> : vector<8x256xf32>
    %68 = tpu.matmul %66, %67, %cst_44 {dimension_numbers = #tpu.dot_dimension_numbers<[1], [0], [0], [1], [0, 0, 1, 1], [], []>} : vector<8x8xbf16>, vector<8x256xbf16>, vector<8x256xf32> -> vector<8x256xf32>
    %69 = arith.addf %59, %68 : vector<8x256xf32>
    %c240_i32 = arith.constant 240 : i32
    %70 = tpu.dynamic_rotate %1 by %c240_i32 dim 1 : vector<8x256xf32>, i32 -> vector<8x256xf32>
    %c7 = arith.constant 7 : index
    %c0_45 = arith.constant 0 : index
    %c0_46 = arith.constant 0 : index
    %71 = vector.load %arg5[%c7, %c0_45, %c0_46] : memref<9x1x256xf32, #tpu.memory_space<vmem>>, vector<1x1x256xf32>
    %72 = vector.shape_cast %71 : vector<1x1x256xf32> to vector<1x256xf32>
    %73 = vector.broadcast %72 : vector<1x256xf32> to vector<8x256xf32>
    %74 = arith.mulf %70, %73 : vector<8x256xf32>
    %c7_47 = arith.constant 7 : index
    %c0_48 = arith.constant 0 : index
    %c0_49 = arith.constant 0 : index
    %75 = vector.load %arg2[%c7_47, %c0_48, %c0_49] : memref<9x8x8xbf16, #tpu.memory_space<vmem>>, vector<1x8x8xbf16>
    %76 = vector.shape_cast %75 : vector<1x8x8xbf16> to vector<8x8xbf16>
    %77 = arith.truncf %74 : vector<8x256xf32> to vector<8x256xbf16>
    %cst_50 = arith.constant dense<0.000000e+00> : vector<8x256xf32>
    %78 = tpu.matmul %76, %77, %cst_50 {dimension_numbers = #tpu.dot_dimension_numbers<[1], [0], [0], [1], [0, 0, 1, 1], [], []>} : vector<8x8xbf16>, vector<8x256xbf16>, vector<8x256xf32> -> vector<8x256xf32>
    %79 = arith.addf %69, %78 : vector<8x256xf32>
    %c239_i32 = arith.constant 239 : i32
    %80 = tpu.dynamic_rotate %1 by %c239_i32 dim 1 : vector<8x256xf32>, i32 -> vector<8x256xf32>
    %c8 = arith.constant 8 : index
    %c0_51 = arith.constant 0 : index
    %c0_52 = arith.constant 0 : index
    %81 = vector.load %arg5[%c8, %c0_51, %c0_52] : memref<9x1x256xf32, #tpu.memory_space<vmem>>, vector<1x1x256xf32>
    %82 = vector.shape_cast %81 : vector<1x1x256xf32> to vector<1x256xf32>
    %83 = vector.broadcast %82 : vector<1x256xf32> to vector<8x256xf32>
    %84 = arith.mulf %80, %83 : vector<8x256xf32>
    %c8_53 = arith.constant 8 : index
    %c0_54 = arith.constant 0 : index
    %c0_55 = arith.constant 0 : index
    %85 = vector.load %arg2[%c8_53, %c0_54, %c0_55] : memref<9x8x8xbf16, #tpu.memory_space<vmem>>, vector<1x8x8xbf16>
    %86 = vector.shape_cast %85 : vector<1x8x8xbf16> to vector<8x8xbf16>
    %87 = arith.truncf %84 : vector<8x256xf32> to vector<8x256xbf16>
    %cst_56 = arith.constant dense<0.000000e+00> : vector<8x256xf32>
    %88 = tpu.matmul %86, %87, %cst_56 {dimension_numbers = #tpu.dot_dimension_numbers<[1], [0], [0], [1], [0, 0, 1, 1], [], []>} : vector<8x8xbf16>, vector<8x256xbf16>, vector<8x256xf32> -> vector<8x256xf32>
    %89 = arith.addf %79, %88 : vector<8x256xf32>
    %90 = vector.broadcast %3 : vector<8x1xf32> to vector<8x256xf32>
    %91 = arith.addf %89, %90 : vector<8x256xf32>
    %cst_57 = arith.constant 0.000000e+00 : f32
    %92 = vector.broadcast %cst_57 : f32 to vector<8x256xf32>
    %93 = arith.maximumf %91, %92 : vector<8x256xf32>
    %c0_58 = arith.constant 0 : index
    %c0_59 = arith.constant 0 : index
    %94 = vector.load %arg7[%c0_58, %c0_59] : memref<8x256xf32, #tpu.memory_space<vmem>>, vector<8x256xf32>
    tpu.vector_store %arg7[%c0_58, %c0_59], %93 {strides = array<i32>} : memref<8x256xf32, #tpu.memory_space<vmem>>, vector<8x256xf32>,
    %c0_i32 = arith.constant 0 : i32
    %c1_i32_60 = arith.constant 1 : i32
    %95 = arith.muli %c0_i32, %c1_i32_60 : i32
    %c0_i32_61 = arith.constant 0 : i32
    %96 = arith.addi %c0_i32_61, %95 : i32
    %c0_62 = arith.constant 0 : index
    %c0_63 = arith.constant 0 : index
    %97 = vector.load %arg7[%c0_62, %c0_63] : memref<8x256xf32, #tpu.memory_space<vmem>>, vector<8x256xf32>
    %c1_i32_64 = arith.constant 1 : i32
    %98 = arith.addi %96, %c1_i32_64 : i32
    %99 = arith.index_cast %98 : i32 to index
    %c0_65 = arith.constant 0 : index
    %c0_66 = arith.constant 0 : index
    %100 = vector.load %arg4[%99, %c0_65, %c0_66] : memref<2x8x1xf32, #tpu.memory_space<vmem>>, vector<1x8x1xf32>
    %101 = vector.shape_cast %100 : vector<1x8x1xf32> to vector<8x1xf32>
    %cst_67 = arith.constant 0.000000e+00 : f32
    %102 = vector.broadcast %cst_67 : f32 to vector<8x256xf32>
    %c17_i32_68 = arith.constant 17 : i32
    %103 = tpu.dynamic_rotate %97 by %c17_i32_68 dim 1 : vector<8x256xf32>, i32 -> vector<8x256xf32>
    %c0_69 = arith.constant 0 : index
    %c0_70 = arith.constant 0 : index
    %c0_71 = arith.constant 0 : index
    %104 = vector.load %arg5[%c0_69, %c0_70, %c0_71] : memref<9x1x256xf32, #tpu.memory_space<vmem>>, vector<1x1x256xf32>
    %105 = vector.shape_cast %104 : vector<1x1x256xf32> to vector<1x256xf32>
    %106 = vector.broadcast %105 : vector<1x256xf32> to vector<8x256xf32>
    %107 = arith.mulf %103, %106 : vector<8x256xf32>
    %c9_i32 = arith.constant 9 : i32
    %108 = arith.muli %96, %c9_i32 : i32
    %c0_i32_72 = arith.constant 0 : i32
    %109 = arith.addi %108, %c0_i32_72 : i32
    %110 = arith.index_cast %109 : i32 to index
    %c0_73 = arith.constant 0 : index
    %c0_74 = arith.constant 0 : index
    %111 = vector.load %arg3[%110, %c0_73, %c0_74] : memref<9x8x8xbf16, #tpu.memory_space<vmem>>, vector<1x8x8xbf16>
    %112 = vector.shape_cast %111 : vector<1x8x8xbf16> to vector<8x8xbf16>
    %113 = arith.truncf %107 : vector<8x256xf32> to vector<8x256xbf16>
    %cst_75 = arith.constant dense<0.000000e+00> : vector<8x256xf32>
    %114 = tpu.matmul %112, %113, %cst_75 {dimension_numbers = #tpu.dot_dimension_numbers<[1], [0], [0], [1], [0, 0, 1, 1], [], []>} : vector<8x8xbf16>, vector<8x256xbf16>, vector<8x256xf32> -> vector<8x256xf32>
    %115 = arith.addf %102, %114 : vector<8x256xf32>
    %c16_i32_76 = arith.constant 16 : i32
    %116 = tpu.dynamic_rotate %97 by %c16_i32_76 dim 1 : vector<8x256xf32>, i32 -> vector<8x256xf32>
    %c1_77 = arith.constant 1 : index
    %c0_78 = arith.constant 0 : index
    %c0_79 = arith.constant 0 : index
    %117 = vector.load %arg5[%c1_77, %c0_78, %c0_79] : memref<9x1x256xf32, #tpu.memory_space<vmem>>, vector<1x1x256xf32>
    %118 = vector.shape_cast %117 : vector<1x1x256xf32> to vector<1x256xf32>
    %119 = vector.broadcast %118 : vector<1x256xf32> to vector<8x256xf32>
    %120 = arith.mulf %116, %119 : vector<8x256xf32>
    %c9_i32_80 = arith.constant 9 : i32
    %121 = arith.muli %96, %c9_i32_80 : i32
    %c1_i32_81 = arith.constant 1 : i32
    %122 = arith.addi %121, %c1_i32_81 : i32
    %123 = arith.index_cast %122 : i32 to index
    %c0_82 = arith.constant 0 : index
    %c0_83 = arith.constant 0 : index
    %124 = vector.load %arg3[%123, %c0_82, %c0_83] : memref<9x8x8xbf16, #tpu.memory_space<vmem>>, vector<1x8x8xbf16>
    %125 = vector.shape_cast %124 : vector<1x8x8xbf16> to vector<8x8xbf16>
    %126 = arith.truncf %120 : vector<8x256xf32> to vector<8x256xbf16>
    %cst_84 = arith.constant dense<0.000000e+00> : vector<8x256xf32>
    %127 = tpu.matmul %125, %126, %cst_84 {dimension_numbers = #tpu.dot_dimension_numbers<[1], [0], [0], [1], [0, 0, 1, 1], [], []>} : vector<8x8xbf16>, vector<8x256xbf16>, vector<8x256xf32> -> vector<8x256xf32>
    %128 = arith.addf %115, %127 : vector<8x256xf32>
    %c15_i32_85 = arith.constant 15 : i32
    %129 = tpu.dynamic_rotate %97 by %c15_i32_85 dim 1 : vector<8x256xf32>, i32 -> vector<8x256xf32>
    %c2_86 = arith.constant 2 : index
    %c0_87 = arith.constant 0 : index
    %c0_88 = arith.constant 0 : index
    %130 = vector.load %arg5[%c2_86, %c0_87, %c0_88] : memref<9x1x256xf32, #tpu.memory_space<vmem>>, vector<1x1x256xf32>
    %131 = vector.shape_cast %130 : vector<1x1x256xf32> to vector<1x256xf32>
    %132 = vector.broadcast %131 : vector<1x256xf32> to vector<8x256xf32>
    %133 = arith.mulf %129, %132 : vector<8x256xf32>
    %c9_i32_89 = arith.constant 9 : i32
    %134 = arith.muli %96, %c9_i32_89 : i32
    %c2_i32 = arith.constant 2 : i32
    %135 = arith.addi %134, %c2_i32 : i32
    %136 = arith.index_cast %135 : i32 to index
    %c0_90 = arith.constant 0 : index
    %c0_91 = arith.constant 0 : index
    %137 = vector.load %arg3[%136, %c0_90, %c0_91] : memref<9x8x8xbf16, #tpu.memory_space<vmem>>, vector<1x8x8xbf16>
    %138 = vector.shape_cast %137 : vector<1x8x8xbf16> to vector<8x8xbf16>
    %139 = arith.truncf %133 : vector<8x256xf32> to vector<8x256xbf16>
    %cst_92 = arith.constant dense<0.000000e+00> : vector<8x256xf32>
    %140 = tpu.matmul %138, %139, %cst_92 {dimension_numbers = #tpu.dot_dimension_numbers<[1], [0], [0], [1], [0, 0, 1, 1], [], []>} : vector<8x8xbf16>, vector<8x256xbf16>, vector<8x256xf32> -> vector<8x256xf32>
    %141 = arith.addf %128, %140 : vector<8x256xf32>
    %c1_i32_93 = arith.constant 1 : i32
    %142 = tpu.dynamic_rotate %97 by %c1_i32_93 dim 1 : vector<8x256xf32>, i32 -> vector<8x256xf32>
    %c3_94 = arith.constant 3 : index
    %c0_95 = arith.constant 0 : index
    %c0_96 = arith.constant 0 : index
    %143 = vector.load %arg5[%c3_94, %c0_95, %c0_96] : memref<9x1x256xf32, #tpu.memory_space<vmem>>, vector<1x1x256xf32>
    %144 = vector.shape_cast %143 : vector<1x1x256xf32> to vector<1x256xf32>
    %145 = vector.broadcast %144 : vector<1x256xf32> to vector<8x256xf32>
    %146 = arith.mulf %142, %145 : vector<8x256xf32>
    %c9_i32_97 = arith.constant 9 : i32
    %147 = arith.muli %96, %c9_i32_97 : i32
    %c3_i32 = arith.constant 3 : i32
    %148 = arith.addi %147, %c3_i32 : i32
    %149 = arith.index_cast %148 : i32 to index
    %c0_98 = arith.constant 0 : index
    %c0_99 = arith.constant 0 : index
    %150 = vector.load %arg3[%149, %c0_98, %c0_99] : memref<9x8x8xbf16, #tpu.memory_space<vmem>>, vector<1x8x8xbf16>
    %151 = vector.shape_cast %150 : vector<1x8x8xbf16> to vector<8x8xbf16>
    %152 = arith.truncf %146 : vector<8x256xf32> to vector<8x256xbf16>
    %cst_100 = arith.constant dense<0.000000e+00> : vector<8x256xf32>
    %153 = tpu.matmul %151, %152, %cst_100 {dimension_numbers = #tpu.dot_dimension_numbers<[1], [0], [0], [1], [0, 0, 1, 1], [], []>} : vector<8x8xbf16>, vector<8x256xbf16>, vector<8x256xf32> -> vector<8x256xf32>
    %154 = arith.addf %141, %153 : vector<8x256xf32>
    %c9_i32_101 = arith.constant 9 : i32
    %155 = arith.muli %96, %c9_i32_101 : i32
    %c4_i32 = arith.constant 4 : i32
    %156 = arith.addi %155, %c4_i32 : i32
    %157 = arith.index_cast %156 : i32 to index
    %c0_102 = arith.constant 0 : index
    %c0_103 = arith.constant 0 : index
    %158 = vector.load %arg3[%157, %c0_102, %c0_103] : memref<9x8x8xbf16, #tpu.memory_space<vmem>>, vector<1x8x8xbf16>
    %159 = vector.shape_cast %158 : vector<1x8x8xbf16> to vector<8x8xbf16>
    %160 = arith.truncf %97 : vector<8x256xf32> to vector<8x256xbf16>
    %cst_104 = arith.constant dense<0.000000e+00> : vector<8x256xf32>
    %161 = tpu.matmul %159, %160, %cst_104 {dimension_numbers = #tpu.dot_dimension_numbers<[1], [0], [0], [1], [0, 0, 1, 1], [], []>} : vector<8x8xbf16>, vector<8x256xbf16>, vector<8x256xf32> -> vector<8x256xf32>
    %162 = arith.addf %154, %161 : vector<8x256xf32>
    %c255_i32_105 = arith.constant 255 : i32
    %163 = tpu.dynamic_rotate %97 by %c255_i32_105 dim 1 : vector<8x256xf32>, i32 -> vector<8x256xf32>
    %c5_106 = arith.constant 5 : index
    %c0_107 = arith.constant 0 : index
    %c0_108 = arith.constant 0 : index
    %164 = vector.load %arg5[%c5_106, %c0_107, %c0_108] : memref<9x1x256xf32, #tpu.memory_space<vmem>>, vector<1x1x256xf32>
    %165 = vector.shape_cast %164 : vector<1x1x256xf32> to vector<1x256xf32>
    %166 = vector.broadcast %165 : vector<1x256xf32> to vector<8x256xf32>
    %167 = arith.mulf %163, %166 : vector<8x256xf32>
    %c9_i32_109 = arith.constant 9 : i32
    %168 = arith.muli %96, %c9_i32_109 : i32
    %c5_i32 = arith.constant 5 : i32
    %169 = arith.addi %168, %c5_i32 : i32
    %170 = arith.index_cast %169 : i32 to index
    %c0_110 = arith.constant 0 : index
    %c0_111 = arith.constant 0 : index
    %171 = vector.load %arg3[%170, %c0_110, %c0_111] : memref<9x8x8xbf16, #tpu.memory_space<vmem>>, vector<1x8x8xbf16>
    %172 = vector.shape_cast %171 : vector<1x8x8xbf16> to vector<8x8xbf16>
    %173 = arith.truncf %167 : vector<8x256xf32> to vector<8x256xbf16>
    %cst_112 = arith.constant dense<0.000000e+00> : vector<8x256xf32>
    %174 = tpu.matmul %172, %173, %cst_112 {dimension_numbers = #tpu.dot_dimension_numbers<[1], [0], [0], [1], [0, 0, 1, 1], [], []>} : vector<8x8xbf16>, vector<8x256xbf16>, vector<8x256xf32> -> vector<8x256xf32>
    %175 = arith.addf %162, %174 : vector<8x256xf32>
    %c241_i32_113 = arith.constant 241 : i32
    %176 = tpu.dynamic_rotate %97 by %c241_i32_113 dim 1 : vector<8x256xf32>, i32 -> vector<8x256xf32>
    %c6_114 = arith.constant 6 : index
    %c0_115 = arith.constant 0 : index
    %c0_116 = arith.constant 0 : index
    %177 = vector.load %arg5[%c6_114, %c0_115, %c0_116] : memref<9x1x256xf32, #tpu.memory_space<vmem>>, vector<1x1x256xf32>
    %178 = vector.shape_cast %177 : vector<1x1x256xf32> to vector<1x256xf32>
    %179 = vector.broadcast %178 : vector<1x256xf32> to vector<8x256xf32>
    %180 = arith.mulf %176, %179 : vector<8x256xf32>
    %c9_i32_117 = arith.constant 9 : i32
    %181 = arith.muli %96, %c9_i32_117 : i32
    %c6_i32 = arith.constant 6 : i32
    %182 = arith.addi %181, %c6_i32 : i32
    %183 = arith.index_cast %182 : i32 to index
    %c0_118 = arith.constant 0 : index
    %c0_119 = arith.constant 0 : index
    %184 = vector.load %arg3[%183, %c0_118, %c0_119] : memref<9x8x8xbf16, #tpu.memory_space<vmem>>, vector<1x8x8xbf16>
    %185 = vector.shape_cast %184 : vector<1x8x8xbf16> to vector<8x8xbf16>
    %186 = arith.truncf %180 : vector<8x256xf32> to vector<8x256xbf16>
    %cst_120 = arith.constant dense<0.000000e+00> : vector<8x256xf32>
    %187 = tpu.matmul %185, %186, %cst_120 {dimension_numbers = #tpu.dot_dimension_numbers<[1], [0], [0], [1], [0, 0, 1, 1], [], []>} : vector<8x8xbf16>, vector<8x256xbf16>, vector<8x256xf32> -> vector<8x256xf32>
    %188 = arith.addf %175, %187 : vector<8x256xf32>
    %c240_i32_121 = arith.constant 240 : i32
    %189 = tpu.dynamic_rotate %97 by %c240_i32_121 dim 1 : vector<8x256xf32>, i32 -> vector<8x256xf32>
    %c7_122 = arith.constant 7 : index
    %c0_123 = arith.constant 0 : index
    %c0_124 = arith.constant 0 : index
    %190 = vector.load %arg5[%c7_122, %c0_123, %c0_124] : memref<9x1x256xf32, #tpu.memory_space<vmem>>, vector<1x1x256xf32>
    %191 = vector.shape_cast %190 : vector<1x1x256xf32> to vector<1x256xf32>
    %192 = vector.broadcast %191 : vector<1x256xf32> to vector<8x256xf32>
    %193 = arith.mulf %189, %192 : vector<8x256xf32>
    %c9_i32_125 = arith.constant 9 : i32
    %194 = arith.muli %96, %c9_i32_125 : i32
    %c7_i32 = arith.constant 7 : i32
    %195 = arith.addi %194, %c7_i32 : i32
    %196 = arith.index_cast %195 : i32 to index
    %c0_126 = arith.constant 0 : index
    %c0_127 = arith.constant 0 : index
    %197 = vector.load %arg3[%196, %c0_126, %c0_127] : memref<9x8x8xbf16, #tpu.memory_space<vmem>>, vector<1x8x8xbf16>
    %198 = vector.shape_cast %197 : vector<1x8x8xbf16> to vector<8x8xbf16>
    %199 = arith.truncf %193 : vector<8x256xf32> to vector<8x256xbf16>
    %cst_128 = arith.constant dense<0.000000e+00> : vector<8x256xf32>
    %200 = tpu.matmul %198, %199, %cst_128 {dimension_numbers = #tpu.dot_dimension_numbers<[1], [0], [0], [1], [0, 0, 1, 1], [], []>} : vector<8x8xbf16>, vector<8x256xbf16>, vector<8x256xf32> -> vector<8x256xf32>
    %201 = arith.addf %188, %200 : vector<8x256xf32>
    %c239_i32_129 = arith.constant 239 : i32
    %202 = tpu.dynamic_rotate %97 by %c239_i32_129 dim 1 : vector<8x256xf32>, i32 -> vector<8x256xf32>
    %c8_130 = arith.constant 8 : index
    %c0_131 = arith.constant 0 : index
    %c0_132 = arith.constant 0 : index
    %203 = vector.load %arg5[%c8_130, %c0_131, %c0_132] : memref<9x1x256xf32, #tpu.memory_space<vmem>>, vector<1x1x256xf32>
    %204 = vector.shape_cast %203 : vector<1x1x256xf32> to vector<1x256xf32>
    %205 = vector.broadcast %204 : vector<1x256xf32> to vector<8x256xf32>
    %206 = arith.mulf %202, %205 : vector<8x256xf32>
    %c9_i32_133 = arith.constant 9 : i32
    %207 = arith.muli %96, %c9_i32_133 : i32
    %c8_i32 = arith.constant 8 : i32
    %208 = arith.addi %207, %c8_i32 : i32
    %209 = arith.index_cast %208 : i32 to index
    %c0_134 = arith.constant 0 : index
    %c0_135 = arith.constant 0 : index
    %210 = vector.load %arg3[%209, %c0_134, %c0_135] : memref<9x8x8xbf16, #tpu.memory_space<vmem>>, vector<1x8x8xbf16>
    %211 = vector.shape_cast %210 : vector<1x8x8xbf16> to vector<8x8xbf16>
    %212 = arith.truncf %206 : vector<8x256xf32> to vector<8x256xbf16>
    %cst_136 = arith.constant dense<0.000000e+00> : vector<8x256xf32>
    %213 = tpu.matmul %211, %212, %cst_136 {dimension_numbers = #tpu.dot_dimension_numbers<[1], [0], [0], [1], [0, 0, 1, 1], [], []>} : vector<8x8xbf16>, vector<8x256xbf16>, vector<8x256xf32> -> vector<8x256xf32>
    %214 = arith.addf %201, %213 : vector<8x256xf32>
    %215 = vector.broadcast %101 : vector<8x1xf32> to vector<8x256xf32>
    %216 = arith.addf %214, %215 : vector<8x256xf32>
    %cst_137 = arith.constant 0.000000e+00 : f32
    %217 = vector.broadcast %cst_137 : f32 to vector<8x256xf32>
    %218 = arith.maximumf %216, %217 : vector<8x256xf32>
    %c0_138 = arith.constant 0 : index
    %c0_139 = arith.constant 0 : index
    %219 = vector.load %arg7[%c0_138, %c0_139] : memref<8x256xf32, #tpu.memory_space<vmem>>, vector<8x256xf32>
    tpu.vector_store %arg7[%c0_138, %c0_139], %218 {strides = array<i32>} : memref<8x256xf32, #tpu.memory_space<vmem>>, vector<8x256xf32>,
    %c1_i32_140 = arith.constant 1 : i32
    %c0_141 = arith.constant 0 : index
    %c0_142 = arith.constant 0 : index
    %220 = vector.load %arg7[%c0_141, %c0_142] : memref<8x256xf32, #tpu.memory_space<vmem>>, vector<8x256xf32>
    %c0_143 = arith.constant 0 : index
    %c0_144 = arith.constant 0 : index
    %c0_145 = arith.constant 0 : index
    %221 = vector.load %arg6[%c0_143, %c0_144, %c0_145] : memref<1x8x256xf32, #tpu.memory_space<vmem>>, vector<1x8x256xf32>
    %222 = vector.shape_cast %221 : vector<1x8x256xf32> to vector<8x256xf32>
    %223 = vector.shape_cast %220 : vector<8x256xf32> to vector<1x8x256xf32>
    tpu.vector_store %arg6[%c0_143, %c0_144, %c0_145], %223 {strides = array<i32>} : memref<1x8x256xf32, #tpu.memory_space<vmem>>, vector<1x8x256xf32>,
    return
  }
  func.func @transform_0(%arg0: i32) -> (i32, i32, i32) {
    %c0_i32 = arith.constant 0 : i32
    %c0_i32_0 = arith.constant 0 : i32
    %c0_i32_1 = arith.constant 0 : i32
    return %arg0, %c0_i32, %c0_i32_0 : i32, i32, i32
  }
  func.func @transform_1(%arg0: i32) -> (i32, i32, i32) {
    %c0_i32 = arith.constant 0 : i32
    %c0_i32_0 = arith.constant 0 : i32
    %c0_i32_1 = arith.constant 0 : i32
    %c0_i32_2 = arith.constant 0 : i32
    return %c0_i32, %c0_i32_0, %c0_i32_1 : i32, i32, i32
  }
  func.func @transform_2(%arg0: i32) -> (i32, i32, i32) {
    %c0_i32 = arith.constant 0 : i32
    %c0_i32_0 = arith.constant 0 : i32
    %c0_i32_1 = arith.constant 0 : i32
    %c0_i32_2 = arith.constant 0 : i32
    return %c0_i32, %c0_i32_0, %c0_i32_1 : i32, i32, i32
  }
  func.func @transform_3(%arg0: i32) -> (i32, i32, i32) {
    %c0_i32 = arith.constant 0 : i32
    %c0_i32_0 = arith.constant 0 : i32
    %c0_i32_1 = arith.constant 0 : i32
    %c0_i32_2 = arith.constant 0 : i32
    return %c0_i32, %c0_i32_0, %c0_i32_1 : i32, i32, i32
  }
  func.func @transform_4(%arg0: i32) -> (i32, i32, i32) {
    %c0_i32 = arith.constant 0 : i32
    %c0_i32_0 = arith.constant 0 : i32
    %c0_i32_1 = arith.constant 0 : i32
    %c0_i32_2 = arith.constant 0 : i32
    return %c0_i32, %c0_i32_0, %c0_i32_1 : i32, i32, i32
  }
  func.func @transform_5(%arg0: i32) -> (i32, i32, i32) {
    %c0_i32 = arith.constant 0 : i32
    %c0_i32_0 = arith.constant 0 : i32
    %c0_i32_1 = arith.constant 0 : i32
    return %arg0, %c0_i32, %c0_i32_0 : i32, i32, i32
  }
}

</mosaic_0001>

<llo_original>
// kernel: decoder_layer_forward.1
$region0: #{decoder_layer_forward.1}
  #allocation0 [shape = 'u32[]', space=smem, size = 0x4, offset = 0x4, fixed_abs, tag = 'smem constant byte address 0x4 - core index']
  #allocation1 [shape = 'u32[72,128]{1,0:T(1,128)}', space=vmem, size = 0x9000, scoped, tag = 'internal scratch']
  #allocation2 [shape = 'f32[8,256]{1,0:T(8,128)}', space=vmem, size = 0x2000, scoped, tag = 'scratch operand']
  %s0 = inlined_call_operand.vmem [shape: f32[2,8,256], index: 0, kind: input, shape index: {}]
  %s1 = inlined_call_operand.vmem [shape: bf16[9,8,8], index: 1, kind: input, shape index: {}]
  %s2 = inlined_call_operand.vmem [shape: bf16[9,8,8], index: 2, kind: input, shape index: {}]
  %s3 = inlined_call_operand.vmem [shape: f32[2,8,1], index: 3, kind: input, shape index: {}]
  %s4 = inlined_call_operand.vmem [shape: f32[9,1,256], index: 4, kind: input, shape index: {}]
  %s5 = inlined_call_operand.vmem [shape: f32[2,8,256], index: 5, kind: output, shape index: {}]
  %s6 = sld [smem:[#allocation0]]
  $region53: #{decoder_layer_forward.1} parent=0
    _
  %s8 = ssub.s32 1, %s6
  %s9 = scalar_select 0, %s8, %s6
  loop: start=0, step=1, limit=4
  $region2: #{decoder_layer_forward.1} parent=0 // loop_pre_header
    _
  $region3: #{decoder_layer_forward.1} parent=0 // loop_header
    %s11 = sphi 0, %s15
    %p12 = scmp.ge.s32.totalorder %s11, 4
    %s21 = sphi 0, %s23
    %s24 = sphi 0, %s21
    %s25 = sphi 0, %s24
    %s41 = sphi 0, %s25
    %s45 = sphi 0, %s45
    %s47 = sphi 0, %s45
    %s48 = sphi 0, %s47
    %s62 = sphi 0, %s48
    %s66 = sphi 0, %s66
    %s68 = sphi 0, %s66
    %s69 = sphi 0, %s68
    %s83 = sphi 0, %s69
    %s87 = sphi 0, %s87
    %s89 = sphi 0, %s87
    %s90 = sphi 0, %s89
    %s104 = sphi 0, %s90
    %s108 = sphi 0, %s108
    %s110 = sphi 0, %s108
    %s111 = sphi 0, %s110
    %s125 = sphi 0, %s111
    %s131 = sphi 0, %s133
    %s134 = sphi 0, %s131
    %s135 = sphi 0, %s134
    %s151 = sphi 0, %s135
  $region4: #{decoder_layer_forward.1} parent=0 // loop_header_branch
    %14 = sbr.rel (%p12) target = $region8
  $region5: #{decoder_layer_forward.1} parent=0 // loop_body
    %s16 = ssub.s32 %s11, 1
    %s17 = ssub.s32 %s11, 2
    %s18 = sadd.s32 %s11, 1
    %s19 = ssub.s32 %s11, %s18
    %p20 = scmp.eq.s32.totalorder %s19, 0
    %s22 = sadd.s32 %s21, 1
    %s23 = scalar_select %p20, %s21, %s22
    %p26 = pneg %p20
    %p27 = scmp.eq.s32.totalorder %s11, 1
    %p28 = por %p26, %p27
    %p29 = scmp.ne.s32.totalorder %s21, %s24
    %p30 = scmp.eq.s32.totalorder %s11, 0
    %p31 = por %p29, %p30
    %p32 = scmp.ne.s32.totalorder %s21, %s24
    %p33 = scmp.eq.s32.totalorder %s16, 1
    %p34 = por %p32, %p33
    %p35 = scmp.ne.s32.totalorder %s24, %s25
    %p36 = scmp.eq.s32.totalorder %s16, 0
    %p37 = por %p35, %p36
    %p38 = scmp.ne.s32.totalorder %s24, %s25
    %p39 = scmp.eq.s32.totalorder %s17, 1
    %p40 = por %p38, %p39
    %p42 = scmp.ne.s32.totalorder %s25, %s41
    %p43 = scmp.eq.s32.totalorder %s17, 0
    %p44 = por %p42, %p43
    %s46 = sadd.s32 %s45, 1
    %p49 = scmp.eq.s32.totalorder %s11, 1
    %p50 = scmp.ne.s32.totalorder %s45, %s47
    %p51 = scmp.eq.s32.totalorder %s11, 0
    %p52 = por %p50, %p51
    %p53 = scmp.ne.s32.totalorder %s45, %s47
    %p54 = scmp.eq.s32.totalorder %s16, 1
    %p55 = por %p53, %p54
    %p56 = scmp.ne.s32.totalorder %s47, %s48
    %p57 = scmp.eq.s32.totalorder %s16, 0
    %p58 = por %p56, %p57
    %p59 = scmp.ne.s32.totalorder %s47, %s48
    %p60 = scmp.eq.s32.totalorder %s17, 1
    %p61 = por %p59, %p60
    %p63 = scmp.ne.s32.totalorder %s48, %s62
    %p64 = scmp.eq.s32.totalorder %s17, 0
    %p65 = por %p63, %p64
    %s67 = sadd.s32 %s66, 1
    %p70 = scmp.eq.s32.totalorder %s11, 1
    %p71 = scmp.ne.s32.totalorder %s66, %s68
    %p72 = scmp.eq.s32.totalorder %s11, 0
    %p73 = por %p71, %p72
    %p74 = scmp.ne.s32.totalorder %s66, %s68
    %p75 = scmp.eq.s32.totalorder %s16, 1
    %p76 = por %p74, %p75
    %p77 = scmp.ne.s32.totalorder %s68, %s69
    %p78 = scmp.eq.s32.totalorder %s16, 0
    %p79 = por %p77, %p78
    %p80 = scmp.ne.s32.totalorder %s68, %s69
    %p81 = scmp.eq.s32.totalorder %s17, 1
    %p82 = por %p80, %p81
    %p84 = scmp.ne.s32.totalorder %s69, %s83
    %p85 = scmp.eq.s32.totalorder %s17, 0
    %p86 = por %p84, %p85
    %s88 = sadd.s32 %s87, 1
    %p91 = scmp.eq.s32.totalorder %s11, 1
    %p92 = scmp.ne.s32.totalorder %s87, %s89
    %p93 = scmp.eq.s32.totalorder %s11, 0
    %p94 = por %p92, %p93
    %p95 = scmp.ne.s32.totalorder %s87, %s89
    %p96 = scmp.eq.s32.totalorder %s16, 1
    %p97 = por %p95, %p96
    %p98 = scmp.ne.s32.totalorder %s89, %s90
    %p99 = scmp.eq.s32.totalorder %s16, 0
    %p100 = por %p98, %p99
    %p101 = scmp.ne.s32.totalorder %s89, %s90
    %p102 = scmp.eq.s32.totalorder %s17, 1
    %p103 = por %p101, %p102
    %p105 = scmp.ne.s32.totalorder %s90, %s104
    %p106 = scmp.eq.s32.totalorder %s17, 0
    %p107 = por %p105, %p106
    %s109 = sadd.s32 %s108, 1
    %p112 = scmp.eq.s32.totalorder %s11, 1
    %p113 = scmp.ne.s32.totalorder %s108, %s110
    %p114 = scmp.eq.s32.totalorder %s11, 0
    %p115 = por %p113, %p114
    %p116 = scmp.ne.s32.totalorder %s108, %s110
    %p117 = scmp.eq.s32.totalorder %s16, 1
    %p118 = por %p116, %p117
    %p119 = scmp.ne.s32.totalorder %s110, %s111
    %p120 = scmp.eq.s32.totalorder %s16, 0
    %p121 = por %p119, %p120
    %p122 = scmp.ne.s32.totalorder %s110, %s111
    %p123 = scmp.eq.s32.totalorder %s17, 1
    %p124 = por %p122, %p123
    %p126 = scmp.ne.s32.totalorder %s111, %s125
    %p127 = scmp.eq.s32.totalorder %s17, 0
    %p128 = por %p126, %p127
    %s129 = ssub.s32 %s11, %s18
    %p130 = scmp.eq.s32.totalorder %s129, 0
    %s132 = sadd.s32 %s131, 1
    %s133 = scalar_select %p130, %s131, %s132
    %p136 = pneg %p130
    %p137 = scmp.eq.s32.totalorder %s11, 1
    %p138 = por %p136, %p137
    %p139 = scmp.ne.s32.totalorder %s131, %s134
    %p140 = scmp.eq.s32.totalorder %s11, 0
    %p141 = por %p139, %p140
    %p142 = scmp.ne.s32.totalorder %s131, %s134
    %p143 = scmp.eq.s32.totalorder %s16, 1
    %p144 = por %p142, %p143
    %p145 = scmp.ne.s32.totalorder %s134, %s135
    %p146 = scmp.eq.s32.totalorder %s16, 0
    %p147 = por %p145, %p146
    %p148 = scmp.ne.s32.totalorder %s134, %s135
    %p149 = scmp.eq.s32.totalorder %s17, 1
    %p150 = por %p148, %p149
    %p152 = scmp.ne.s32.totalorder %s135, %s151
    %p153 = scmp.eq.s32.totalorder %s17, 0
    %p154 = por %p152, %p153
    %p155 = scmp.le.s32.totalorder 1, %s11
    %p156 = scmp.lt.s32.totalorder %s11, 3
    %p157 = pnand %p155, %p156
    %p158 = pneg %p157
    // Predicated region
    $region9: #{decoder_layer_forward.1} parent=5 // pred_check
      _
    $region10: #{decoder_layer_forward.1} parent=5 // pred_check_branch
      %160 = sbr.rel (%p157) target = $region12
    $region11: #{decoder_layer_forward.1} parent=5 // pred_region
      %s161 = ssub.s32 %s11, 1
      // Predicated region
      $region13: #{decoder_layer_forward.1} parent=11 // pred_check
        %p162 = pneg %p58
      $region14: #{decoder_layer_forward.1} parent=11 // pred_check_branch
        %164 = sbr.rel (%p162) target = $region16
      $region15: #{decoder_layer_forward.1} parent=11 // pred_region
        _
      $region16: #{decoder_layer_forward.1} parent=11 // pred_fallthru
        _
      // Predicated region
      $region17: #{decoder_layer_forward.1} parent=11 // pred_check
        %p165 = pneg %p79
      $region18: #{decoder_layer_forward.1} parent=11 // pred_check_branch
        %167 = sbr.rel (%p165) target = $region20
      $region19: #{decoder_layer_forward.1} parent=11 // pred_region
        _
      $region20: #{decoder_layer_forward.1} parent=11 // pred_fallthru
        _
      // Predicated region
      $region21: #{decoder_layer_forward.1} parent=11 // pred_check
        %p168 = pneg %p100
      $region22: #{decoder_layer_forward.1} parent=11 // pred_check_branch
        %170 = sbr.rel (%p168) target = $region24
      $region23: #{decoder_layer_forward.1} parent=11 // pred_region
        _
      $region24: #{decoder_layer_forward.1} parent=11 // pred_fallthru
        _
      // Predicated region
      $region25: #{decoder_layer_forward.1} parent=11 // pred_check
        %p171 = pneg %p121
      $region26: #{decoder_layer_forward.1} parent=11 // pred_check_branch
        %173 = sbr.rel (%p171) target = $region28
      $region27: #{decoder_layer_forward.1} parent=11 // pred_region
        _
      $region28: #{decoder_layer_forward.1} parent=11 // pred_fallthru
        _
    $region12: #{decoder_layer_forward.1} parent=5 // pred_fallthru
      _
    %p174 = scmp.lt.s32.totalorder %s11, 2
    // Predicated region
    $region29: #{decoder_layer_forward.1} parent=5 // pred_check
      %p175 = pneg %p174
    $region30: #{decoder_layer_forward.1} parent=5 // pred_check_branch
      %177 = sbr.rel (%p175) target = $region32
    $region31: #{decoder_layer_forward.1} parent=5 // pred_region
      // Predicated region
      $region33: #{decoder_layer_forward.1} parent=31 // pred_check
        %p178 = pneg %p31
      $region34: #{decoder_layer_forward.1} parent=31 // pred_check_branch
        %180 = sbr.rel (%p178) target = $region36
      $region35: #{decoder_layer_forward.1} parent=31 // pred_region
        %p181 = scmp.lt.s32.totalorder %s11, 1
        %s182 = scalar_select %p181, %s11, 1
        %s183 = smul.addr %s182, 2
        %s184 = smul.addr %s183, 8
        %s185 = scalar_lea.vmem %s0, %s184
      $region36: #{decoder_layer_forward.1} parent=31 // pred_fallthru
        _
    $region32: #{decoder_layer_forward.1} parent=5 // pred_fallthru
      _
    %p186 = scmp.le.s32.totalorder 1, %s11
    %p187 = scmp.lt.s32.totalorder %s11, 3
    %p188 = pnand %p186, %p187
    %p189 = pneg %p188
    // Predicated region
    $region37: #{decoder_layer_forward.1} parent=5 // pred_check
      _
    $region38: #{decoder_layer_forward.1} parent=5 // pred_check_branch
      %191 = sbr.rel (%p188) target = $region40
    $region39: #{decoder_layer_forward.1} parent=5 // pred_region
      %s192 = ssub.s32 %s11, 1
      %p193 = scmp.lt.s32.totalorder %s16, 1
      %s194 = scalar_select %p193, %s16, 1
      %s195 = smul.addr %s194, 2
      %s196 = smul.addr %s195, 8
      %s197 = scalar_lea.vmem %s0, %s196
      %p198 = pneg %p37
      %p199 = pneg %p34
      %p200 = pneg %p58
      %p201 = pneg %p55
      %p202 = pneg %p79
      %p203 = pneg %p76
      %p204 = pneg %p100
      %p205 = pneg %p97
      %p206 = pneg %p121
      %p207 = pneg %p118
      %p208 = pneg %p147
      %p209 = pneg %p144
      %p210 = scmp.lt.s32.totalorder %s16, 1
      %s211 = scalar_select %p210, %s16, 1
      %s212 = smul.addr %s211, 2
      %s213 = smul.addr %s212, 8
      %s214 = scalar_lea.vmem %s5, %s213
      %p215 = scmp.lt.s32.totalorder %s16, 1
      %s216 = scalar_select %p215, %s16, 1
      %s217 = smul.addr %s216, 2
      %s218 = smul.addr %s217, 8
      %s219 = scalar_lea.vmem %s0, %s218
      %p220 = scmp.lt.s32.totalorder %s16, 1
      %s221 = scalar_select %p220, %s16, 1
      %s222 = smul.addr %s221, 2
      %s223 = smul.addr %s222, 8
      %s224 = scalar_lea.vmem %s5, %s223
      %v226 = vld [vmem:[%s219] sm:$0xff]
      %v227 = vld [vmem:[%s219 + $0x8] sm:$0xff]
      %v228 = vld [vmem:[%s3] sm:$0xff]
      %229 = vrot.lane.b32.xlu0 %v226, 17
      %v230 = vpop.permute.xlu0 %229
      %231 = vrot.lane.b32.xlu0 %v227, 17
      %v232 = vpop.permute.xlu0 %231
      %v233 = vlaneseq
      %v234 = vand.u32 %v233, 127
      %vm235 = vcmp.lt.s32.totalorder %v234, 17
      %v236 = vsel %vm235, %v230, %v232
      %v237 = vsel %vm235, %v232, %v230
      %v238 = vld [vmem:[%s4] sm:$0x3]
      %v240 = vperm.slane %v238, 0
      %v241 = vperm.slane %v238, 1
      %v244 = vmul.f32 %v237, %v240
      %v245 = vmul.f32 %v236, %v241
      %v246 = vld [vmem:[%s1] sm:$0xf]
      %v247 = vpack.c.bf16 %v244, %v244
      %v248 = vpack.c.bf16 %v245, %v245
      %249 = vrot.lane.b32.xlu0 %v226, 16
      %v250 = vpop.permute.xlu0 %249
      %251 = vrot.lane.b32.xlu0 %v227, 16
      %v252 = vpop.permute.xlu0 %251
      %vm253 = vcmp.lt.s32.totalorder %v234, 16
      %v254 = vsel %vm253, %v250, %v252
      %v255 = vsel %vm253, %v252, %v250
      %s256 = scalar_lea.vmem %s4, 2
      %v257 = vld [vmem:[%s256] sm:$0x3]
      %v259 = vperm.slane %v257, 0
      %v260 = vperm.slane %v257, 1
      %v263 = vmul.f32 %v255, %v259
      %v264 = vmul.f32 %v254, %v260
      %s265 = scalar_lea.vmem %s1, 4
      %v266 = vld [vmem:[%s265] sm:$0xf]
      %v267 = vpack.c.bf16 %v263, %v263
      %v268 = vpack.c.bf16 %v264, %v264
      %vm269 = vcmask 64512
      %v271 = vsel %vm269, %v266, 0
      %vm273 = vcmask 1043456
      %v275 = vsel %vm273, %v267, 0
      %v278 = vsel %vm273, %v268, 0
      %280 = vmatpush.bf16.msra.mxu0 0
      %281 = vmatpush.bf16.msra.mxu0 0
      %282 = vmatpush.bf16.msra.mxu0 0
      %283 = vmatpush.bf16.msra.mxu0 0
      %284 = vmatpush.bf16.msra.mxu0 0
      %285 = vmatpush.bf16.msra.mxu0 0
      %286 = vmatpush.bf16.msra.mxu0 0
      %287 = vmatpush.bf16.msra.mxu0 %v275
      %288 = vmatmul.bf16.gmra.mxu0 %v271
      %v289 = vpop.f32.mrf.mxu0
      %v290 = vadd.f32 0.0, %v289
      %v291 = vpop.f32.mrf.mxu0
      %292 = vdwg.mxu0
      %293 = vmatpush.bf16.msra.mxu0 0
      %294 = vmatpush.bf16.msra.mxu0 0
      %295 = vmatpush.bf16.msra.mxu0 0
      %296 = vmatpush.bf16.msra.mxu0 0
      %297 = vmatpush.bf16.msra.mxu0 0
      %298 = vmatpush.bf16.msra.mxu0 0
      %299 = vmatpush.bf16.msra.mxu0 0
      %300 = vmatpush.bf16.msra.mxu0 %v278
      %301 = vmatmul.bf16.gmra.mxu0 %v271
      %v302 = vpop.f32.mrf.mxu0
      %v303 = vadd.f32 0.0, %v302
      %v304 = vpop.f32.mrf.mxu0
      %305 = vdwg.mxu0
      %v307 = vsel %vm269, %v246, 0
      %v310 = vsel %vm273, %v247, 0
      %v313 = vsel %vm273, %v248, 0
      %315 = vmatpush.bf16.msra.mxu0 0
      %316 = vmatpush.bf16.msra.mxu0 0
      %317 = vmatpush.bf16.msra.mxu0 0
      %318 = vmatpush.bf16.msra.mxu0 0
      %319 = vmatpush.bf16.msra.mxu0 0
      %320 = vmatpush.bf16.msra.mxu0 0
      %321 = vmatpush.bf16.msra.mxu0 0
      %322 = vmatpush.bf16.msra.mxu0 %v310
      %323 = vmatmul.bf16.gmra.mxu0 %v307
      %v324 = vpop.f32.mrf.mxu0
      %v325 = vadd.f32 %v290, %v324
      %v326 = vpop.f32.mrf.mxu0
      %327 = vdwg.mxu0
      %328 = vmatpush.bf16.msra.mxu0 0
      %329 = vmatpush.bf16.msra.mxu0 0
      %330 = vmatpush.bf16.msra.mxu0 0
      %331 = vmatpush.bf16.msra.mxu0 0
      %332 = vmatpush.bf16.msra.mxu0 0
      %333 = vmatpush.bf16.msra.mxu0 0
      %334 = vmatpush.bf16.msra.mxu0 0
      %335 = vmatpush.bf16.msra.mxu0 %v313
      %336 = vmatmul.bf16.gmra.mxu0 %v307
      %v337 = vpop.f32.mrf.mxu0
      %v338 = vadd.f32 %v303, %v337
      %v339 = vpop.f32.mrf.mxu0
      %340 = vdwg.mxu0
      %341 = vrot.lane.b32.xlu0 %v226, 15
      %v342 = vpop.permute.xlu0 %341
      %343 = vrot.lane.b32.xlu0 %v227, 15
      %v344 = vpop.permute.xlu0 %343
      %vm345 = vcmp.lt.s32.totalorder %v234, 15
      %v346 = vsel %vm345, %v342, %v344
      %v347 = vsel %vm345, %v344, %v342
      %s348 = scalar_lea.vmem %s4, 4
      %v349 = vld [vmem:[%s348] sm:$0x3]
      %v351 = vperm.slane %v349, 0
      %v352 = vperm.slane %v349, 1
      %v355 = vmul.f32 %v347, %v351
      %v356 = vmul.f32 %v346, %v352
      %s357 = scalar_lea.vmem %s1, 8
      %v358 = vld [vmem:[%s357] sm:$0xf]
      %v359 = vpack.c.bf16 %v355, %v355
      %v360 = vpack.c.bf16 %v356, %v356
      %v362 = vsel %vm269, %v358, 0
      %v365 = vsel %vm273, %v359, 0
      %v368 = vsel %vm273, %v360, 0
      %370 = vmatpush.bf16.msra.mxu0 0
      %371 = vmatpush.bf16.msra.mxu0 0
      %372 = vmatpush.bf16.msra.mxu0 0
      %373 = vmatpush.bf16.msra.mxu0 0
      %374 = vmatpush.bf16.msra.mxu0 0
      %375 = vmatpush.bf16.msra.mxu0 0
      %376 = vmatpush.bf16.msra.mxu0 0
      %377 = vmatpush.bf16.msra.mxu0 %v365
      %378 = vmatmul.bf16.gmra.mxu0 %v362
      %v379 = vpop.f32.mrf.mxu0
      %v380 = vadd.f32 0.0, %v379
      %v381 = vpop.f32.mrf.mxu0
      %382 = vdwg.mxu0
      %383 = vmatpush.bf16.msra.mxu0 0
      %384 = vmatpush.bf16.msra.mxu0 0
      %385 = vmatpush.bf16.msra.mxu0 0
      %386 = vmatpush.bf16.msra.mxu0 0
      %387 = vmatpush.bf16.msra.mxu0 0
      %388 = vmatpush.bf16.msra.mxu0 0
      %389 = vmatpush.bf16.msra.mxu0 0
      %390 = vmatpush.bf16.msra.mxu0 %v368
      %391 = vmatmul.bf16.gmra.mxu0 %v362
      %v392 = vpop.f32.mrf.mxu0
      %v393 = vadd.f32 0.0, %v392
      %v394 = vpop.f32.mrf.mxu0
      %395 = vdwg.mxu0
      %v396 = vadd.f32 %v325, %v380
      %v397 = vadd.f32 %v338, %v393
      %398 = vrot.lane.b32.xlu0 %v226, 1
      %v399 = vpop.permute.xlu0 %398
      %400 = vrot.lane.b32.xlu0 %v227, 1
      %v401 = vpop.permute.xlu0 %400
      %vm402 = vcmp.lt.s32.totalorder %v234, 1
      %v403 = vsel %vm402, %v399, %v401
      %v404 = vsel %vm402, %v401, %v399
      %s405 = scalar_lea.vmem %s4, 6
      %v406 = vld [vmem:[%s405] sm:$0x3]
      %v408 = vperm.slane %v406, 0
      %v409 = vperm.slane %v406, 1
      %v412 = vmul.f32 %v404, %v408
      %v413 = vmul.f32 %v403, %v409
      %s414 = scalar_lea.vmem %s1, 12
      %v415 = vld [vmem:[%s414] sm:$0xf]
      %v416 = vpack.c.bf16 %v412, %v412
      %v417 = vpack.c.bf16 %v413, %v413
      %v419 = vsel %vm269, %v415, 0
      %v422 = vsel %vm273, %v416, 0
      %v425 = vsel %vm273, %v417, 0
      %427 = vmatpush.bf16.msra.mxu0 0
      %428 = vmatpush.bf16.msra.mxu0 0
      %429 = vmatpush.bf16.msra.mxu0 0
      %430 = vmatpush.bf16.msra.mxu0 0
      %431 = vmatpush.bf16.msra.mxu0 0
      %432 = vmatpush.bf16.msra.mxu0 0
      %433 = vmatpush.bf16.msra.mxu0 0
      %434 = vmatpush.bf16.msra.mxu0 %v422
      %435 = vmatmul.bf16.gmra.mxu0 %v419
      %v436 = vpop.f32.mrf.mxu0
      %v437 = vadd.f32 0.0, %v436
      %v438 = vpop.f32.mrf.mxu0
      %439 = vdwg.mxu0
      %440 = vmatpush.bf16.msra.mxu0 0
      %441 = vmatpush.bf16.msra.mxu0 0
      %442 = vmatpush.bf16.msra.mxu0 0
      %443 = vmatpush.bf16.msra.mxu0 0
      %444 = vmatpush.bf16.msra.mxu0 0
      %445 = vmatpush.bf16.msra.mxu0 0
      %446 = vmatpush.bf16.msra.mxu0 0
      %447 = vmatpush.bf16.msra.mxu0 %v425
      %448 = vmatmul.bf16.gmra.mxu0 %v419
      %v449 = vpop.f32.mrf.mxu0
      %v450 = vadd.f32 0.0, %v449
      %v451 = vpop.f32.mrf.mxu0
      %452 = vdwg.mxu0
      %v453 = vadd.f32 %v396, %v437
      %v454 = vadd.f32 %v397, %v450
      %s455 = scalar_lea.vmem %s1, 16
      %v456 = vld [vmem:[%s455] sm:$0xf]
      %v457 = vpack.c.bf16 %v226, %v226
      %v458 = vpack.c.bf16 %v227, %v227
      %v460 = vsel %vm269, %v456, 0
      %v463 = vsel %vm273, %v457, 0
      %v466 = vsel %vm273, %v458, 0
      %468 = vmatpush.bf16.msra.mxu0 0
      %469 = vmatpush.bf16.msra.mxu0 0
      %470 = vmatpush.bf16.msra.mxu0 0
      %471 = vmatpush.bf16.msra.mxu0 0
      %472 = vmatpush.bf16.msra.mxu0 0
      %473 = vmatpush.bf16.msra.mxu0 0
      %474 = vmatpush.bf16.msra.mxu0 0
      %475 = vmatpush.bf16.msra.mxu0 %v463
      %476 = vmatmul.bf16.gmra.mxu0 %v460
      %v477 = vpop.f32.mrf.mxu0
      %v478 = vadd.f32 0.0, %v477
      %v479 = vpop.f32.mrf.mxu0
      %480 = vdwg.mxu0
      %481 = vmatpush.bf16.msra.mxu0 0
      %482 = vmatpush.bf16.msra.mxu0 0
      %483 = vmatpush.bf16.msra.mxu0 0
      %484 = vmatpush.bf16.msra.mxu0 0
      %485 = vmatpush.bf16.msra.mxu0 0
      %486 = vmatpush.bf16.msra.mxu0 0
      %487 = vmatpush.bf16.msra.mxu0 0
      %488 = vmatpush.bf16.msra.mxu0 %v466
      %489 = vmatmul.bf16.gmra.mxu0 %v460
      %v490 = vpop.f32.mrf.mxu0
      %v491 = vadd.f32 0.0, %v490
      %v492 = vpop.f32.mrf.mxu0
      %493 = vdwg.mxu0
      %v494 = vadd.f32 %v453, %v478
      %v495 = vadd.f32 %v454, %v491
      %496 = vrot.lane.b32.xlu0 %v226, 127
      %v497 = vpop.permute.xlu0 %496
      %498 = vrot.lane.b32.xlu0 %v227, 127
      %v499 = vpop.permute.xlu0 %498
      %vm500 = vcmp.lt.s32.totalorder %v234, 127
      %v501 = vsel %vm500, %v497, %v499
      %v502 = vsel %vm500, %v499, %v497
      %s503 = scalar_lea.vmem %s4, 10
      %v504 = vld [vmem:[%s503] sm:$0x3]
      %v506 = vperm.slane %v504, 0
      %v507 = vperm.slane %v504, 1
      %v510 = vmul.f32 %v501, %v506
      %v511 = vmul.f32 %v502, %v507
      %s512 = scalar_lea.vmem %s1, 20
      %v513 = vld [vmem:[%s512] sm:$0xf]
      %v514 = vpack.c.bf16 %v510, %v510
      %v515 = vpack.c.bf16 %v511, %v511
      %v517 = vsel %vm269, %v513, 0
      %v520 = vsel %vm273, %v514, 0
      %v523 = vsel %vm273, %v515, 0
      %525 = vmatpush.bf16.msra.mxu0 0
      %526 = vmatpush.bf16.msra.mxu0 0
      %527 = vmatpush.bf16.msra.mxu0 0
      %528 = vmatpush.bf16.msra.mxu0 0
      %529 = vmatpush.bf16.msra.mxu0 0
      %530 = vmatpush.bf16.msra.mxu0 0
      %531 = vmatpush.bf16.msra.mxu0 0
      %532 = vmatpush.bf16.msra.mxu0 %v520
      %533 = vmatmul.bf16.gmra.mxu0 %v517
      %v534 = vpop.f32.mrf.mxu0
      %v535 = vadd.f32 0.0, %v534
      %v536 = vpop.f32.mrf.mxu0
      %537 = vdwg.mxu0
      %538 = vmatpush.bf16.msra.mxu0 0
      %539 = vmatpush.bf16.msra.mxu0 0
      %540 = vmatpush.bf16.msra.mxu0 0
      %541 = vmatpush.bf16.msra.mxu0 0
      %542 = vmatpush.bf16.msra.mxu0 0
      %543 = vmatpush.bf16.msra.mxu0 0
      %544 = vmatpush.bf16.msra.mxu0 0
      %545 = vmatpush.bf16.msra.mxu0 %v523
      %546 = vmatmul.bf16.gmra.mxu0 %v517
      %v547 = vpop.f32.mrf.mxu0
      %v548 = vadd.f32 0.0, %v547
      %v549 = vpop.f32.mrf.mxu0
      %550 = vdwg.mxu0
      %v551 = vadd.f32 %v494, %v535
      %v552 = vadd.f32 %v495, %v548
      %553 = vrot.lane.b32.xlu0 %v226, 113
      %v554 = vpop.permute.xlu0 %553
      %555 = vrot.lane.b32.xlu0 %v227, 113
      %v556 = vpop.permute.xlu0 %555
      %vm557 = vcmp.lt.s32.totalorder %v234, 113
      %v558 = vsel %vm557, %v554, %v556
      %v559 = vsel %vm557, %v556, %v554
      %s560 = scalar_lea.vmem %s4, 12
      %v561 = vld [vmem:[%s560] sm:$0x3]
      %v563 = vperm.slane %v561, 0
      %v564 = vperm.slane %v561, 1
      %v567 = vmul.f32 %v558, %v563
      %v568 = vmul.f32 %v559, %v564
      %s569 = scalar_lea.vmem %s1, 24
      %v570 = vld [vmem:[%s569] sm:$0xf]
      %v571 = vpack.c.bf16 %v567, %v567
      %v572 = vpack.c.bf16 %v568, %v568
      %v574 = vsel %vm269, %v570, 0
      %v577 = vsel %vm273, %v571, 0
      %v580 = vsel %vm273, %v572, 0
      %582 = vmatpush.bf16.msra.mxu0 0
      %583 = vmatpush.bf16.msra.mxu0 0
      %584 = vmatpush.bf16.msra.mxu0 0
      %585 = vmatpush.bf16.msra.mxu0 0
      %586 = vmatpush.bf16.msra.mxu0 0
      %587 = vmatpush.bf16.msra.mxu0 0
      %588 = vmatpush.bf16.msra.mxu0 0
      %589 = vmatpush.bf16.msra.mxu0 %v577
      %590 = vmatmul.bf16.gmra.mxu0 %v574
      %v591 = vpop.f32.mrf.mxu0
      %v592 = vadd.f32 0.0, %v591
      %v593 = vpop.f32.mrf.mxu0
      %594 = vdwg.mxu0
      %595 = vmatpush.bf16.msra.mxu0 0
      %596 = vmatpush.bf16.msra.mxu0 0
      %597 = vmatpush.bf16.msra.mxu0 0
      %598 = vmatpush.bf16.msra.mxu0 0
      %599 = vmatpush.bf16.msra.mxu0 0
      %600 = vmatpush.bf16.msra.mxu0 0
      %601 = vmatpush.bf16.msra.mxu0 0
      %602 = vmatpush.bf16.msra.mxu0 %v580
      %603 = vmatmul.bf16.gmra.mxu0 %v574
      %v604 = vpop.f32.mrf.mxu0
      %v605 = vadd.f32 0.0, %v604
      %v606 = vpop.f32.mrf.mxu0
      %607 = vdwg.mxu0
      %v608 = vadd.f32 %v551, %v592
      %v609 = vadd.f32 %v552, %v605
      %610 = vrot.lane.b32.xlu0 %v226, 112
      %v611 = vpop.permute.xlu0 %610
      %612 = vrot.lane.b32.xlu0 %v227, 112
      %v613 = vpop.permute.xlu0 %612
      %vm614 = vcmp.lt.s32.totalorder %v234, 112
      %v615 = vsel %vm614, %v611, %v613
      %v616 = vsel %vm614, %v613, %v611
      %s617 = scalar_lea.vmem %s4, 14
      %v618 = vld [vmem:[%s617] sm:$0x3]
      %v620 = vperm.slane %v618, 0
      %v621 = vperm.slane %v618, 1
      %v624 = vmul.f32 %v615, %v620
      %v625 = vmul.f32 %v616, %v621
      %s626 = scalar_lea.vmem %s1, 28
      %v627 = vld [vmem:[%s626] sm:$0xf]
      %v628 = vpack.c.bf16 %v624, %v624
      %v629 = vpack.c.bf16 %v625, %v625
      %v631 = vsel %vm269, %v627, 0
      %v634 = vsel %vm273, %v628, 0
      %v637 = vsel %vm273, %v629, 0
      %639 = vmatpush.bf16.msra.mxu0 0
      %640 = vmatpush.bf16.msra.mxu0 0
      %641 = vmatpush.bf16.msra.mxu0 0
      %642 = vmatpush.bf16.msra.mxu0 0
      %643 = vmatpush.bf16.msra.mxu0 0
      %644 = vmatpush.bf16.msra.mxu0 0
      %645 = vmatpush.bf16.msra.mxu0 0
      %646 = vmatpush.bf16.msra.mxu0 %v634
      %647 = vmatmul.bf16.gmra.mxu0 %v631
      %v648 = vpop.f32.mrf.mxu0
      %v649 = vadd.f32 0.0, %v648
      %v650 = vpop.f32.mrf.mxu0
      %651 = vdwg.mxu0
      %652 = vmatpush.bf16.msra.mxu0 0
      %653 = vmatpush.bf16.msra.mxu0 0
      %654 = vmatpush.bf16.msra.mxu0 0
      %655 = vmatpush.bf16.msra.mxu0 0
      %656 = vmatpush.bf16.msra.mxu0 0
      %657 = vmatpush.bf16.msra.mxu0 0
      %658 = vmatpush.bf16.msra.mxu0 0
      %659 = vmatpush.bf16.msra.mxu0 %v637
      %660 = vmatmul.bf16.gmra.mxu0 %v631
      %v661 = vpop.f32.mrf.mxu0
      %v662 = vadd.f32 0.0, %v661
      %v663 = vpop.f32.mrf.mxu0
      %664 = vdwg.mxu0
      %v665 = vadd.f32 %v608, %v649
      %v666 = vadd.f32 %v609, %v662
      %667 = vrot.lane.b32.xlu0 %v226, 111
      %v668 = vpop.permute.xlu0 %667
      %669 = vrot.lane.b32.xlu0 %v227, 111
      %v670 = vpop.permute.xlu0 %669
      %vm671 = vcmp.lt.s32.totalorder %v234, 111
      %v672 = vsel %vm671, %v668, %v670
      %v673 = vsel %vm671, %v670, %v668
      %s674 = scalar_lea.vmem %s4, 16
      %v675 = vld [vmem:[%s674] sm:$0x3]
      %v677 = vperm.slane %v675, 0
      %v678 = vperm.slane %v675, 1
      %v681 = vmul.f32 %v672, %v677
      %v682 = vmul.f32 %v673, %v678
      %s683 = scalar_lea.vmem %s1, 32
      %v684 = vld [vmem:[%s683] sm:$0xf]
      %v685 = vpack.c.bf16 %v681, %v681
      %v686 = vpack.c.bf16 %v682, %v682
      %v688 = vsel %vm269, %v684, 0
      %v691 = vsel %vm273, %v685, 0
      %v694 = vsel %vm273, %v686, 0
      %696 = vmatpush.bf16.msra.mxu0 0
      %697 = vmatpush.bf16.msra.mxu0 0
      %698 = vmatpush.bf16.msra.mxu0 0
      %699 = vmatpush.bf16.msra.mxu0 0
      %700 = vmatpush.bf16.msra.mxu0 0
      %701 = vmatpush.bf16.msra.mxu0 0
      %702 = vmatpush.bf16.msra.mxu0 0
      %703 = vmatpush.bf16.msra.mxu0 %v691
      %704 = vmatmul.bf16.gmra.mxu0 %v688
      %v705 = vpop.f32.mrf.mxu0
      %v706 = vadd.f32 0.0, %v705
      %v707 = vpop.f32.mrf.mxu0
      %708 = vdwg.mxu0
      %709 = vmatpush.bf16.msra.mxu0 0
      %710 = vmatpush.bf16.msra.mxu0 0
      %711 = vmatpush.bf16.msra.mxu0 0
      %712 = vmatpush.bf16.msra.mxu0 0
      %713 = vmatpush.bf16.msra.mxu0 0
      %714 = vmatpush.bf16.msra.mxu0 0
      %715 = vmatpush.bf16.msra.mxu0 0
      %716 = vmatpush.bf16.msra.mxu0 %v694
      %717 = vmatmul.bf16.gmra.mxu0 %v688
      %v718 = vpop.f32.mrf.mxu0
      %v719 = vadd.f32 0.0, %v718
      %v720 = vpop.f32.mrf.mxu0
      %721 = vdwg.mxu0
      %v722 = vadd.f32 %v665, %v706
      %v723 = vadd.f32 %v666, %v719
      %725 = vset.pattern.permute.xlu0 0
      %726 = vperm.xlu0 %725, %v228
      %v727 = vpop.permute.xlu0 %726
      %v729 = vadd.f32 %v722, %v727
      %v730 = vadd.f32 %v723, %v727
      %v731 = vmax.f32 %v729, 0.0
      %v732 = vmax.f32 %v730, 0.0
      %733 = vst [vmem:[#allocation2] sm:$0xff] %v731
      %734 = vst [vmem:[#allocation2 + $0x8] sm:$0xff] %v732
      %v735 = vld [vmem:[#allocation2] sm:$0xff]
      %v736 = vld [vmem:[#allocation2 + $0x8] sm:$0xff]
      %s737 = scalar_lea.vmem %s3, 8
      %v738 = vld [vmem:[%s737] sm:$0xff]
      %739 = vrot.lane.b32.xlu0 %v735, 17
      %v740 = vpop.permute.xlu0 %739
      %741 = vrot.lane.b32.xlu0 %v736, 17
      %v742 = vpop.permute.xlu0 %741
      %v743 = vsel %vm235, %v740, %v742
      %v744 = vsel %vm235, %v742, %v740
      %v745 = vld [vmem:[%s4] sm:$0x3]
      %v747 = vperm.slane %v745, 0
      %v748 = vperm.slane %v745, 1
      %v751 = vmul.f32 %v744, %v747
      %v752 = vmul.f32 %v743, %v748
      %v753 = vld [vmem:[%s2] sm:$0xf]
      %v754 = vpack.c.bf16 %v751, %v751
      %v755 = vpack.c.bf16 %v752, %v752
      %756 = vrot.lane.b32.xlu0 %v735, 16
      %v757 = vpop.permute.xlu0 %756
      %758 = vrot.lane.b32.xlu0 %v736, 16
      %v759 = vpop.permute.xlu0 %758
      %v760 = vsel %vm253, %v757, %v759
      %v761 = vsel %vm253, %v759, %v757
      %v762 = vld [vmem:[%s256] sm:$0x3]
      %v764 = vperm.slane %v762, 0
      %v765 = vperm.slane %v762, 1
      %v768 = vmul.f32 %v761, %v764
      %v769 = vmul.f32 %v760, %v765
      %s770 = scalar_lea.vmem %s2, 4
      %v771 = vld [vmem:[%s770] sm:$0xf]
      %v772 = vpack.c.bf16 %v768, %v768
      %v773 = vpack.c.bf16 %v769, %v769
      %v775 = vsel %vm269, %v771, 0
      %v778 = vsel %vm273, %v772, 0
      %v781 = vsel %vm273, %v773, 0
      %783 = vmatpush.bf16.msra.mxu0 0
      %784 = vmatpush.bf16.msra.mxu0 0
      %785 = vmatpush.bf16.msra.mxu0 0
      %786 = vmatpush.bf16.msra.mxu0 0
      %787 = vmatpush.bf16.msra.mxu0 0
      %788 = vmatpush.bf16.msra.mxu0 0
      %789 = vmatpush.bf16.msra.mxu0 0
      %790 = vmatpush.bf16.msra.mxu0 %v778
      %791 = vmatmul.bf16.gmra.mxu0 %v775
      %v792 = vpop.f32.mrf.mxu0
      %v793 = vadd.f32 0.0, %v792
      %v794 = vpop.f32.mrf.mxu0
      %795 = vdwg.mxu0
      %796 = vmatpush.bf16.msra.mxu0 0
      %797 = vmatpush.bf16.msra.mxu0 0
      %798 = vmatpush.bf16.msra.mxu0 0
      %799 = vmatpush.bf16.msra.mxu0 0
      %800 = vmatpush.bf16.msra.mxu0 0
      %801 = vmatpush.bf16.msra.mxu0 0
      %802 = vmatpush.bf16.msra.mxu0 0
      %803 = vmatpush.bf16.msra.mxu0 %v781
      %804 = vmatmul.bf16.gmra.mxu0 %v775
      %v805 = vpop.f32.mrf.mxu0
      %v806 = vadd.f32 0.0, %v805
      %v807 = vpop.f32.mrf.mxu0
      %808 = vdwg.mxu0
      %v810 = vsel %vm269, %v753, 0
      %v813 = vsel %vm273, %v754, 0
      %v816 = vsel %vm273, %v755, 0
      %818 = vmatpush.bf16.msra.mxu0 0
      %819 = vmatpush.bf16.msra.mxu0 0
      %820 = vmatpush.bf16.msra.mxu0 0
      %821 = vmatpush.bf16.msra.mxu0 0
      %822 = vmatpush.bf16.msra.mxu0 0
      %823 = vmatpush.bf16.msra.mxu0 0
      %824 = vmatpush.bf16.msra.mxu0 0
      %825 = vmatpush.bf16.msra.mxu0 %v813
      %826 = vmatmul.bf16.gmra.mxu0 %v810
      %v827 = vpop.f32.mrf.mxu0
      %v828 = vadd.f32 %v793, %v827
      %v829 = vpop.f32.mrf.mxu0
      %830 = vdwg.mxu0
      %831 = vmatpush.bf16.msra.mxu0 0
      %832 = vmatpush.bf16.msra.mxu0 0
      %833 = vmatpush.bf16.msra.mxu0 0
      %834 = vmatpush.bf16.msra.mxu0 0
      %835 = vmatpush.bf16.msra.mxu0 0
      %836 = vmatpush.bf16.msra.mxu0 0
      %837 = vmatpush.bf16.msra.mxu0 0
      %838 = vmatpush.bf16.msra.mxu0 %v816
      %839 = vmatmul.bf16.gmra.mxu0 %v810
      %v840 = vpop.f32.mrf.mxu0
      %v841 = vadd.f32 %v806, %v840
      %v842 = vpop.f32.mrf.mxu0
      %843 = vdwg.mxu0
      %844 = vrot.lane.b32.xlu0 %v735, 15
      %v845 = vpop.permute.xlu0 %844
      %846 = vrot.lane.b32.xlu0 %v736, 15
      %v847 = vpop.permute.xlu0 %846
      %v848 = vsel %vm345, %v845, %v847
      %v849 = vsel %vm345, %v847, %v845
      %v850 = vld [vmem:[%s348] sm:$0x3]
      %v852 = vperm.slane %v850, 0
      %v853 = vperm.slane %v850, 1
      %v856 = vmul.f32 %v849, %v852
      %v857 = vmul.f32 %v848, %v853
      %s858 = scalar_lea.vmem %s2, 8
      %v859 = vld [vmem:[%s858] sm:$0xf]
      %v860 = vpack.c.bf16 %v856, %v856
      %v861 = vpack.c.bf16 %v857, %v857
      %v863 = vsel %vm269, %v859, 0
      %v866 = vsel %vm273, %v860, 0
      %v869 = vsel %vm273, %v861, 0
      %871 = vmatpush.bf16.msra.mxu0 0
      %872 = vmatpush.bf16.msra.mxu0 0
      %873 = vmatpush.bf16.msra.mxu0 0
      %874 = vmatpush.bf16.msra.mxu0 0
      %875 = vmatpush.bf16.msra.mxu0 0
      %876 = vmatpush.bf16.msra.mxu0 0
      %877 = vmatpush.bf16.msra.mxu0 0
      %878 = vmatpush.bf16.msra.mxu0 %v866
      %879 = vmatmul.bf16.gmra.mxu0 %v863
      %v880 = vpop.f32.mrf.mxu0
      %v881 = vadd.f32 0.0, %v880
      %v882 = vpop.f32.mrf.mxu0
      %883 = vdwg.mxu0
      %884 = vmatpush.bf16.msra.mxu0 0
      %885 = vmatpush.bf16.msra.mxu0 0
      %886 = vmatpush.bf16.msra.mxu0 0
      %887 = vmatpush.bf16.msra.mxu0 0
      %888 = vmatpush.bf16.msra.mxu0 0
      %889 = vmatpush.bf16.msra.mxu0 0
      %890 = vmatpush.bf16.msra.mxu0 0
      %891 = vmatpush.bf16.msra.mxu0 %v869
      %892 = vmatmul.bf16.gmra.mxu0 %v863
      %v893 = vpop.f32.mrf.mxu0
      %v894 = vadd.f32 0.0, %v893
      %v895 = vpop.f32.mrf.mxu0
      %896 = vdwg.mxu0
      %v897 = vadd.f32 %v828, %v881
      %v898 = vadd.f32 %v841, %v894
      %899 = vrot.lane.b32.xlu0 %v735, 1
      %v900 = vpop.permute.xlu0 %899
      %901 = vrot.lane.b32.xlu0 %v736, 1
      %v902 = vpop.permute.xlu0 %901
      %v903 = vsel %vm402, %v900, %v902
      %v904 = vsel %vm402, %v902, %v900
      %v905 = vld [vmem:[%s405] sm:$0x3]
      %v907 = vperm.slane %v905, 0
      %v908 = vperm.slane %v905, 1
      %v911 = vmul.f32 %v904, %v907
      %v912 = vmul.f32 %v903, %v908
      %s913 = scalar_lea.vmem %s2, 12
      %v914 = vld [vmem:[%s913] sm:$0xf]
      %v915 = vpack.c.bf16 %v911, %v911
      %v916 = vpack.c.bf16 %v912, %v912
      %v918 = vsel %vm269, %v914, 0
      %v921 = vsel %vm273, %v915, 0
      %v924 = vsel %vm273, %v916, 0
      %926 = vmatpush.bf16.msra.mxu0 0
      %927 = vmatpush.bf16.msra.mxu0 0
      %928 = vmatpush.bf16.msra.mxu0 0
      %929 = vmatpush.bf16.msra.mxu0 0
      %930 = vmatpush.bf16.msra.mxu0 0
      %931 = vmatpush.bf16.msra.mxu0 0
      %932 = vmatpush.bf16.msra.mxu0 0
      %933 = vmatpush.bf16.msra.mxu0 %v921
      %934 = vmatmul.bf16.gmra.mxu0 %v918
      %v935 = vpop.f32.mrf.mxu0
      %v936 = vadd.f32 0.0, %v935
      %v937 = vpop.f32.mrf.mxu0
      %938 = vdwg.mxu0
      %939 = vmatpush.bf16.msra.mxu0 0
      %940 = vmatpush.bf16.msra.mxu0 0
      %941 = vmatpush.bf16.msra.mxu0 0
      %942 = vmatpush.bf16.msra.mxu0 0
      %943 = vmatpush.bf16.msra.mxu0 0
      %944 = vmatpush.bf16.msra.mxu0 0
      %945 = vmatpush.bf16.msra.mxu0 0
      %946 = vmatpush.bf16.msra.mxu0 %v924
      %947 = vmatmul.bf16.gmra.mxu0 %v918
      %v948 = vpop.f32.mrf.mxu0
      %v949 = vadd.f32 0.0, %v948
      %v950 = vpop.f32.mrf.mxu0
      %951 = vdwg.mxu0
      %v952 = vadd.f32 %v897, %v936
      %v953 = vadd.f32 %v898, %v949
      %s954 = scalar_lea.vmem %s2, 16
      %v955 = vld [vmem:[%s954] sm:$0xf]
      %v956 = vpack.c.bf16 %v735, %v735
      %v957 = vpack.c.bf16 %v736, %v736
      %v959 = vsel %vm269, %v955, 0
      %v962 = vsel %vm273, %v956, 0
      %v965 = vsel %vm273, %v957, 0
      %967 = vmatpush.bf16.msra.mxu0 0
      %968 = vmatpush.bf16.msra.mxu0 0
      %969 = vmatpush.bf16.msra.mxu0 0
      %970 = vmatpush.bf16.msra.mxu0 0
      %971 = vmatpush.bf16.msra.mxu0 0
      %972 = vmatpush.bf16.msra.mxu0 0
      %973 = vmatpush.bf16.msra.mxu0 0
      %974 = vmatpush.bf16.msra.mxu0 %v962
      %975 = vmatmul.bf16.gmra.mxu0 %v959
      %v976 = vpop.f32.mrf.mxu0
      %v977 = vadd.f32 0.0, %v976
      %v978 = vpop.f32.mrf.mxu0
      %979 = vdwg.mxu0
      %980 = vmatpush.bf16.msra.mxu0 0
      %981 = vmatpush.bf16.msra.mxu0 0
      %982 = vmatpush.bf16.msra.mxu0 0
      %983 = vmatpush.bf16.msra.mxu0 0
      %984 = vmatpush.bf16.msra.mxu0 0
      %985 = vmatpush.bf16.msra.mxu0 0
      %986 = vmatpush.bf16.msra.mxu0 0
      %987 = vmatpush.bf16.msra.mxu0 %v965
      %988 = vmatmul.bf16.gmra.mxu0 %v959
      %v989 = vpop.f32.mrf.mxu0
      %v990 = vadd.f32 0.0, %v989
      %v991 = vpop.f32.mrf.mxu0
      %992 = vdwg.mxu0
      %v993 = vadd.f32 %v952, %v977
      %v994 = vadd.f32 %v953, %v990
      %995 = vrot.lane.b32.xlu0 %v735, 127
      %v996 = vpop.permute.xlu0 %995
      %997 = vrot.lane.b32.xlu0 %v736, 127
      %v998 = vpop.permute.xlu0 %997
      %v999 = vsel %vm500, %v996, %v998
      %v1000 = vsel %vm500, %v998, %v996
      %v1001 = vld [vmem:[%s503] sm:$0x3]
      %v1003 = vperm.slane %v1001, 0
      %v1004 = vperm.slane %v1001, 1
      %v1007 = vmul.f32 %v999, %v1003
      %v1008 = vmul.f32 %v1000, %v1004
      %s1009 = scalar_lea.vmem %s2, 20
      %v1010 = vld [vmem:[%s1009] sm:$0xf]
      %v1011 = vpack.c.bf16 %v1007, %v1007
      %v1012 = vpack.c.bf16 %v1008, %v1008
      %v1014 = vsel %vm269, %v1010, 0
      %v1017 = vsel %vm273, %v1011, 0
      %v1020 = vsel %vm273, %v1012, 0
      %1022 = vmatpush.bf16.msra.mxu0 0
      %1023 = vmatpush.bf16.msra.mxu0 0
      %1024 = vmatpush.bf16.msra.mxu0 0
      %1025 = vmatpush.bf16.msra.mxu0 0
      %1026 = vmatpush.bf16.msra.mxu0 0
      %1027 = vmatpush.bf16.msra.mxu0 0
      %1028 = vmatpush.bf16.msra.mxu0 0
      %1029 = vmatpush.bf16.msra.mxu0 %v1017
      %1030 = vmatmul.bf16.gmra.mxu0 %v1014
      %v1031 = vpop.f32.mrf.mxu0
      %v1032 = vadd.f32 0.0, %v1031
      %v1033 = vpop.f32.mrf.mxu0
      %1034 = vdwg.mxu0
      %1035 = vmatpush.bf16.msra.mxu0 0
      %1036 = vmatpush.bf16.msra.mxu0 0
      %1037 = vmatpush.bf16.msra.mxu0 0
      %1038 = vmatpush.bf16.msra.mxu0 0
      %1039 = vmatpush.bf16.msra.mxu0 0
      %1040 = vmatpush.bf16.msra.mxu0 0
      %1041 = vmatpush.bf16.msra.mxu0 0
      %1042 = vmatpush.bf16.msra.mxu0 %v1020
      %1043 = vmatmul.bf16.gmra.mxu0 %v1014
      %v1044 = vpop.f32.mrf.mxu0
      %v1045 = vadd.f32 0.0, %v1044
      %v1046 = vpop.f32.mrf.mxu0
      %1047 = vdwg.mxu0
      %v1048 = vadd.f32 %v993, %v1032
      %v1049 = vadd.f32 %v994, %v1045
      %1050 = vrot.lane.b32.xlu0 %v735, 113
      %v1051 = vpop.permute.xlu0 %1050
      %1052 = vrot.lane.b32.xlu0 %v736, 113
      %v1053 = vpop.permute.xlu0 %1052
      %v1054 = vsel %vm557, %v1051, %v1053
      %v1055 = vsel %vm557, %v1053, %v1051
      %v1056 = vld [vmem:[%s560] sm:$0x3]
      %v1058 = vperm.slane %v1056, 0
      %v1059 = vperm.slane %v1056, 1
      %v1062 = vmul.f32 %v1054, %v1058
      %v1063 = vmul.f32 %v1055, %v1059
      %s1064 = scalar_lea.vmem %s2, 24
      %v1065 = vld [vmem:[%s1064] sm:$0xf]
      %v1066 = vpack.c.bf16 %v1062, %v1062
      %v1067 = vpack.c.bf16 %v1063, %v1063
      %v1069 = vsel %vm269, %v1065, 0
      %v1072 = vsel %vm273, %v1066, 0
      %v1075 = vsel %vm273, %v1067, 0
      %1077 = vmatpush.bf16.msra.mxu0 0
      %1078 = vmatpush.bf16.msra.mxu0 0
      %1079 = vmatpush.bf16.msra.mxu0 0
      %1080 = vmatpush.bf16.msra.mxu0 0
      %1081 = vmatpush.bf16.msra.mxu0 0
      %1082 = vmatpush.bf16.msra.mxu0 0
      %1083 = vmatpush.bf16.msra.mxu0 0
      %1084 = vmatpush.bf16.msra.mxu0 %v1072
      %1085 = vmatmul.bf16.gmra.mxu0 %v1069
      %v1086 = vpop.f32.mrf.mxu0
      %v1087 = vadd.f32 0.0, %v1086
      %v1088 = vpop.f32.mrf.mxu0
      %1089 = vdwg.mxu0
      %1090 = vmatpush.bf16.msra.mxu0 0
      %1091 = vmatpush.bf16.msra.mxu0 0
      %1092 = vmatpush.bf16.msra.mxu0 0
      %1093 = vmatpush.bf16.msra.mxu0 0
      %1094 = vmatpush.bf16.msra.mxu0 0
      %1095 = vmatpush.bf16.msra.mxu0 0
      %1096 = vmatpush.bf16.msra.mxu0 0
      %1097 = vmatpush.bf16.msra.mxu0 %v1075
      %1098 = vmatmul.bf16.gmra.mxu0 %v1069
      %v1099 = vpop.f32.mrf.mxu0
      %v1100 = vadd.f32 0.0, %v1099
      %v1101 = vpop.f32.mrf.mxu0
      %1102 = vdwg.mxu0
      %v1103 = vadd.f32 %v1048, %v1087
      %v1104 = vadd.f32 %v1049, %v1100
      %1105 = vrot.lane.b32.xlu0 %v735, 112
      %v1106 = vpop.permute.xlu0 %1105
      %1107 = vrot.lane.b32.xlu0 %v736, 112
      %v1108 = vpop.permute.xlu0 %1107
      %v1109 = vsel %vm614, %v1106, %v1108
      %v1110 = vsel %vm614, %v1108, %v1106
      %v1111 = vld [vmem:[%s617] sm:$0x3]
      %v1113 = vperm.slane %v1111, 0
      %v1114 = vperm.slane %v1111, 1
      %v1117 = vmul.f32 %v1109, %v1113
      %v1118 = vmul.f32 %v1110, %v1114
      %s1119 = scalar_lea.vmem %s2, 28
      %v1120 = vld [vmem:[%s1119] sm:$0xf]
      %v1121 = vpack.c.bf16 %v1117, %v1117
      %v1122 = vpack.c.bf16 %v1118, %v1118
      %v1124 = vsel %vm269, %v1120, 0
      %v1127 = vsel %vm273, %v1121, 0
      %v1130 = vsel %vm273, %v1122, 0
      %1132 = vmatpush.bf16.msra.mxu0 0
      %1133 = vmatpush.bf16.msra.mxu0 0
      %1134 = vmatpush.bf16.msra.mxu0 0
      %1135 = vmatpush.bf16.msra.mxu0 0
      %1136 = vmatpush.bf16.msra.mxu0 0
      %1137 = vmatpush.bf16.msra.mxu0 0
      %1138 = vmatpush.bf16.msra.mxu0 0
      %1139 = vmatpush.bf16.msra.mxu0 %v1127
      %1140 = vmatmul.bf16.gmra.mxu0 %v1124
      %v1141 = vpop.f32.mrf.mxu0
      %v1142 = vadd.f32 0.0, %v1141
      %v1143 = vpop.f32.mrf.mxu0
      %1144 = vdwg.mxu0
      %1145 = vmatpush.bf16.msra.mxu0 0
      %1146 = vmatpush.bf16.msra.mxu0 0
      %1147 = vmatpush.bf16.msra.mxu0 0
      %1148 = vmatpush.bf16.msra.mxu0 0
      %1149 = vmatpush.bf16.msra.mxu0 0
      %1150 = vmatpush.bf16.msra.mxu0 0
      %1151 = vmatpush.bf16.msra.mxu0 0
      %1152 = vmatpush.bf16.msra.mxu0 %v1130
      %1153 = vmatmul.bf16.gmra.mxu0 %v1124
      %v1154 = vpop.f32.mrf.mxu0
      %v1155 = vadd.f32 0.0, %v1154
      %v1156 = vpop.f32.mrf.mxu0
      %1157 = vdwg.mxu0
      %v1158 = vadd.f32 %v1103, %v1142
      %v1159 = vadd.f32 %v1104, %v1155
      %1160 = vrot.lane.b32.xlu0 %v735, 111
      %v1161 = vpop.permute.xlu0 %1160
      %1162 = vrot.lane.b32.xlu0 %v736, 111
      %v1163 = vpop.permute.xlu0 %1162
      %v1164 = vsel %vm671, %v1161, %v1163
      %v1165 = vsel %vm671, %v1163, %v1161
      %v1166 = vld [vmem:[%s674] sm:$0x3]
      %v1168 = vperm.slane %v1166, 0
      %v1169 = vperm.slane %v1166, 1
      %v1172 = vmul.f32 %v1164, %v1168
      %v1173 = vmul.f32 %v1165, %v1169
      %s1174 = scalar_lea.vmem %s2, 32
      %v1175 = vld [vmem:[%s1174] sm:$0xf]
      %v1176 = vpack.c.bf16 %v1172, %v1172
      %v1177 = vpack.c.bf16 %v1173, %v1173
      %v1179 = vsel %vm269, %v1175, 0
      %v1182 = vsel %vm273, %v1176, 0
      %v1185 = vsel %vm273, %v1177, 0
      %1187 = vmatpush.bf16.msra.mxu0 0
      %1188 = vmatpush.bf16.msra.mxu0 0
      %1189 = vmatpush.bf16.msra.mxu0 0
      %1190 = vmatpush.bf16.msra.mxu0 0
      %1191 = vmatpush.bf16.msra.mxu0 0
      %1192 = vmatpush.bf16.msra.mxu0 0
      %1193 = vmatpush.bf16.msra.mxu0 0
      %1194 = vmatpush.bf16.msra.mxu0 %v1182
      %1195 = vmatmul.bf16.gmra.mxu0 %v1179
      %v1196 = vpop.f32.mrf.mxu0
      %v1197 = vadd.f32 0.0, %v1196
      %v1198 = vpop.f32.mrf.mxu0
      %1199 = vdwg.mxu0
      %1200 = vmatpush.bf16.msra.mxu0 0
      %1201 = vmatpush.bf16.msra.mxu0 0
      %1202 = vmatpush.bf16.msra.mxu0 0
      %1203 = vmatpush.bf16.msra.mxu0 0
      %1204 = vmatpush.bf16.msra.mxu0 0
      %1205 = vmatpush.bf16.msra.mxu0 0
      %1206 = vmatpush.bf16.msra.mxu0 0
      %1207 = vmatpush.bf16.msra.mxu0 %v1185
      %1208 = vmatmul.bf16.gmra.mxu0 %v1179
      %v1209 = vpop.f32.mrf.mxu0
      %v1210 = vadd.f32 0.0, %v1209
      %v1211 = vpop.f32.mrf.mxu0
      %1212 = vdwg.mxu0
      %v1213 = vadd.f32 %v1158, %v1197
      %v1214 = vadd.f32 %v1159, %v1210
      %1216 = vset.pattern.permute.xlu0 0
      %1217 = vperm.xlu0 %1216, %v738
      %v1218 = vpop.permute.xlu0 %1217
      %v1220 = vadd.f32 %v1213, %v1218
      %v1221 = vadd.f32 %v1214, %v1218
      %v1222 = vmax.f32 %v1220, 0.0
      %v1223 = vmax.f32 %v1221, 0.0
      %1224 = vst [vmem:[#allocation2] sm:$0xff] %v1222
      %1225 = vst [vmem:[#allocation2 + $0x8] sm:$0xff] %v1223
      %v1226 = vld [vmem:[#allocation2] sm:$0xff]
      %v1227 = vld [vmem:[#allocation2 + $0x8] sm:$0xff]
      %1228 = vst [vmem:[%s224] sm:$0xff] %v1226
      %1229 = vst [vmem:[%s224 + $0x8] sm:$0xff] %v1227
      %p1230 = scmp.lt.s32.totalorder %s16, 1
      %s1231 = scalar_select %p1230, %s16, 1
      %s1232 = smul.addr %s1231, 2
      %s1233 = smul.addr %s1232, 8
      %s1234 = scalar_lea.vmem %s5, %s1233
      // Predicated region
      $region41: #{decoder_layer_forward.1} parent=39 // pred_check
        %p1235 = pneg %p144
      $region42: #{decoder_layer_forward.1} parent=39 // pred_check_branch
        %1237 = sbr.rel (%p1235) target = $region44
      $region43: #{decoder_layer_forward.1} parent=39 // pred_region
        _
      $region44: #{decoder_layer_forward.1} parent=39 // pred_fallthru
        _
    $region40: #{decoder_layer_forward.1} parent=5 // pred_fallthru
      _
    %p1238 = scmp.le.s32.totalorder 2, %s11
    // Predicated region
    $region45: #{decoder_layer_forward.1} parent=5 // pred_check
      %p1239 = pneg %p1238
    $region46: #{decoder_layer_forward.1} parent=5 // pred_check_branch
      %1241 = sbr.rel (%p1239) target = $region48
    $region47: #{decoder_layer_forward.1} parent=5 // pred_region
      %s1242 = ssub.s32 %s11, 2
      // Predicated region
      $region49: #{decoder_layer_forward.1} parent=47 // pred_check
        %p1243 = pneg %p150
      $region50: #{decoder_layer_forward.1} parent=47 // pred_check_branch
        %1245 = sbr.rel (%p1243) target = $region52
      $region51: #{decoder_layer_forward.1} parent=47 // pred_region
        %p1246 = scmp.lt.s32.totalorder %s17, 1
        %s1247 = scalar_select %p1246, %s17, 1
        %s1248 = smul.addr %s1247, 2
        %s1249 = smul.addr %s1248, 8
        %s1250 = scalar_lea.vmem %s5, %s1249
      $region52: #{decoder_layer_forward.1} parent=47 // pred_fallthru
        _
    $region48: #{decoder_layer_forward.1} parent=5 // pred_fallthru
      _
  $region6: #{decoder_layer_forward.1} parent=0 // loop_footer
    %s15 = sadd.s32 1, %s11
  $region7: #{decoder_layer_forward.1} parent=0 // loop_footer_branch
    %10 = sbr.rel target = $region3
  $region8: #{decoder_layer_forward.1} parent=0 // loop_exit
    _

// kernel: decoder_layer_forward.1
$region0: #{decoder_layer_forward.1}
  #allocation0 [shape = 'u32[]', space=smem, size = 0x4, offset = 0x4, fixed_abs, tag = 'smem constant byte address 0x4 - core index']
  #allocation1 [shape = 'u32[72,128]{1,0:T(1,128)}', space=vmem, size = 0x9000, scoped, tag = 'internal scratch']
  #allocation2 [shape = 'f32[8,256]{1,0:T(8,128)}', space=vmem, size = 0x2000, scoped, tag = 'scratch operand']
  %s0 = inlined_call_operand.vmem [shape: f32[2,8,256], index: 0, kind: input, shape index: {}]
  %s1 = inlined_call_operand.vmem [shape: bf16[9,8,8], index: 1, kind: input, shape index: {}]
  %s2 = inlined_call_operand.vmem [shape: bf16[9,8,8], index: 2, kind: input, shape index: {}]
  %s3 = inlined_call_operand.vmem [shape: f32[2,8,1], index: 3, kind: input, shape index: {}]
  %s4 = inlined_call_operand.vmem [shape: f32[9,1,256], index: 4, kind: input, shape index: {}]
  %s5 = inlined_call_operand.vmem [shape: f32[2,8,256], index: 5, kind: output, shape index: {}]
  %s6 = sld [smem:[#allocation0]]
  $region53: #{decoder_layer_forward.1} parent=0
    _
  %s8 = ssub.s32 1, %s6
  %s9 = scalar_select 0, %s8, %s6
  loop: start=0, step=1, limit=4
  $region2: #{decoder_layer_forward.1} parent=0 // loop_pre_header
    _
  $region3: #{decoder_layer_forward.1} parent=0 // loop_header
    %s11 = sphi 0, %s15
    %p12 = scmp.ge.s32.totalorder %s11, 4
    %s21 = sphi 0, %s23
    %s24 = sphi 0, %s21
    %s25 = sphi 0, %s24
    %s41 = sphi 0, %s25
    %s45 = sphi 0, %s45
    %s47 = sphi 0, %s45
    %s48 = sphi 0, %s47
    %s62 = sphi 0, %s48
    %s66 = sphi 0, %s66
    %s68 = sphi 0, %s66
    %s69 = sphi 0, %s68
    %s83 = sphi 0, %s69
    %s87 = sphi 0, %s87
    %s89 = sphi 0, %s87
    %s90 = sphi 0, %s89
    %s104 = sphi 0, %s90
    %s108 = sphi 0, %s108
    %s110 = sphi 0, %s108
    %s111 = sphi 0, %s110
    %s125 = sphi 0, %s111
    %s131 = sphi 0, %s133
    %s134 = sphi 0, %s131
    %s135 = sphi 0, %s134
    %s151 = sphi 0, %s135
  $region4: #{decoder_layer_forward.1} parent=0 // loop_header_branch
    %14 = sbr.rel (%p12) target = $region8
  $region5: #{decoder_layer_forward.1} parent=0 // loop_body
    %s16 = ssub.s32 %s11, 1
    %s17 = ssub.s32 %s11, 2
    %s18 = sadd.s32 %s11, 1
    %s19 = ssub.s32 %s11, %s18
    %p20 = scmp.eq.s32.totalorder %s19, 0
    %s22 = sadd.s32 %s21, 1
    %s23 = scalar_select %p20, %s21, %s22
    %p26 = pneg %p20
    %p27 = scmp.eq.s32.totalorder %s11, 1
    %p28 = por %p26, %p27
    %p29 = scmp.ne.s32.totalorder %s21, %s24
    %p30 = scmp.eq.s32.totalorder %s11, 0
    %p31 = por %p29, %p30
    %p32 = scmp.ne.s32.totalorder %s21, %s24
    %p33 = scmp.eq.s32.totalorder %s16, 1
    %p34 = por %p32, %p33
    %p35 = scmp.ne.s32.totalorder %s24, %s25
    %p36 = scmp.eq.s32.totalorder %s16, 0
    %p37 = por %p35, %p36
    %p38 = scmp.ne.s32.totalorder %s24, %s25
    %p39 = scmp.eq.s32.totalorder %s17, 1
    %p40 = por %p38, %p39
    %p42 = scmp.ne.s32.totalorder %s25, %s41
    %p43 = scmp.eq.s32.totalorder %s17, 0
    %p44 = por %p42, %p43
    %s46 = sadd.s32 %s45, 1
    %p49 = scmp.eq.s32.totalorder %s11, 1
    %p50 = scmp.ne.s32.totalorder %s45, %s47
    %p51 = scmp.eq.s32.totalorder %s11, 0
    %p52 = por %p50, %p51
    %p53 = scmp.ne.s32.totalorder %s45, %s47
    %p54 = scmp.eq.s32.totalorder %s16, 1
    %p55 = por %p53, %p54
    %p56 = scmp.ne.s32.totalorder %s47, %s48
    %p57 = scmp.eq.s32.totalorder %s16, 0
    %p58 = por %p56, %p57
    %p59 = scmp.ne.s32.totalorder %s47, %s48
    %p60 = scmp.eq.s32.totalorder %s17, 1
    %p61 = por %p59, %p60
    %p63 = scmp.ne.s32.totalorder %s48, %s62
    %p64 = scmp.eq.s32.totalorder %s17, 0
    %p65 = por %p63, %p64
    %s67 = sadd.s32 %s66, 1
    %p70 = scmp.eq.s32.totalorder %s11, 1
    %p71 = scmp.ne.s32.totalorder %s66, %s68
    %p72 = scmp.eq.s32.totalorder %s11, 0
    %p73 = por %p71, %p72
    %p74 = scmp.ne.s32.totalorder %s66, %s68
    %p75 = scmp.eq.s32.totalorder %s16, 1
    %p76 = por %p74, %p75
    %p77 = scmp.ne.s32.totalorder %s68, %s69
    %p78 = scmp.eq.s32.totalorder %s16, 0
    %p79 = por %p77, %p78
    %p80 = scmp.ne.s32.totalorder %s68, %s69
    %p81 = scmp.eq.s32.totalorder %s17, 1
    %p82 = por %p80, %p81
    %p84 = scmp.ne.s32.totalorder %s69, %s83
    %p85 = scmp.eq.s32.totalorder %s17, 0
    %p86 = por %p84, %p85
    %s88 = sadd.s32 %s87, 1
    %p91 = scmp.eq.s32.totalorder %s11, 1
    %p92 = scmp.ne.s32.totalorder %s87, %s89
    %p93 = scmp.eq.s32.totalorder %s11, 0
    %p94 = por %p92, %p93
    %p95 = scmp.ne.s32.totalorder %s87, %s89
    %p96 = scmp.eq.s32.totalorder %s16, 1
    %p97 = por %p95, %p96
    %p98 = scmp.ne.s32.totalorder %s89, %s90
    %p99 = scmp.eq.s32.totalorder %s16, 0
    %p100 = por %p98, %p99
    %p101 = scmp.ne.s32.totalorder %s89, %s90
    %p102 = scmp.eq.s32.totalorder %s17, 1
    %p103 = por %p101, %p102
    %p105 = scmp.ne.s32.totalorder %s90, %s104
    %p106 = scmp.eq.s32.totalorder %s17, 0
    %p107 = por %p105, %p106
    %s109 = sadd.s32 %s108, 1
    %p112 = scmp.eq.s32.totalorder %s11, 1
    %p113 = scmp.ne.s32.totalorder %s108, %s110
    %p114 = scmp.eq.s32.totalorder %s11, 0
    %p115 = por %p113, %p114
    %p116 = scmp.ne.s32.totalorder %s108, %s110
    %p117 = scmp.eq.s32.totalorder %s16, 1
    %p118 = por %p116, %p117
    %p119 = scmp.ne.s32.totalorder %s110, %s111
    %p120 = scmp.eq.s32.totalorder %s16, 0
    %p121 = por %p119, %p120
    %p122 = scmp.ne.s32.totalorder %s110, %s111
    %p123 = scmp.eq.s32.totalorder %s17, 1
    %p124 = por %p122, %p123
    %p126 = scmp.ne.s32.totalorder %s111, %s125
    %p127 = scmp.eq.s32.totalorder %s17, 0
    %p128 = por %p126, %p127
    %s129 = ssub.s32 %s11, %s18
    %p130 = scmp.eq.s32.totalorder %s129, 0
    %s132 = sadd.s32 %s131, 1
    %s133 = scalar_select %p130, %s131, %s132
    %p136 = pneg %p130
    %p137 = scmp.eq.s32.totalorder %s11, 1
    %p138 = por %p136, %p137
    %p139 = scmp.ne.s32.totalorder %s131, %s134
    %p140 = scmp.eq.s32.totalorder %s11, 0
    %p141 = por %p139, %p140
    %p142 = scmp.ne.s32.totalorder %s131, %s134
    %p143 = scmp.eq.s32.totalorder %s16, 1
    %p144 = por %p142, %p143
    %p145 = scmp.ne.s32.totalorder %s134, %s135
    %p146 = scmp.eq.s32.totalorder %s16, 0
    %p147 = por %p145, %p146
    %p148 = scmp.ne.s32.totalorder %s134, %s135
    %p149 = scmp.eq.s32.totalorder %s17, 1
    %p150 = por %p148, %p149
    %p152 = scmp.ne.s32.totalorder %s135, %s151
    %p153 = scmp.eq.s32.totalorder %s17, 0
    %p154 = por %p152, %p153
    %p155 = scmp.le.s32.totalorder 1, %s11
    %p156 = scmp.lt.s32.totalorder %s11, 3
    %p157 = pnand %p155, %p156
    %p158 = pneg %p157
    // Predicated region
    $region9: #{decoder_layer_forward.1} parent=5 // pred_check
      _
    $region10: #{decoder_layer_forward.1} parent=5 // pred_check_branch
      %160 = sbr.rel (%p157) target = $region12
    $region11: #{decoder_layer_forward.1} parent=5 // pred_region
      %s161 = ssub.s32 %s11, 1
      // Predicated region
      $region13: #{decoder_layer_forward.1} parent=11 // pred_check
        %p162 = pneg %p58
      $region14: #{decoder_layer_forward.1} parent=11 // pred_check_branch
        %164 = sbr.rel (%p162) target = $region16
      $region15: #{decoder_layer_forward.1} parent=11 // pred_region
        _
      $region16: #{decoder_layer_forward.1} parent=11 // pred_fallthru
        _
      // Predicated region
      $region17: #{decoder_layer_forward.1} parent=11 // pred_check
        %p165 = pneg %p79
      $region18: #{decoder_layer_forward.1} parent=11 // pred_check_branch
        %167 = sbr.rel (%p165) target = $region20
      $region19: #{decoder_layer_forward.1} parent=11 // pred_region
        _
      $region20: #{decoder_layer_forward.1} parent=11 // pred_fallthru
        _
      // Predicated region
      $region21: #{decoder_layer_forward.1} parent=11 // pred_check
        %p168 = pneg %p100
      $region22: #{decoder_layer_forward.1} parent=11 // pred_check_branch
        %170 = sbr.rel (%p168) target = $region24
      $region23: #{decoder_layer_forward.1} parent=11 // pred_region
        _
      $region24: #{decoder_layer_forward.1} parent=11 // pred_fallthru
        _
      // Predicated region
      $region25: #{decoder_layer_forward.1} parent=11 // pred_check
        %p171 = pneg %p121
      $region26: #{decoder_layer_forward.1} parent=11 // pred_check_branch
        %173 = sbr.rel (%p171) target = $region28
      $region27: #{decoder_layer_forward.1} parent=11 // pred_region
        _
      $region28: #{decoder_layer_forward.1} parent=11 // pred_fallthru
        _
    $region12: #{decoder_layer_forward.1} parent=5 // pred_fallthru
      _
    %p174 = scmp.lt.s32.totalorder %s11, 2
    // Predicated region
    $region29: #{decoder_layer_forward.1} parent=5 // pred_check
      %p175 = pneg %p174
    $region30: #{decoder_layer_forward.1} parent=5 // pred_check_branch
      %177 = sbr.rel (%p175) target = $region32
    $region31: #{decoder_layer_forward.1} parent=5 // pred_region
      // Predicated region
      $region33: #{decoder_layer_forward.1} parent=31 // pred_check
        %p178 = pneg %p31
      $region34: #{decoder_layer_forward.1} parent=31 // pred_check_branch
        %180 = sbr.rel (%p178) target = $region36
      $region35: #{decoder_layer_forward.1} parent=31 // pred_region
        %p181 = scmp.lt.s32.totalorder %s11, 1
        %s182 = scalar_select %p181, %s11, 1
        %s183 = smul.addr %s182, 2
        %s184 = smul.addr %s183, 8
        %s185 = scalar_lea.vmem %s0, %s184
      $region36: #{decoder_layer_forward.1} parent=31 // pred_fallthru
        _
    $region32: #{decoder_layer_forward.1} parent=5 // pred_fallthru
      _
    %p186 = scmp.le.s32.totalorder 1, %s11
    %p187 = scmp.lt.s32.totalorder %s11, 3
    %p188 = pnand %p186, %p187
    %p189 = pneg %p188
    // Predicated region
    $region37: #{decoder_layer_forward.1} parent=5 // pred_check
      _
    $region38: #{decoder_layer_forward.1} parent=5 // pred_check_branch
      %191 = sbr.rel (%p188) target = $region40
    $region39: #{decoder_layer_forward.1} parent=5 // pred_region
      %s192 = ssub.s32 %s11, 1
      %p193 = scmp.lt.s32.totalorder %s16, 1
      %s194 = scalar_select %p193, %s16, 1
      %s195 = smul.addr %s194, 2
      %s196 = smul.addr %s195, 8
      %s197 = scalar_lea.vmem %s0, %s196
      %p198 = pneg %p37
      %p199 = pneg %p34
      %p200 = pneg %p58
      %p201 = pneg %p55
      %p202 = pneg %p79
      %p203 = pneg %p76
      %p204 = pneg %p100
      %p205 = pneg %p97
      %p206 = pneg %p121
      %p207 = pneg %p118
      %p208 = pneg %p147
      %p209 = pneg %p144
      %p210 = scmp.lt.s32.totalorder %s16, 1
      %s211 = scalar_select %p210, %s16, 1
      %s212 = smul.addr %s211, 2
      %s213 = smul.addr %s212, 8
      %s214 = scalar_lea.vmem %s5, %s213
      %p215 = scmp.lt.s32.totalorder %s16, 1
      %s216 = scalar_select %p215, %s16, 1
      %s217 = smul.addr %s216, 2
      %s218 = smul.addr %s217, 8
      %s219 = scalar_lea.vmem %s0, %s218
      %p220 = scmp.lt.s32.totalorder %s16, 1
      %s221 = scalar_select %p220, %s16, 1
      %s222 = smul.addr %s221, 2
      %s223 = smul.addr %s222, 8
      %s224 = scalar_lea.vmem %s5, %s223
      %v226 = vld [vmem:[%s219] sm:$0xff]
      %v227 = vld [vmem:[%s219 + $0x8] sm:$0xff]
      %v228 = vld [vmem:[%s3] sm:$0xff]
      %229 = vrot.lane.b32.xlu0 %v226, 17
      %v230 = vpop.permute.xlu0 %229
      %231 = vrot.lane.b32.xlu0 %v227, 17
      %v232 = vpop.permute.xlu0 %231
      %v233 = vlaneseq
      %v234 = vand.u32 %v233, 127
      %vm235 = vcmp.lt.s32.totalorder %v234, 17
      %v236 = vsel %vm235, %v230, %v232
      %v237 = vsel %vm235, %v232, %v230
      %v238 = vld [vmem:[%s4] sm:$0x3]
      %v240 = vperm.slane %v238, 0
      %v241 = vperm.slane %v238, 1
      %v244 = vmul.f32 %v237, %v240
      %v245 = vmul.f32 %v236, %v241
      %v246 = vld [vmem:[%s1] sm:$0xf]
      %v247 = vpack.c.bf16 %v244, %v244
      %v248 = vpack.c.bf16 %v245, %v245
      %249 = vrot.lane.b32.xlu0 %v226, 16
      %v250 = vpop.permute.xlu0 %249
      %251 = vrot.lane.b32.xlu0 %v227, 16
      %v252 = vpop.permute.xlu0 %251
      %vm253 = vcmp.lt.s32.totalorder %v234, 16
      %v254 = vsel %vm253, %v250, %v252
      %v255 = vsel %vm253, %v252, %v250
      %s256 = scalar_lea.vmem %s4, 2
      %v257 = vld [vmem:[%s256] sm:$0x3]
      %v259 = vperm.slane %v257, 0
      %v260 = vperm.slane %v257, 1
      %v263 = vmul.f32 %v255, %v259
      %v264 = vmul.f32 %v254, %v260
      %s265 = scalar_lea.vmem %s1, 4
      %v266 = vld [vmem:[%s265] sm:$0xf]
      %v267 = vpack.c.bf16 %v263, %v263
      %v268 = vpack.c.bf16 %v264, %v264
      %vm269 = vcmask 64512
      %v271 = vsel %vm269, %v266, 0
      %vm273 = vcmask 1043456
      %v275 = vsel %vm273, %v267, 0
      %v278 = vsel %vm273, %v268, 0
      %280 = vmatpush.bf16.msra.mxu0 0
      %281 = vmatpush.bf16.msra.mxu0 0
      %282 = vmatpush.bf16.msra.mxu0 0
      %283 = vmatpush.bf16.msra.mxu0 0
      %284 = vmatpush.bf16.msra.mxu0 0
      %285 = vmatpush.bf16.msra.mxu0 0
      %286 = vmatpush.bf16.msra.mxu0 0
      %287 = vmatpush.bf16.msra.mxu0 %v275
      %288 = vmatmul.bf16.gmra.mxu0 %v271
      %v289 = vpop.f32.mrf.mxu0
      %v290 = vadd.f32 0.0, %v289
      %v291 = vpop.f32.mrf.mxu0
      %292 = vdwg.mxu0
      %293 = vmatpush.bf16.msra.mxu0 0
      %294 = vmatpush.bf16.msra.mxu0 0
      %295 = vmatpush.bf16.msra.mxu0 0
      %296 = vmatpush.bf16.msra.mxu0 0
      %297 = vmatpush.bf16.msra.mxu0 0
      %298 = vmatpush.bf16.msra.mxu0 0
      %299 = vmatpush.bf16.msra.mxu0 0
      %300 = vmatpush.bf16.msra.mxu0 %v278
      %301 = vmatmul.bf16.gmra.mxu0 %v271
      %v302 = vpop.f32.mrf.mxu0
      %v303 = vadd.f32 0.0, %v302
      %v304 = vpop.f32.mrf.mxu0
      %305 = vdwg.mxu0
      %v307 = vsel %vm269, %v246, 0
      %v310 = vsel %vm273, %v247, 0
      %v313 = vsel %vm273, %v248, 0
      %315 = vmatpush.bf16.msra.mxu0 0
      %316 = vmatpush.bf16.msra.mxu0 0
      %317 = vmatpush.bf16.msra.mxu0 0
      %318 = vmatpush.bf16.msra.mxu0 0
      %319 = vmatpush.bf16.msra.mxu0 0
      %320 = vmatpush.bf16.msra.mxu0 0
      %321 = vmatpush.bf16.msra.mxu0 0
      %322 = vmatpush.bf16.msra.mxu0 %v310
      %323 = vmatmul.bf16.gmra.mxu0 %v307
      %v324 = vpop.f32.mrf.mxu0
      %v325 = vadd.f32 %v290, %v324
      %v326 = vpop.f32.mrf.mxu0
      %327 = vdwg.mxu0
      %328 = vmatpush.bf16.msra.mxu0 0
      %329 = vmatpush.bf16.msra.mxu0 0
      %330 = vmatpush.bf16.msra.mxu0 0
      %331 = vmatpush.bf16.msra.mxu0 0
      %332 = vmatpush.bf16.msra.mxu0 0
      %333 = vmatpush.bf16.msra.mxu0 0
      %334 = vmatpush.bf16.msra.mxu0 0
      %335 = vmatpush.bf16.msra.mxu0 %v313
      %336 = vmatmul.bf16.gmra.mxu0 %v307
      %v337 = vpop.f32.mrf.mxu0
      %v338 = vadd.f32 %v303, %v337
      %v339 = vpop.f32.mrf.mxu0
      %340 = vdwg.mxu0
      %341 = vrot.lane.b32.xlu0 %v226, 15
      %v342 = vpop.permute.xlu0 %341
      %343 = vrot.lane.b32.xlu0 %v227, 15
      %v344 = vpop.permute.xlu0 %343
      %vm345 = vcmp.lt.s32.totalorder %v234, 15
      %v346 = vsel %vm345, %v342, %v344
      %v347 = vsel %vm345, %v344, %v342
      %s348 = scalar_lea.vmem %s4, 4
      %v349 = vld [vmem:[%s348] sm:$0x3]
      %v351 = vperm.slane %v349, 0
      %v352 = vperm.slane %v349, 1
      %v355 = vmul.f32 %v347, %v351
      %v356 = vmul.f32 %v346, %v352
      %s357 = scalar_lea.vmem %s1, 8
      %v358 = vld [vmem:[%s357] sm:$0xf]
      %v359 = vpack.c.bf16 %v355, %v355
      %v360 = vpack.c.bf16 %v356, %v356
      %v362 = vsel %vm269, %v358, 0
      %v365 = vsel %vm273, %v359, 0
      %v368 = vsel %vm273, %v360, 0
      %370 = vmatpush.bf16.msra.mxu0 0
      %371 = vmatpush.bf16.msra.mxu0 0
      %372 = vmatpush.bf16.msra.mxu0 0
      %373 = vmatpush.bf16.msra.mxu0 0
      %374 = vmatpush.bf16.msra.mxu0 0
      %375 = vmatpush.bf16.msra.mxu0 0
      %376 = vmatpush.bf16.msra.mxu0 0
      %377 = vmatpush.bf16.msra.mxu0 %v365
      %378 = vmatmul.bf16.gmra.mxu0 %v362
      %v379 = vpop.f32.mrf.mxu0
      %v380 = vadd.f32 0.0, %v379
      %v381 = vpop.f32.mrf.mxu0
      %382 = vdwg.mxu0
      %383 = vmatpush.bf16.msra.mxu0 0
      %384 = vmatpush.bf16.msra.mxu0 0
      %385 = vmatpush.bf16.msra.mxu0 0
      %386 = vmatpush.bf16.msra.mxu0 0
      %387 = vmatpush.bf16.msra.mxu0 0
      %388 = vmatpush.bf16.msra.mxu0 0
      %389 = vmatpush.bf16.msra.mxu0 0
      %390 = vmatpush.bf16.msra.mxu0 %v368
      %391 = vmatmul.bf16.gmra.mxu0 %v362
      %v392 = vpop.f32.mrf.mxu0
      %v393 = vadd.f32 0.0, %v392
      %v394 = vpop.f32.mrf.mxu0
      %395 = vdwg.mxu0
      %v396 = vadd.f32 %v325, %v380
      %v397 = vadd.f32 %v338, %v393
      %398 = vrot.lane.b32.xlu0 %v226, 1
      %v399 = vpop.permute.xlu0 %398
      %400 = vrot.lane.b32.xlu0 %v227, 1
      %v401 = vpop.permute.xlu0 %400
      %vm402 = vcmp.lt.s32.totalorder %v234, 1
      %v403 = vsel %vm402, %v399, %v401
      %v404 = vsel %vm402, %v401, %v399
      %s405 = scalar_lea.vmem %s4, 6
      %v406 = vld [vmem:[%s405] sm:$0x3]
      %v408 = vperm.slane %v406, 0
      %v409 = vperm.slane %v406, 1
      %v412 = vmul.f32 %v404, %v408
      %v413 = vmul.f32 %v403, %v409
      %s414 = scalar_lea.vmem %s1, 12
      %v415 = vld [vmem:[%s414] sm:$0xf]
      %v416 = vpack.c.bf16 %v412, %v412
      %v417 = vpack.c.bf16 %v413, %v413
      %v419 = vsel %vm269, %v415, 0
      %v422 = vsel %vm273, %v416, 0
      %v425 = vsel %vm273, %v417, 0
      %427 = vmatpush.bf16.msra.mxu0 0
      %428 = vmatpush.bf16.msra.mxu0 0
      %429 = vmatpush.bf16.msra.mxu0 0
      %430 = vmatpush.bf16.msra.mxu0 0
      %431 = vmatpush.bf16.msra.mxu0 0
      %432 = vmatpush.bf16.msra.mxu0 0
      %433 = vmatpush.bf16.msra.mxu0 0
      %434 = vmatpush.bf16.msra.mxu0 %v422
      %435 = vmatmul.bf16.gmra.mxu0 %v419
      %v436 = vpop.f32.mrf.mxu0
      %v437 = vadd.f32 0.0, %v436
      %v438 = vpop.f32.mrf.mxu0
      %439 = vdwg.mxu0
      %440 = vmatpush.bf16.msra.mxu0 0
      %441 = vmatpush.bf16.msra.mxu0 0
      %442 = vmatpush.bf16.msra.mxu0 0
      %443 = vmatpush.bf16.msra.mxu0 0
      %444 = vmatpush.bf16.msra.mxu0 0
      %445 = vmatpush.bf16.msra.mxu0 0
      %446 = vmatpush.bf16.msra.mxu0 0
      %447 = vmatpush.bf16.msra.mxu0 %v425
      %448 = vmatmul.bf16.gmra.mxu0 %v419
      %v449 = vpop.f32.mrf.mxu0
      %v450 = vadd.f32 0.0, %v449
      %v451 = vpop.f32.mrf.mxu0
      %452 = vdwg.mxu0
      %v453 = vadd.f32 %v396, %v437
      %v454 = vadd.f32 %v397, %v450
      %s455 = scalar_lea.vmem %s1, 16
      %v456 = vld [vmem:[%s455] sm:$0xf]
      %v457 = vpack.c.bf16 %v226, %v226
      %v458 = vpack.c.bf16 %v227, %v227
      %v460 = vsel %vm269, %v456, 0
      %v463 = vsel %vm273, %v457, 0
      %v466 = vsel %vm273, %v458, 0
      %468 = vmatpush.bf16.msra.mxu0 0
      %469 = vmatpush.bf16.msra.mxu0 0
      %470 = vmatpush.bf16.msra.mxu0 0
      %471 = vmatpush.bf16.msra.mxu0 0
      %472 = vmatpush.bf16.msra.mxu0 0
      %473 = vmatpush.bf16.msra.mxu0 0
      %474 = vmatpush.bf16.msra.mxu0 0
      %475 = vmatpush.bf16.msra.mxu0 %v463
      %476 = vmatmul.bf16.gmra.mxu0 %v460
      %v477 = vpop.f32.mrf.mxu0
      %v478 = vadd.f32 0.0, %v477
      %v479 = vpop.f32.mrf.mxu0
      %480 = vdwg.mxu0
      %481 = vmatpush.bf16.msra.mxu0 0
      %482 = vmatpush.bf16.msra.mxu0 0
      %483 = vmatpush.bf16.msra.mxu0 0
      %484 = vmatpush.bf16.msra.mxu0 0
      %485 = vmatpush.bf16.msra.mxu0 0
      %486 = vmatpush.bf16.msra.mxu0 0
      %487 = vmatpush.bf16.msra.mxu0 0
      %488 = vmatpush.bf16.msra.mxu0 %v466
      %489 = vmatmul.bf16.gmra.mxu0 %v460
      %v490 = vpop.f32.mrf.mxu0
      %v491 = vadd.f32 0.0, %v490
      %v492 = vpop.f32.mrf.mxu0
      %493 = vdwg.mxu0
      %v494 = vadd.f32 %v453, %v478
      %v495 = vadd.f32 %v454, %v491
      %496 = vrot.lane.b32.xlu0 %v226, 127
      %v497 = vpop.permute.xlu0 %496
      %498 = vrot.lane.b32.xlu0 %v227, 127
      %v499 = vpop.permute.xlu0 %498
      %vm500 = vcmp.lt.s32.totalorder %v234, 127
      %v501 = vsel %vm500, %v497, %v499
      %v502 = vsel %vm500, %v499, %v497
      %s503 = scalar_lea.vmem %s4, 10
      %v504 = vld [vmem:[%s503] sm:$0x3]
      %v506 = vperm.slane %v504, 0
      %v507 = vperm.slane %v504, 1
      %v510 = vmul.f32 %v501, %v506
      %v511 = vmul.f32 %v502, %v507
      %s512 = scalar_lea.vmem %s1, 20
      %v513 = vld [vmem:[%s512] sm:$0xf]
      %v514 = vpack.c.bf16 %v510, %v510
      %v515 = vpack.c.bf16 %v511, %v511
      %v517 = vsel %vm269, %v513, 0
      %v520 = vsel %vm273, %v514, 0
      %v523 = vsel %vm273, %v515, 0
      %525 = vmatpush.bf16.msra.mxu0 0
      %526 = vmatpush.bf16.msra.mxu0 0
      %527 = vmatpush.bf16.msra.mxu0 0
      %528 = vmatpush.bf16.msra.mxu0 0
      %529 = vmatpush.bf16.msra.mxu0 0
      %530 = vmatpush.bf16.msra.mxu0 0
      %531 = vmatpush.bf16.msra.mxu0 0
      %532 = vmatpush.bf16.msra.mxu0 %v520
      %533 = vmatmul.bf16.gmra.mxu0 %v517
      %v534 = vpop.f32.mrf.mxu0
      %v535 = vadd.f32 0.0, %v534
      %v536 = vpop.f32.mrf.mxu0
      %537 = vdwg.mxu0
      %538 = vmatpush.bf16.msra.mxu0 0
      %539 = vmatpush.bf16.msra.mxu0 0
      %540 = vmatpush.bf16.msra.mxu0 0
      %541 = vmatpush.bf16.msra.mxu0 0
      %542 = vmatpush.bf16.msra.mxu0 0
      %543 = vmatpush.bf16.msra.mxu0 0
      %544 = vmatpush.bf16.msra.mxu0 0
      %545 = vmatpush.bf16.msra.mxu0 %v523
      %546 = vmatmul.bf16.gmra.mxu0 %v517
      %v547 = vpop.f32.mrf.mxu0
      %v548 = vadd.f32 0.0, %v547
      %v549 = vpop.f32.mrf.mxu0
      %550 = vdwg.mxu0
      %v551 = vadd.f32 %v494, %v535
      %v552 = vadd.f32 %v495, %v548
      %553 = vrot.lane.b32.xlu0 %v226, 113
      %v554 = vpop.permute.xlu0 %553
      %555 = vrot.lane.b32.xlu0 %v227, 113
      %v556 = vpop.permute.xlu0 %555
      %vm557 = vcmp.lt.s32.totalorder %v234, 113
      %v558 = vsel %vm557, %v554, %v556
      %v559 = vsel %vm557, %v556, %v554
      %s560 = scalar_lea.vmem %s4, 12
      %v561 = vld [vmem:[%s560] sm:$0x3]
      %v563 = vperm.slane %v561, 0
      %v564 = vperm.slane %v561, 1
      %v567 = vmul.f32 %v558, %v563
      %v568 = vmul.f32 %v559, %v564
      %s569 = scalar_lea.vmem %s1, 24
      %v570 = vld [vmem:[%s569] sm:$0xf]
      %v571 = vpack.c.bf16 %v567, %v567
      %v572 = vpack.c.bf16 %v568, %v568
      %v574 = vsel %vm269, %v570, 0
      %v577 = vsel %vm273, %v571, 0
      %v580 = vsel %vm273, %v572, 0
      %582 = vmatpush.bf16.msra.mxu0 0
      %583 = vmatpush.bf16.msra.mxu0 0
      %584 = vmatpush.bf16.msra.mxu0 0
      %585 = vmatpush.bf16.msra.mxu0 0
      %586 = vmatpush.bf16.msra.mxu0 0
      %587 = vmatpush.bf16.msra.mxu0 0
      %588 = vmatpush.bf16.msra.mxu0 0
      %589 = vmatpush.bf16.msra.mxu0 %v577
      %590 = vmatmul.bf16.gmra.mxu0 %v574
      %v591 = vpop.f32.mrf.mxu0
      %v592 = vadd.f32 0.0, %v591
      %v593 = vpop.f32.mrf.mxu0
      %594 = vdwg.mxu0
      %595 = vmatpush.bf16.msra.mxu0 0
      %596 = vmatpush.bf16.msra.mxu0 0
      %597 = vmatpush.bf16.msra.mxu0 0
      %598 = vmatpush.bf16.msra.mxu0 0
      %599 = vmatpush.bf16.msra.mxu0 0
      %600 = vmatpush.bf16.msra.mxu0 0
      %601 = vmatpush.bf16.msra.mxu0 0
      %602 = vmatpush.bf16.msra.mxu0 %v580
      %603 = vmatmul.bf16.gmra.mxu0 %v574
      %v604 = vpop.f32.mrf.mxu0
      %v605 = vadd.f32 0.0, %v604
      %v606 = vpop.f32.mrf.mxu0
      %607 = vdwg.mxu0
      %v608 = vadd.f32 %v551, %v592
      %v609 = vadd.f32 %v552, %v605
      %610 = vrot.lane.b32.xlu0 %v226, 112
      %v611 = vpop.permute.xlu0 %610
      %612 = vrot.lane.b32.xlu0 %v227, 112
      %v613 = vpop.permute.xlu0 %612
      %vm614 = vcmp.lt.s32.totalorder %v234, 112
      %v615 = vsel %vm614, %v611, %v613
      %v616 = vsel %vm614, %v613, %v611
      %s617 = scalar_lea.vmem %s4, 14
      %v618 = vld [vmem:[%s617] sm:$0x3]
      %v620 = vperm.slane %v618, 0
      %v621 = vperm.slane %v618, 1
      %v624 = vmul.f32 %v615, %v620
      %v625 = vmul.f32 %v616, %v621
      %s626 = scalar_lea.vmem %s1, 28
      %v627 = vld [vmem:[%s626] sm:$0xf]
      %v628 = vpack.c.bf16 %v624, %v624
      %v629 = vpack.c.bf16 %v625, %v625
      %v631 = vsel %vm269, %v627, 0
      %v634 = vsel %vm273, %v628, 0
      %v637 = vsel %vm273, %v629, 0
      %639 = vmatpush.bf16.msra.mxu0 0
      %640 = vmatpush.bf16.msra.mxu0 0
      %641 = vmatpush.bf16.msra.mxu0 0
      %642 = vmatpush.bf16.msra.mxu0 0
      %643 = vmatpush.bf16.msra.mxu0 0
      %644 = vmatpush.bf16.msra.mxu0 0
      %645 = vmatpush.bf16.msra.mxu0 0
      %646 = vmatpush.bf16.msra.mxu0 %v634
      %647 = vmatmul.bf16.gmra.mxu0 %v631
      %v648 = vpop.f32.mrf.mxu0
      %v649 = vadd.f32 0.0, %v648
      %v650 = vpop.f32.mrf.mxu0
      %651 = vdwg.mxu0
      %652 = vmatpush.bf16.msra.mxu0 0
      %653 = vmatpush.bf16.msra.mxu0 0
      %654 = vmatpush.bf16.msra.mxu0 0
      %655 = vmatpush.bf16.msra.mxu0 0
      %656 = vmatpush.bf16.msra.mxu0 0
      %657 = vmatpush.bf16.msra.mxu0 0
      %658 = vmatpush.bf16.msra.mxu0 0
      %659 = vmatpush.bf16.msra.mxu0 %v637
      %660 = vmatmul.bf16.gmra.mxu0 %v631
      %v661 = vpop.f32.mrf.mxu0
      %v662 = vadd.f32 0.0, %v661
      %v663 = vpop.f32.mrf.mxu0
      %664 = vdwg.mxu0
      %v665 = vadd.f32 %v608, %v649
      %v666 = vadd.f32 %v609, %v662
      %667 = vrot.lane.b32.xlu0 %v226, 111
      %v668 = vpop.permute.xlu0 %667
      %669 = vrot.lane.b32.xlu0 %v227, 111
      %v670 = vpop.permute.xlu0 %669
      %vm671 = vcmp.lt.s32.totalorder %v234, 111
      %v672 = vsel %vm671, %v668, %v670
      %v673 = vsel %vm671, %v670, %v668
      %s674 = scalar_lea.vmem %s4, 16
      %v675 = vld [vmem:[%s674] sm:$0x3]
      %v677 = vperm.slane %v675, 0
      %v678 = vperm.slane %v675, 1
      %v681 = vmul.f32 %v672, %v677
      %v682 = vmul.f32 %v673, %v678
      %s683 = scalar_lea.vmem %s1, 32
      %v684 = vld [vmem:[%s683] sm:$0xf]
      %v685 = vpack.c.bf16 %v681, %v681
      %v686 = vpack.c.bf16 %v682, %v682
      %v688 = vsel %vm269, %v684, 0
      %v691 = vsel %vm273, %v685, 0
      %v694 = vsel %vm273, %v686, 0
      %696 = vmatpush.bf16.msra.mxu0 0
      %697 = vmatpush.bf16.msra.mxu0 0
      %698 = vmatpush.bf16.msra.mxu0 0
      %699 = vmatpush.bf16.msra.mxu0 0
      %700 = vmatpush.bf16.msra.mxu0 0
      %701 = vmatpush.bf16.msra.mxu0 0
      %702 = vmatpush.bf16.msra.mxu0 0
      %703 = vmatpush.bf16.msra.mxu0 %v691
      %704 = vmatmul.bf16.gmra.mxu0 %v688
      %v705 = vpop.f32.mrf.mxu0
      %v706 = vadd.f32 0.0, %v705
      %v707 = vpop.f32.mrf.mxu0
      %708 = vdwg.mxu0
      %709 = vmatpush.bf16.msra.mxu0 0
      %710 = vmatpush.bf16.msra.mxu0 0
      %711 = vmatpush.bf16.msra.mxu0 0
      %712 = vmatpush.bf16.msra.mxu0 0
      %713 = vmatpush.bf16.msra.mxu0 0
      %714 = vmatpush.bf16.msra.mxu0 0
      %715 = vmatpush.bf16.msra.mxu0 0
      %716 = vmatpush.bf16.msra.mxu0 %v694
      %717 = vmatmul.bf16.gmra.mxu0 %v688
      %v718 = vpop.f32.mrf.mxu0
      %v719 = vadd.f32 0.0, %v718
      %v720 = vpop.f32.mrf.mxu0
      %721 = vdwg.mxu0
      %v722 = vadd.f32 %v665, %v706
      %v723 = vadd.f32 %v666, %v719
      %725 = vset.pattern.permute.xlu0 0
      %726 = vperm.xlu0 %725, %v228
      %v727 = vpop.permute.xlu0 %726
      %v729 = vadd.f32 %v722, %v727
      %v730 = vadd.f32 %v723, %v727
      %v731 = vmax.f32 %v729, 0.0
      %v732 = vmax.f32 %v730, 0.0
      %733 = vst [vmem:[#allocation2] sm:$0xff] %v731
      %734 = vst [vmem:[#allocation2 + $0x8] sm:$0xff] %v732
      %v735 = vld [vmem:[#allocation2] sm:$0xff]
      %v736 = vld [vmem:[#allocation2 + $0x8] sm:$0xff]
      %s737 = scalar_lea.vmem %s3, 8
      %v738 = vld [vmem:[%s737] sm:$0xff]
      %739 = vrot.lane.b32.xlu0 %v735, 17
      %v740 = vpop.permute.xlu0 %739
      %741 = vrot.lane.b32.xlu0 %v736, 17
      %v742 = vpop.permute.xlu0 %741
      %v743 = vsel %vm235, %v740, %v742
      %v744 = vsel %vm235, %v742, %v740
      %v745 = vld [vmem:[%s4] sm:$0x3]
      %v747 = vperm.slane %v745, 0
      %v748 = vperm.slane %v745, 1
      %v751 = vmul.f32 %v744, %v747
      %v752 = vmul.f32 %v743, %v748
      %v753 = vld [vmem:[%s2] sm:$0xf]
      %v754 = vpack.c.bf16 %v751, %v751
      %v755 = vpack.c.bf16 %v752, %v752
      %756 = vrot.lane.b32.xlu0 %v735, 16
      %v757 = vpop.permute.xlu0 %756
      %758 = vrot.lane.b32.xlu0 %v736, 16
      %v759 = vpop.permute.xlu0 %758
      %v760 = vsel %vm253, %v757, %v759
      %v761 = vsel %vm253, %v759, %v757
      %v762 = vld [vmem:[%s256] sm:$0x3]
      %v764 = vperm.slane %v762, 0
      %v765 = vperm.slane %v762, 1
      %v768 = vmul.f32 %v761, %v764
      %v769 = vmul.f32 %v760, %v765
      %s770 = scalar_lea.vmem %s2, 4
      %v771 = vld [vmem:[%s770] sm:$0xf]
      %v772 = vpack.c.bf16 %v768, %v768
      %v773 = vpack.c.bf16 %v769, %v769
      %v775 = vsel %vm269, %v771, 0
      %v778 = vsel %vm273, %v772, 0
      %v781 = vsel %vm273, %v773, 0
      %783 = vmatpush.bf16.msra.mxu0 0
      %784 = vmatpush.bf16.msra.mxu0 0
      %785 = vmatpush.bf16.msra.mxu0 0
      %786 = vmatpush.bf16.msra.mxu0 0
      %787 = vmatpush.bf16.msra.mxu0 0
      %788 = vmatpush.bf16.msra.mxu0 0
      %789 = vmatpush.bf16.msra.mxu0 0
      %790 = vmatpush.bf16.msra.mxu0 %v778
      %791 = vmatmul.bf16.gmra.mxu0 %v775
      %v792 = vpop.f32.mrf.mxu0
      %v793 = vadd.f32 0.0, %v792
      %v794 = vpop.f32.mrf.mxu0
      %795 = vdwg.mxu0
      %796 = vmatpush.bf16.msra.mxu0 0
      %797 = vmatpush.bf16.msra.mxu0 0
      %798 = vmatpush.bf16.msra.mxu0 0
      %799 = vmatpush.bf16.msra.mxu0 0
      %800 = vmatpush.bf16.msra.mxu0 0
      %801 = vmatpush.bf16.msra.mxu0 0
      %802 = vmatpush.bf16.msra.mxu0 0
      %803 = vmatpush.bf16.msra.mxu0 %v781
      %804 = vmatmul.bf16.gmra.mxu0 %v775
      %v805 = vpop.f32.mrf.mxu0
      %v806 = vadd.f32 0.0, %v805
      %v807 = vpop.f32.mrf.mxu0
      %808 = vdwg.mxu0
      %v810 = vsel %vm269, %v753, 0
      %v813 = vsel %vm273, %v754, 0
      %v816 = vsel %vm273, %v755, 0
      %818 = vmatpush.bf16.msra.mxu0 0
      %819 = vmatpush.bf16.msra.mxu0 0
      %820 = vmatpush.bf16.msra.mxu0 0
      %821 = vmatpush.bf16.msra.mxu0 0
      %822 = vmatpush.bf16.msra.mxu0 0
      %823 = vmatpush.bf16.msra.mxu0 0
      %824 = vmatpush.bf16.msra.mxu0 0
      %825 = vmatpush.bf16.msra.mxu0 %v813
      %826 = vmatmul.bf16.gmra.mxu0 %v810
      %v827 = vpop.f32.mrf.mxu0
      %v828 = vadd.f32 %v793, %v827
      %v829 = vpop.f32.mrf.mxu0
      %830 = vdwg.mxu0
      %831 = vmatpush.bf16.msra.mxu0 0
      %832 = vmatpush.bf16.msra.mxu0 0
      %833 = vmatpush.bf16.msra.mxu0 0
      %834 = vmatpush.bf16.msra.mxu0 0
      %835 = vmatpush.bf16.msra.mxu0 0
      %836 = vmatpush.bf16.msra.mxu0 0
      %837 = vmatpush.bf16.msra.mxu0 0
      %838 = vmatpush.bf16.msra.mxu0 %v816
      %839 = vmatmul.bf16.gmra.mxu0 %v810
      %v840 = vpop.f32.mrf.mxu0
      %v841 = vadd.f32 %v806, %v840
      %v842 = vpop.f32.mrf.mxu0
      %843 = vdwg.mxu0
      %844 = vrot.lane.b32.xlu0 %v735, 15
      %v845 = vpop.permute.xlu0 %844
      %846 = vrot.lane.b32.xlu0 %v736, 15
      %v847 = vpop.permute.xlu0 %846
      %v848 = vsel %vm345, %v845, %v847
      %v849 = vsel %vm345, %v847, %v845
      %v850 = vld [vmem:[%s348] sm:$0x3]
      %v852 = vperm.slane %v850, 0
      %v853 = vperm.slane %v850, 1
      %v856 = vmul.f32 %v849, %v852
      %v857 = vmul.f32 %v848, %v853
      %s858 = scalar_lea.vmem %s2, 8
      %v859 = vld [vmem:[%s858] sm:$0xf]
      %v860 = vpack.c.bf16 %v856, %v856
      %v861 = vpack.c.bf16 %v857, %v857
      %v863 = vsel %vm269, %v859, 0
      %v866 = vsel %vm273, %v860, 0
      %v869 = vsel %vm273, %v861, 0
      %871 = vmatpush.bf16.msra.mxu0 0
      %872 = vmatpush.bf16.msra.mxu0 0
      %873 = vmatpush.bf16.msra.mxu0 0
      %874 = vmatpush.bf16.msra.mxu0 0
      %875 = vmatpush.bf16.msra.mxu0 0
      %876 = vmatpush.bf16.msra.mxu0 0
      %877 = vmatpush.bf16.msra.mxu0 0
      %878 = vmatpush.bf16.msra.mxu0 %v866
      %879 = vmatmul.bf16.gmra.mxu0 %v863
      %v880 = vpop.f32.mrf.mxu0
      %v881 = vadd.f32 0.0, %v880
      %v882 = vpop.f32.mrf.mxu0
      %883 = vdwg.mxu0
      %884 = vmatpush.bf16.msra.mxu0 0
      %885 = vmatpush.bf16.msra.mxu0 0
      %886 = vmatpush.bf16.msra.mxu0 0
      %887 = vmatpush.bf16.msra.mxu0 0
      %888 = vmatpush.bf16.msra.mxu0 0
      %889 = vmatpush.bf16.msra.mxu0 0
      %890 = vmatpush.bf16.msra.mxu0 0
      %891 = vmatpush.bf16.msra.mxu0 %v869
      %892 = vmatmul.bf16.gmra.mxu0 %v863
      %v893 = vpop.f32.mrf.mxu0
      %v894 = vadd.f32 0.0, %v893
      %v895 = vpop.f32.mrf.mxu0
      %896 = vdwg.mxu0
      %v897 = vadd.f32 %v828, %v881
      %v898 = vadd.f32 %v841, %v894
      %899 = vrot.lane.b32.xlu0 %v735, 1
      %v900 = vpop.permute.xlu0 %899
      %901 = vrot.lane.b32.xlu0 %v736, 1
      %v902 = vpop.permute.xlu0 %901
      %v903 = vsel %vm402, %v900, %v902
      %v904 = vsel %vm402, %v902, %v900
      %v905 = vld [vmem:[%s405] sm:$0x3]
      %v907 = vperm.slane %v905, 0
      %v908 = vperm.slane %v905, 1
      %v911 = vmul.f32 %v904, %v907
      %v912 = vmul.f32 %v903, %v908
      %s913 = scalar_lea.vmem %s2, 12
      %v914 = vld [vmem:[%s913] sm:$0xf]
      %v915 = vpack.c.bf16 %v911, %v911
      %v916 = vpack.c.bf16 %v912, %v912
      %v918 = vsel %vm269, %v914, 0
      %v921 = vsel %vm273, %v915, 0
      %v924 = vsel %vm273, %v916, 0
      %926 = vmatpush.bf16.msra.mxu0 0
      %927 = vmatpush.bf16.msra.mxu0 0
      %928 = vmatpush.bf16.msra.mxu0 0
      %929 = vmatpush.bf16.msra.mxu0 0
      %930 = vmatpush.bf16.msra.mxu0 0
      %931 = vmatpush.bf16.msra.mxu0 0
      %932 = vmatpush.bf16.msra.mxu0 0
      %933 = vmatpush.bf16.msra.mxu0 %v921
      %934 = vmatmul.bf16.gmra.mxu0 %v918
      %v935 = vpop.f32.mrf.mxu0
      %v936 = vadd.f32 0.0, %v935
      %v937 = vpop.f32.mrf.mxu0
      %938 = vdwg.mxu0
      %939 = vmatpush.bf16.msra.mxu0 0
      %940 = vmatpush.bf16.msra.mxu0 0
      %941 = vmatpush.bf16.msra.mxu0 0
      %942 = vmatpush.bf16.msra.mxu0 0
      %943 = vmatpush.bf16.msra.mxu0 0
      %944 = vmatpush.bf16.msra.mxu0 0
      %945 = vmatpush.bf16.msra.mxu0 0
      %946 = vmatpush.bf16.msra.mxu0 %v924
      %947 = vmatmul.bf16.gmra.mxu0 %v918
      %v948 = vpop.f32.mrf.mxu0
      %v949 = vadd.f32 0.0, %v948
      %v950 = vpop.f32.mrf.mxu0
      %951 = vdwg.mxu0
      %v952 = vadd.f32 %v897, %v936
      %v953 = vadd.f32 %v898, %v949
      %s954 = scalar_lea.vmem %s2, 16
      %v955 = vld [vmem:[%s954] sm:$0xf]
      %v956 = vpack.c.bf16 %v735, %v735
      %v957 = vpack.c.bf16 %v736, %v736
      %v959 = vsel %vm269, %v955, 0
      %v962 = vsel %vm273, %v956, 0
      %v965 = vsel %vm273, %v957, 0
      %967 = vmatpush.bf16.msra.mxu0 0
      %968 = vmatpush.bf16.msra.mxu0 0
      %969 = vmatpush.bf16.msra.mxu0 0
      %970 = vmatpush.bf16.msra.mxu0 0
      %971 = vmatpush.bf16.msra.mxu0 0
      %972 = vmatpush.bf16.msra.mxu0 0
      %973 = vmatpush.bf16.msra.mxu0 0
      %974 = vmatpush.bf16.msra.mxu0 %v962
      %975 = vmatmul.bf16.gmra.mxu0 %v959
      %v976 = vpop.f32.mrf.mxu0
      %v977 = vadd.f32 0.0, %v976
      %v978 = vpop.f32.mrf.mxu0
      %979 = vdwg.mxu0
      %980 = vmatpush.bf16.msra.mxu0 0
      %981 = vmatpush.bf16.msra.mxu0 0
      %982 = vmatpush.bf16.msra.mxu0 0
      %983 = vmatpush.bf16.msra.mxu0 0
      %984 = vmatpush.bf16.msra.mxu0 0
      %985 = vmatpush.bf16.msra.mxu0 0
      %986 = vmatpush.bf16.msra.mxu0 0
      %987 = vmatpush.bf16.msra.mxu0 %v965
      %988 = vmatmul.bf16.gmra.mxu0 %v959
      %v989 = vpop.f32.mrf.mxu0
      %v990 = vadd.f32 0.0, %v989
      %v991 = vpop.f32.mrf.mxu0
      %992 = vdwg.mxu0
      %v993 = vadd.f32 %v952, %v977
      %v994 = vadd.f32 %v953, %v990
      %995 = vrot.lane.b32.xlu0 %v735, 127
      %v996 = vpop.permute.xlu0 %995
      %997 = vrot.lane.b32.xlu0 %v736, 127
      %v998 = vpop.permute.xlu0 %997
      %v999 = vsel %vm500, %v996, %v998
      %v1000 = vsel %vm500, %v998, %v996
      %v1001 = vld [vmem:[%s503] sm:$0x3]
      %v1003 = vperm.slane %v1001, 0
      %v1004 = vperm.slane %v1001, 1
      %v1007 = vmul.f32 %v999, %v1003
      %v1008 = vmul.f32 %v1000, %v1004
      %s1009 = scalar_lea.vmem %s2, 20
      %v1010 = vld [vmem:[%s1009] sm:$0xf]
      %v1011 = vpack.c.bf16 %v1007, %v1007
      %v1012 = vpack.c.bf16 %v1008, %v1008
      %v1014 = vsel %vm269, %v1010, 0
      %v1017 = vsel %vm273, %v1011, 0
      %v1020 = vsel %vm273, %v1012, 0
      %1022 = vmatpush.bf16.msra.mxu0 0
      %1023 = vmatpush.bf16.msra.mxu0 0
      %1024 = vmatpush.bf16.msra.mxu0 0
      %1025 = vmatpush.bf16.msra.mxu0 0
      %1026 = vmatpush.bf16.msra.mxu0 0
      %1027 = vmatpush.bf16.msra.mxu0 0
      %1028 = vmatpush.bf16.msra.mxu0 0
      %1029 = vmatpush.bf16.msra.mxu0 %v1017
      %1030 = vmatmul.bf16.gmra.mxu0 %v1014
      %v1031 = vpop.f32.mrf.mxu0
      %v1032 = vadd.f32 0.0, %v1031
      %v1033 = vpop.f32.mrf.mxu0
      %1034 = vdwg.mxu0
      %1035 = vmatpush.bf16.msra.mxu0 0
      %1036 = vmatpush.bf16.msra.mxu0 0
      %1037 = vmatpush.bf16.msra.mxu0 0
      %1038 = vmatpush.bf16.msra.mxu0 0
      %1039 = vmatpush.bf16.msra.mxu0 0
      %1040 = vmatpush.bf16.msra.mxu0 0
      %1041 = vmatpush.bf16.msra.mxu0 0
      %1042 = vmatpush.bf16.msra.mxu0 %v1020
      %1043 = vmatmul.bf16.gmra.mxu0 %v1014
      %v1044 = vpop.f32.mrf.mxu0
      %v1045 = vadd.f32 0.0, %v1044
      %v1046 = vpop.f32.mrf.mxu0
      %1047 = vdwg.mxu0
      %v1048 = vadd.f32 %v993, %v1032
      %v1049 = vadd.f32 %v994, %v1045
      %1050 = vrot.lane.b32.xlu0 %v735, 113
      %v1051 = vpop.permute.xlu0 %1050
      %1052 = vrot.lane.b32.xlu0 %v736, 113
      %v1053 = vpop.permute.xlu0 %1052
      %v1054 = vsel %vm557, %v1051, %v1053
      %v1055 = vsel %vm557, %v1053, %v1051
      %v1056 = vld [vmem:[%s560] sm:$0x3]
      %v1058 = vperm.slane %v1056, 0
      %v1059 = vperm.slane %v1056, 1
      %v1062 = vmul.f32 %v1054, %v1058
      %v1063 = vmul.f32 %v1055, %v1059
      %s1064 = scalar_lea.vmem %s2, 24
      %v1065 = vld [vmem:[%s1064] sm:$0xf]
      %v1066 = vpack.c.bf16 %v1062, %v1062
      %v1067 = vpack.c.bf16 %v1063, %v1063
      %v1069 = vsel %vm269, %v1065, 0
      %v1072 = vsel %vm273, %v1066, 0
      %v1075 = vsel %vm273, %v1067, 0
      %1077 = vmatpush.bf16.msra.mxu0 0
      %1078 = vmatpush.bf16.msra.mxu0 0
      %1079 = vmatpush.bf16.msra.mxu0 0
      %1080 = vmatpush.bf16.msra.mxu0 0
      %1081 = vmatpush.bf16.msra.mxu0 0
      %1082 = vmatpush.bf16.msra.mxu0 0
      %1083 = vmatpush.bf16.msra.mxu0 0
      %1084 = vmatpush.bf16.msra.mxu0 %v1072
      %1085 = vmatmul.bf16.gmra.mxu0 %v1069
      %v1086 = vpop.f32.mrf.mxu0
      %v1087 = vadd.f32 0.0, %v1086
      %v1088 = vpop.f32.mrf.mxu0
      %1089 = vdwg.mxu0
      %1090 = vmatpush.bf16.msra.mxu0 0
      %1091 = vmatpush.bf16.msra.mxu0 0
      %1092 = vmatpush.bf16.msra.mxu0 0
      %1093 = vmatpush.bf16.msra.mxu0 0
      %1094 = vmatpush.bf16.msra.mxu0 0
      %1095 = vmatpush.bf16.msra.mxu0 0
      %1096 = vmatpush.bf16.msra.mxu0 0
      %1097 = vmatpush.bf16.msra.mxu0 %v1075
      %1098 = vmatmul.bf16.gmra.mxu0 %v1069
      %v1099 = vpop.f32.mrf.mxu0
      %v1100 = vadd.f32 0.0, %v1099
      %v1101 = vpop.f32.mrf.mxu0
      %1102 = vdwg.mxu0
      %v1103 = vadd.f32 %v1048, %v1087
      %v1104 = vadd.f32 %v1049, %v1100
      %1105 = vrot.lane.b32.xlu0 %v735, 112
      %v1106 = vpop.permute.xlu0 %1105
      %1107 = vrot.lane.b32.xlu0 %v736, 112
      %v1108 = vpop.permute.xlu0 %1107
      %v1109 = vsel %vm614, %v1106, %v1108
      %v1110 = vsel %vm614, %v1108, %v1106
      %v1111 = vld [vmem:[%s617] sm:$0x3]
      %v1113 = vperm.slane %v1111, 0
      %v1114 = vperm.slane %v1111, 1
      %v1117 = vmul.f32 %v1109, %v1113
      %v1118 = vmul.f32 %v1110, %v1114
      %s1119 = scalar_lea.vmem %s2, 28
      %v1120 = vld [vmem:[%s1119] sm:$0xf]
      %v1121 = vpack.c.bf16 %v1117, %v1117
      %v1122 = vpack.c.bf16 %v1118, %v1118
      %v1124 = vsel %vm269, %v1120, 0
      %v1127 = vsel %vm273, %v1121, 0
      %v1130 = vsel %vm273, %v1122, 0
      %1132 = vmatpush.bf16.msra.mxu0 0
      %1133 = vmatpush.bf16.msra.mxu0 0
      %1134 = vmatpush.bf16.msra.mxu0 0
      %1135 = vmatpush.bf16.msra.mxu0 0
      %1136 = vmatpush.bf16.msra.mxu0 0
      %1137 = vmatpush.bf16.msra.mxu0 0
      %1138 = vmatpush.bf16.msra.mxu0 0
      %1139 = vmatpush.bf16.msra.mxu0 %v1127
      %1140 = vmatmul.bf16.gmra.mxu0 %v1124
      %v1141 = vpop.f32.mrf.mxu0
      %v1142 = vadd.f32 0.0, %v1141
      %v1143 = vpop.f32.mrf.mxu0
      %1144 = vdwg.mxu0
      %1145 = vmatpush.bf16.msra.mxu0 0
      %1146 = vmatpush.bf16.msra.mxu0 0
      %1147 = vmatpush.bf16.msra.mxu0 0
      %1148 = vmatpush.bf16.msra.mxu0 0
      %1149 = vmatpush.bf16.msra.mxu0 0
      %1150 = vmatpush.bf16.msra.mxu0 0
      %1151 = vmatpush.bf16.msra.mxu0 0
      %1152 = vmatpush.bf16.msra.mxu0 %v1130
      %1153 = vmatmul.bf16.gmra.mxu0 %v1124
      %v1154 = vpop.f32.mrf.mxu0
      %v1155 = vadd.f32 0.0, %v1154
      %v1156 = vpop.f32.mrf.mxu0
      %1157 = vdwg.mxu0
      %v1158 = vadd.f32 %v1103, %v1142
      %v1159 = vadd.f32 %v1104, %v1155
      %1160 = vrot.lane.b32.xlu0 %v735, 111
      %v1161 = vpop.permute.xlu0 %1160
      %1162 = vrot.lane.b32.xlu0 %v736, 111
      %v1163 = vpop.permute.xlu0 %1162
      %v1164 = vsel %vm671, %v1161, %v1163
      %v1165 = vsel %vm671, %v1163, %v1161
      %v1166 = vld [vmem:[%s674] sm:$0x3]
      %v1168 = vperm.slane %v1166, 0
      %v1169 = vperm.slane %v1166, 1
      %v1172 = vmul.f32 %v1164, %v1168
      %v1173 = vmul.f32 %v1165, %v1169
      %s1174 = scalar_lea.vmem %s2, 32
      %v1175 = vld [vmem:[%s1174] sm:$0xf]
      %v1176 = vpack.c.bf16 %v1172, %v1172
      %v1177 = vpack.c.bf16 %v1173, %v1173
      %v1179 = vsel %vm269, %v1175, 0
      %v1182 = vsel %vm273, %v1176, 0
      %v1185 = vsel %vm273, %v1177, 0
      %1187 = vmatpush.bf16.msra.mxu0 0
      %1188 = vmatpush.bf16.msra.mxu0 0
      %1189 = vmatpush.bf16.msra.mxu0 0
      %1190 = vmatpush.bf16.msra.mxu0 0
      %1191 = vmatpush.bf16.msra.mxu0 0
      %1192 = vmatpush.bf16.msra.mxu0 0
      %1193 = vmatpush.bf16.msra.mxu0 0
      %1194 = vmatpush.bf16.msra.mxu0 %v1182
      %1195 = vmatmul.bf16.gmra.mxu0 %v1179
      %v1196 = vpop.f32.mrf.mxu0
      %v1197 = vadd.f32 0.0, %v1196
      %v1198 = vpop.f32.mrf.mxu0
      %1199 = vdwg.mxu0
      %1200 = vmatpush.bf16.msra.mxu0 0
      %1201 = vmatpush.bf16.msra.mxu0 0
      %1202 = vmatpush.bf16.msra.mxu0 0
      %1203 = vmatpush.bf16.msra.mxu0 0
      %1204 = vmatpush.bf16.msra.mxu0 0
      %1205 = vmatpush.bf16.msra.mxu0 0
      %1206 = vmatpush.bf16.msra.mxu0 0
      %1207 = vmatpush.bf16.msra.mxu0 %v1185
      %1208 = vmatmul.bf16.gmra.mxu0 %v1179
      %v1209 = vpop.f32.mrf.mxu0
      %v1210 = vadd.f32 0.0, %v1209
      %v1211 = vpop.f32.mrf.mxu0
      %1212 = vdwg.mxu0
      %v1213 = vadd.f32 %v1158, %v1197
      %v1214 = vadd.f32 %v1159, %v1210
      %1216 = vset.pattern.permute.xlu0 0
      %1217 = vperm.xlu0 %1216, %v738
      %v1218 = vpop.permute.xlu0 %1217
      %v1220 = vadd.f32 %v1213, %v1218
      %v1221 = vadd.f32 %v1214, %v1218
      %v1222 = vmax.f32 %v1220, 0.0
      %v1223 = vmax.f32 %v1221, 0.0
      %1224 = vst [vmem:[#allocation2] sm:$0xff] %v1222
      %1225 = vst [vmem:[#allocation2 + $0x8] sm:$0xff] %v1223
      %v1226 = vld [vmem:[#allocation2] sm:$0xff]
      %v1227 = vld [vmem:[#allocation2 + $0x8] sm:$0xff]
      %1228 = vst [vmem:[%s224] sm:$0xff] %v1226
      %1229 = vst [vmem:[%s224 + $0x8] sm:$0xff] %v1227
      %p1230 = scmp.lt.s32.totalorder %s16, 1
      %s1231 = scalar_select %p1230, %s16, 1
      %s1232 = smul.addr %s1231, 2
      %s1233 = smul.addr %s1232, 8
      %s1234 = scalar_lea.vmem %s5, %s1233
      // Predicated region
      $region41: #{decoder_layer_forward.1} parent=39 // pred_check
        %p1235 = pneg %p144
      $region42: #{decoder_layer_forward.1} parent=39 // pred_check_branch
        %1237 = sbr.rel (%p1235) target = $region44
      $region43: #{decoder_layer_forward.1} parent=39 // pred_region
        _
      $region44: #{decoder_layer_forward.1} parent=39 // pred_fallthru
        _
    $region40: #{decoder_layer_forward.1} parent=5 // pred_fallthru
      _
    %p1238 = scmp.le.s32.totalorder 2, %s11
    // Predicated region
    $region45: #{decoder_layer_forward.1} parent=5 // pred_check
      %p1239 = pneg %p1238
    $region46: #{decoder_layer_forward.1} parent=5 // pred_check_branch
      %1241 = sbr.rel (%p1239) target = $region48
    $region47: #{decoder_layer_forward.1} parent=5 // pred_region
      %s1242 = ssub.s32 %s11, 2
      // Predicated region
      $region49: #{decoder_layer_forward.1} parent=47 // pred_check
        %p1243 = pneg %p150
      $region50: #{decoder_layer_forward.1} parent=47 // pred_check_branch
        %1245 = sbr.rel (%p1243) target = $region52
      $region51: #{decoder_layer_forward.1} parent=47 // pred_region
        %p1246 = scmp.lt.s32.totalorder %s17, 1
        %s1247 = scalar_select %p1246, %s17, 1
        %s1248 = smul.addr %s1247, 2
        %s1249 = smul.addr %s1248, 8
        %s1250 = scalar_lea.vmem %s5, %s1249
      $region52: #{decoder_layer_forward.1} parent=47 // pred_fallthru
        _
    $region48: #{decoder_layer_forward.1} parent=5 // pred_fallthru
      _
  $region6: #{decoder_layer_forward.1} parent=0 // loop_footer
    %s15 = sadd.s32 1, %s11
  $region7: #{decoder_layer_forward.1} parent=0 // loop_footer_branch
    %10 = sbr.rel target = $region3
  $region8: #{decoder_layer_forward.1} parent=0 // loop_exit
    _

</llo_original>
